<compile_context>
chip_gen: v6e
topology: v6e:2x2x1
jax: 0.10.0
libtpu: 0.0.40
codegen_flags: <defaults>
</compile_context>

<pallas_src>
from functools import partial

import jax
import jax.numpy as jnp
from jax import lax
from jax.experimental import pallas as pl
from jax.experimental.pallas import tpu as pltpu


def _round_up(v, m):
    return (v + m - 1) // m * m


def _pick_tm(M, block_m=1024, align=16):
    """Row-tile size: multiple of 16 (bf16 sublane packing), >=2 grid steps once
    M is non-trivial (so 'parallel' can shard across v7x's 2 TCs), <= block_m."""
    m_al = _round_up(M, align)
    if m_al <= 256:              # toy sizes: single step; overhead dominated
        return m_al
    half = _round_up((m_al + 1) // 2, align)
    return min(block_m, half)


_VMEM_LIMIT = 32 * 1024 * 1024   # fits v5e/v6e scoped VMEM and v7x's 64 MiB


# ---------------------------------------------------------------------------
# Pallas kernels
# ---------------------------------------------------------------------------
def _mm_kernel(x_ref, w_ref, b_ref, o_ref, *, relu_out):
    """(TM, K) x (K, Np) tile: MXU matmul (f32 acc) + bias + optional ReLU.
    Epilogue math in f32; store in o_ref.dtype (bf16 on the activation path)."""
    y = jnp.dot(x_ref[...], w_ref[...], preferred_element_type=jnp.float32)
    y = y + b_ref[...]                       # (1, Np) broadcasts over rows
    if relu_out:
        y = jnp.maximum(y, 0.0)
    o_ref[...] = y.astype(o_ref.dtype)


def pallas_matmul(x, w, b, relu_out=False, out_dtype=jnp.bfloat16, block_m=1024):
    """(M, K) @ (K, N) + b with optionally fused ReLU.

    - grid over M row tiles, "parallel" semantics (pipelined; 2 TCs on v7x)
    - N padded to a multiple of 128 -> lane-dense (unmasked) output stores
    - bf16 operands, f32 accumulation on the MXU, out_dtype on store
    """
    M, K = x.shape
    K2, N = w.shape
    assert K == K2
    n_pad = _round_up(N, 128)
    tm = _pick_tm(M, block_m)
    m_pad = _round_up(M, tm)

    x_p = jnp.pad(x, ((0, m_pad - M), (0, 0))) if m_pad != M else x
    w_p = jnp.pad(w, ((0, 0), (0, n_pad - N))) if n_pad != N else w
    b_p = jnp.pad(b, (0, n_pad - N)) if n_pad != N else b

    x_p = x_p.astype(jnp.bfloat16)           # no-op when activations already bf16
    w_p = w_p.astype(jnp.bfloat16)
    b2 = b_p.reshape(1, n_pad).astype(jnp.float32)

    out = pl.pallas_call(
        partial(_mm_kernel, relu_out=relu_out),
        out_shape=jax.ShapeDtypeStruct((m_pad, n_pad), out_dtype),
        grid_spec=pltpu.PrefetchScalarGridSpec(
            num_scalar_prefetch=0,
            grid=(m_pad // tm,),
            in_specs=[
                pl.BlockSpec((tm, K), lambda i: (i, 0)),       # row tile of patches
                pl.BlockSpec((K, n_pad), lambda i: (0, 0)),    # weights resident
                pl.BlockSpec((1, n_pad), lambda i: (0, 0)),    # bias resident
            ],
            out_specs=pl.BlockSpec((tm, n_pad), lambda i: (i, 0)),
        ),
        compiler_params=pltpu.CompilerParams(
            dimension_semantics=("parallel",),
            vmem_limit_bytes=_VMEM_LIMIT,
        ),
    )(x_p, w_p, b2)
    return out[:M, :N]


def _residual_kernel(p_ref, x_ref, w3_ref, w1_ref, o_ref):
    """Fused residual block tile: h = relu(patches @ w3); y = h @ w1 + x.
    The intermediate h never leaves VMEM; both convs are bias-free."""
    h = jnp.dot(p_ref[...], w3_ref[...], preferred_element_type=jnp.float32)
    h = jnp.maximum(h, 0.0)
    y = jnp.dot(h.astype(jnp.bfloat16), w1_ref[...],
                preferred_element_type=jnp.float32)
    y = y + x_ref[...].astype(jnp.float32)
    o_ref[...] = y.astype(o_ref.dtype)


def residual_block_fused(x_nhwc, w3, w1, block_m=1024):
    """x_nhwc: (N,H,W,C); w3: (nrh, C, 3, 3); w1: (C, nrh, 1, 1) (torch layout).
    Computes x + conv1x1(relu(conv3x3(relu(x)))) in a single pallas_call."""
    N, H, W, C = x_nhwc.shape
    nrh = w3.shape[0]
    M = N * H * W
    K = 9 * C
    rh_pad = _round_up(nrh, 128)
    c_pad = _round_up(C, 128)

    # ReLU applied ONCE on the NHWC tensor (not on the 9x patch matrix).
    xr = jnp.maximum(x_nhwc, 0.0)
    xp = jnp.pad(xr, ((0, 0), (1, 1), (1, 1), (0, 0)))
    cols = [xp[:, a:a + H, bcol:bcol + W, :] for a in range(3) for bcol in range(3)]
    patches = jnp.concatenate(cols, axis=-1).reshape(M, K).astype(jnp.bfloat16)

    w3m = jnp.transpose(w3, (2, 3, 1, 0)).reshape(K, nrh)          # (a,b,c)->r
    w3m = jnp.pad(w3m, ((0, 0), (0, rh_pad - nrh))).astype(jnp.bfloat16)
    w1m = jnp.transpose(w1, (2, 3, 1, 0)).reshape(nrh, C)          # r -> c
    w1m = jnp.pad(w1m, ((0, rh_pad - nrh), (0, c_pad - C))).astype(jnp.bfloat16)

    x_flat = x_nhwc.reshape(M, C)
    x_flat = jnp.pad(x_flat, ((0, 0), (0, c_pad - C))).astype(jnp.bfloat16)

    tm = _pick_tm(M, block_m)
    m_pad = _round_up(M, tm)
    if m_pad != M:
        patches = jnp.pad(patches, ((0, m_pad - M), (0, 0)))
        x_flat = jnp.pad(x_flat, ((0, m_pad - M), (0, 0)))

    out = pl.pallas_call(
        _residual_kernel,
        out_shape=jax.ShapeDtypeStruct((m_pad, c_pad), jnp.bfloat16),
        grid_spec=pltpu.PrefetchScalarGridSpec(
            num_scalar_prefetch=0,
            grid=(m_pad // tm,),
            in_specs=[
                pl.BlockSpec((tm, K), lambda i: (i, 0)),          # 3x3 patches
                pl.BlockSpec((tm, c_pad), lambda i: (i, 0)),      # residual input
                pl.BlockSpec((K, rh_pad), lambda i: (0, 0)),      # w3 resident
                pl.BlockSpec((rh_pad, c_pad), lambda i: (0, 0)),  # w1 resident
            ],
            out_specs=pl.BlockSpec((tm, c_pad), lambda i: (i, 0)),
        ),
        compiler_params=pltpu.CompilerParams(
            dimension_semantics=("parallel",),
            vmem_limit_bytes=_VMEM_LIMIT,
        ),
    )(patches, x_flat, w3m, w1m)
    return out[:M, :C].reshape(N, H, W, C)


def _vq_kernel(x_ref, e_ref, e2_ref, enc_ref, q_ref):
    """Distances + argmin + one-hot + codebook lookup for one row tile.
    Everything 128-lane padded (lane-dense stores, MXU-friendly matmuls);
    ||e||^2 is precomputed outside (padded slots = +1e30 -> never argmin)."""
    x = x_ref[...]                                   # (TM, Dp)   f32
    e = e_ref[...]                                   # (Nep, Dp)  f32, resident
    x2 = jnp.sum(x * x, axis=1, keepdims=True)       # (TM, 1)
    xe = lax.dot_general(x, e, (((1,), (1,)), ((), ())),
                         preferred_element_type=jnp.float32)   # (TM, Nep)
    d = x2 + e2_ref[...] - 2.0 * xe
    idx = jnp.argmin(d, axis=1, keepdims=True)       # first occurrence (torch match)
    tm, nep = d.shape
    enc = (lax.broadcasted_iota(jnp.int32, (tm, nep), 1) == idx).astype(jnp.float32)
    enc_ref[...] = enc
    q_ref[...] = jnp.dot(enc, e, preferred_element_type=jnp.float32)


def vector_quantize(z_nhwc, embedding, commitment_cost, block_m=1024):
    """z_nhwc: (N, H, W, D); embedding: (Ne, D). Returns (loss, quantized_nhwc,
    perplexity, encodings). Distance math kept in f32.
    Note: default-precision f32 MXU dots; near-tie codebook distances could in
    principle flip argmin vs. the torch reference."""
    N, H, W, D = z_nhwc.shape
    Ne = embedding.shape[0]
    d_pad = _round_up(D, 128)
    ne_pad = _round_up(Ne, 128)

    flat = z_nhwc.reshape(-1, D).astype(jnp.float32)
    M = flat.shape[0]
    tm = _pick_tm(M, block_m, align=8)
    m_pad = _round_up(M, tm)
    flat_p = jnp.pad(flat, ((0, m_pad - M), (0, d_pad - D)))

    e = embedding.astype(jnp.float32)
    e_pad = jnp.pad(e, ((0, ne_pad - Ne), (0, d_pad - D)))
    e2 = jnp.sum(e * e, axis=1)                              # hoisted out of kernel
    e2_pad = jnp.pad(e2, (0, ne_pad - Ne), constant_values=1e30).reshape(1, ne_pad)

    enc, q_flat = pl.pallas_call(
        _vq_kernel,
        out_shape=(jax.ShapeDtypeStruct((m_pad, ne_pad), jnp.float32),
                   jax.ShapeDtypeStruct((m_pad, d_pad), jnp.float32)),
        grid_spec=pltpu.PrefetchScalarGridSpec(
            num_scalar_prefetch=0,
            grid=(m_pad // tm,),
            in_specs=[
                pl.BlockSpec((tm, d_pad), lambda i: (i, 0)),
                pl.BlockSpec((ne_pad, d_pad), lambda i: (0, 0)),   # codebook resident
                pl.BlockSpec((1, ne_pad), lambda i: (0, 0)),       # ||e||^2 resident
            ],
            out_specs=(pl.BlockSpec((tm, ne_pad), lambda i: (i, 0)),
                       pl.BlockSpec((tm, d_pad), lambda i: (i, 0))),
        ),
        compiler_params=pltpu.CompilerParams(
            dimension_semantics=("parallel",),
            vmem_limit_bytes=_VMEM_LIMIT,
        ),
    )(flat_p, e_pad, e2_pad)

    enc = enc[:M, :Ne]
    quantized = q_flat[:M, :D].reshape(z_nhwc.shape)

    inputs = z_nhwc.astype(jnp.float32)
    e_latent_loss = jnp.mean((lax.stop_gradient(quantized) - inputs) ** 2)
    q_latent_loss = jnp.mean((quantized - lax.stop_gradient(inputs)) ** 2)
    loss = q_latent_loss + commitment_cost * e_latent_loss
    quantized_st = inputs + lax.stop_gradient(quantized - inputs)   # straight-through
    avg_probs = jnp.mean(enc, axis=0)
    perplexity = jnp.exp(-jnp.sum(avg_probs * jnp.log(avg_probs + 1e-10)))
    return loss, quantized_st, perplexity, enc


# ---------------------------------------------------------------------------
# Conv / conv-transpose wrappers (NHWC patch glue in XLA, matmul in Pallas)
# ---------------------------------------------------------------------------
def conv2d_nhwc(x, w, b=None, stride=1, padding=0, relu_out=False,
                out_dtype=jnp.bfloat16):
    """x: (N, H, W, C) NHWC; w: (Cout, Cin, kh, kw) torch layout; b: (Cout,)|None."""
    N, H, W, C = x.shape
    Cout, Cin, kh, kw = w.shape
    assert C == Cin
    Ho = (H + 2 * padding - kh) // stride + 1
    Wo = (W + 2 * padding - kw) // stride + 1

    if kh == 1 and kw == 1 and stride == 1 and padding == 0:
        patches = x.reshape(N * H * W, C)                 # free view for 1x1 conv
    else:
        xp = jnp.pad(x, ((0, 0), (padding, padding), (padding, padding), (0, 0)))
        cols = [xp[:, i:i + (Ho - 1) * stride + 1:stride,
                      j:j + (Wo - 1) * stride + 1:stride, :]
                for i in range(kh) for j in range(kw)]
        patches = jnp.concatenate(cols, axis=-1).reshape(N * Ho * Wo, kh * kw * C)

    wmat = jnp.transpose(w, (2, 3, 1, 0)).reshape(kh * kw * Cin, Cout)  # (i,j,c)->o
    bias = jnp.zeros((Cout,), jnp.float32) if b is None else b
    out = pallas_matmul(patches, wmat, bias, relu_out=relu_out, out_dtype=out_dtype)
    return out.reshape(N, Ho, Wo, Cout)


def conv_transpose2d_nhwc(x, w_t, b, relu_out=False, out_dtype=jnp.bfloat16):
    """PyTorch ConvTranspose2d(kernel=4, stride=2, padding=1), NHWC in/out.

    Sub-pixel decomposition: a single 3x3/stride-1 patch matmul over the
    ORIGINAL (un-dilated) input emits all 4 output phases at once.
    Phase weight wc[a,b,c,ry,rx,o] = w_t[c,o, 3+ry-2a, 3+rx-2b] where valid,
    built with a pad + reshape + flip (no per-element scatters)."""
    N, H, W, Cin = x.shape
    Cin2, Cout, kh, kw = w_t.shape
    assert Cin == Cin2 and (kh, kw) == (4, 4)
    # TODO(synk): generalize to other stride/padding/output_padding combinations.

    wp = jnp.pad(w_t, ((0, 0), (0, 0), (1, 1), (1, 1)))        # (Cin,Cout,6,6)
    wc = wp.reshape(Cin, Cout, 3, 2, 3, 2)[:, :, ::-1, :, ::-1, :]
    wc = jnp.transpose(wc, (2, 4, 0, 3, 5, 1))                 # (a,b,Cin,ry,rx,Cout)
    wmat = wc.reshape(9 * Cin, 4 * Cout)

    xp = jnp.pad(x, ((0, 0), (1, 1), (1, 1), (0, 0)))
    cols = [xp[:, a:a + H, bcol:bcol + W, :] for a in range(3) for bcol in range(3)]
    patches = jnp.concatenate(cols, axis=-1).reshape(N * H * W, 9 * Cin)

    bias4 = jnp.tile(b, 4)                                     # phase-major bias
    out = pallas_matmul(patches, wmat, bias4, relu_out=relu_out,
                        out_dtype=out_dtype)                   # (N*H*W, 4*Cout)
    out = out.reshape(N, H, W, 2, 2, Cout)
    out = out.transpose(0, 1, 3, 2, 4, 5).reshape(N, 2 * H, 2 * W, Cout)
    return out


def residual_stack(x, layers):
    """layers: list of (w3x3 (nrh,nh,3,3), w1x1 (nh,nrh,1,1)), bias-free. x NHWC."""
    for (w3, w1) in layers:
        x = residual_block_fused(x, w3, w1)   # single fused Pallas kernel per block
    return jnp.maximum(x, 0.0)                # final F.relu of ResidualStack


# ---------------------------------------------------------------------------
# Full Model forward
# ---------------------------------------------------------------------------
def model_forward(x, p, commitment_cost):
    x = x.transpose(0, 2, 3, 1)                      # NCHW -> NHWC once
    # ----- Encoder -----
    h = conv2d_nhwc(x, p['enc_c1_w'], p['enc_c1_b'], stride=2, padding=1, relu_out=True)
    h = conv2d_nhwc(h, p['enc_c2_w'], p['enc_c2_b'], stride=2, padding=1, relu_out=True)
    h = conv2d_nhwc(h, p['enc_c3_w'], p['enc_c3_b'], stride=1, padding=1)
    z = residual_stack(h, p['enc_res'])
    # ----- pre-VQ 1x1 conv (f32 output: feeds the quantizer / loss) -----
    z = conv2d_nhwc(z, p['prevq_w'], p['prevq_b'], stride=1, padding=0,
                    out_dtype=jnp.float32)
    # ----- Vector quantizer (decay=0 branch) -----
    loss, quantized, perplexity, encodings = vector_quantize(
        z, p['embedding'], commitment_cost)
    # ----- Decoder -----
    d = conv2d_nhwc(quantized, p['dec_c1_w'], p['dec_c1_b'], stride=1, padding=1)
    d = residual_stack(d, p['dec_res'])
    d = conv_transpose2d_nhwc(d, p['dec_t1_w'], p['dec_t1_b'], relu_out=True)
    d = conv_transpose2d_nhwc(d, p['dec_t2_w'], p['dec_t2_b'],
                              out_dtype=jnp.float32)           # final recon in f32
    x_recon = d.transpose(0, 3, 1, 2)                # NHWC -> NCHW once
    return loss, x_recon, perplexity, encodings


def init_params(key, nh, nrl, nrh, ne, ed):
    ks = iter(jax.random.split(key, 64))

    def w(shape, scale=0.05):
        return jax.random.normal(next(ks), shape, jnp.float32) * scale

    p = {}
    # Encoder
    p['enc_c1_w'] = w((nh // 2, 1, 4, 4)); p['enc_c1_b'] = w((nh // 2,))
    p['enc_c2_w'] = w((nh, nh // 2, 4, 4)); p['enc_c2_b'] = w((nh,))
    p['enc_c3_w'] = w((nh, nh, 3, 3));      p['enc_c3_b'] = w((nh,))
    p['enc_res'] = [(w((nrh, nh, 3, 3)), w((nh, nrh, 1, 1))) for _ in range(nrl)]
    # pre-VQ conv
    p['prevq_w'] = w((ed, nh, 1, 1)); p['prevq_b'] = w((ed,))
    # VQ codebook (uniform(-1/Ne, 1/Ne), like the torch init)
    p['embedding'] = jax.random.uniform(next(ks), (ne, ed), jnp.float32,
                                        -1.0 / ne, 1.0 / ne)
    # Decoder
    p['dec_c1_w'] = w((nh, ed, 3, 3)); p['dec_c1_b'] = w((nh,))
    p['dec_res'] = [(w((nrh, nh, 3, 3)), w((nh, nrh, 1, 1))) for _ in range(nrl)]
    p['dec_t1_w'] = w((nh, nh // 2, 4, 4)); p['dec_t1_b'] = w((nh // 2,))
    p['dec_t2_w'] = w((nh // 2, 1, 4, 4));  p['dec_t2_b'] = w((1,))
    return p


if __name__ == "__main__":
    num_hiddens = 32
    num_residual_layers = 2
    num_residual_hiddens = 8
    num_embeddings = 16
    embedding_dim = 8
    commitment_cost = 0.25

    key = jax.random.PRNGKey(0)
    pkey, xkey = jax.random.split(key)
    params = init_params(pkey, num_hiddens, num_residual_layers,
                         num_residual_hiddens, num_embeddings, embedding_dim)

    x = jax.random.normal(xkey, (2, 1, 16, 16), jnp.float32)   # NCHW, 1 channel

    fwd = jax.jit(partial(model_forward, commitment_cost=commitment_cost))
    loss, x_recon, perplexity, encodings = fwd(x, params)
    jax.block_until_ready((loss, x_recon, perplexity, encodings))

    assert x_recon.shape == (2, 1, 16, 16)
    assert x_recon.dtype == jnp.float32
    assert encodings.shape == (2 * 4 * 4, num_embeddings)
    assert loss.shape == () and perplexity.shape == ()
    assert bool(jnp.isfinite(loss)) and bool(jnp.all(jnp.isfinite(x_recon)))
    print("KERNEL_OK")
</pallas_src>

<mosaic_0001>
module attributes {stable_mosaic.version = 11 : i64} {
  func.func @_mm_kernel(%arg0: i32, %arg1: memref<128x16xbf16, #tpu.memory_space<vmem>>, %arg2: memref<16x128xbf16, #tpu.memory_space<vmem>>, %arg3: memref<1x128xf32, #tpu.memory_space<vmem>>, %arg4: memref<128x128xbf16, #tpu.memory_space<vmem>>) attributes {dimension_semantics = [#tpu.dimension_semantics<parallel>], iteration_bounds = array<i64: 1>, scalar_prefetch = 0 : i64, scratch_operands = 0 : i64, tpu.core_type = #tpu.core_type<tc>, window_params = [{transform_indices = @transform_0, window_bounds = array<i64: 128, 16>}, {pipeline_mode = #tpu.pipeline_mode<synchronous>, transform_indices = @transform_1, window_bounds = array<i64: 16, 128>}, {pipeline_mode = #tpu.pipeline_mode<synchronous>, transform_indices = @transform_2, window_bounds = array<i64: 1, 128>}, {transform_indices = @transform_3, window_bounds = array<i64: 128, 128>}]} {
    %c0 = arith.constant 0 : index
    %c0_0 = arith.constant 0 : index
    %0 = vector.load %arg1[%c0, %c0_0] : memref<128x16xbf16, #tpu.memory_space<vmem>>, vector<128x16xbf16>
    %c0_1 = arith.constant 0 : index
    %c0_2 = arith.constant 0 : index
    %1 = vector.load %arg2[%c0_1, %c0_2] : memref<16x128xbf16, #tpu.memory_space<vmem>>, vector<16x128xbf16>
    %cst = arith.constant dense<0.000000e+00> : vector<128x128xf32>
    %2 = tpu.matmul %0, %1, %cst {dimension_numbers = #tpu.dot_dimension_numbers<[1], [0], [0], [1], [0, 0, 1, 1], [], []>} : vector<128x16xbf16>, vector<16x128xbf16>, vector<128x128xf32> -> vector<128x128xf32>
    %c0_3 = arith.constant 0 : index
    %c0_4 = arith.constant 0 : index
    %3 = vector.load %arg3[%c0_3, %c0_4] : memref<1x128xf32, #tpu.memory_space<vmem>>, vector<1x128xf32>
    %4 = vector.broadcast %3 : vector<1x128xf32> to vector<128x128xf32>
    %5 = arith.addf %2, %4 : vector<128x128xf32>
    %cst_5 = arith.constant 0.000000e+00 : f32
    %6 = vector.broadcast %cst_5 : f32 to vector<128x128xf32>
    %7 = arith.maximumf %5, %6 : vector<128x128xf32>
    %8 = arith.truncf %7 : vector<128x128xf32> to vector<128x128xbf16>
    %c0_6 = arith.constant 0 : index
    %c0_7 = arith.constant 0 : index
    %9 = vector.load %arg4[%c0_6, %c0_7] : memref<128x128xbf16, #tpu.memory_space<vmem>>, vector<128x128xbf16>
    tpu.vector_store %arg4[%c0_6, %c0_7], %8 {strides = array<i32>} : memref<128x128xbf16, #tpu.memory_space<vmem>>, vector<128x128xbf16>,
    return
  }
  func.func @transform_0(%arg0: i32) -> (i32, i32) {
    %c0_i32 = arith.constant 0 : i32
    %c0_i32_0 = arith.constant 0 : i32
    return %arg0, %c0_i32 : i32, i32
  }
  func.func @transform_1(%arg0: i32) -> (i32, i32) {
    %c0_i32 = arith.constant 0 : i32
    %c0_i32_0 = arith.constant 0 : i32
    %c0_i32_1 = arith.constant 0 : i32
    return %c0_i32, %c0_i32_0 : i32, i32
  }
  func.func @transform_2(%arg0: i32) -> (i32, i32) {
    %c0_i32 = arith.constant 0 : i32
    %c0_i32_0 = arith.constant 0 : i32
    %c0_i32_1 = arith.constant 0 : i32
    return %c0_i32, %c0_i32_0 : i32, i32
  }
  func.func @transform_3(%arg0: i32) -> (i32, i32) {
    %c0_i32 = arith.constant 0 : i32
    %c0_i32_0 = arith.constant 0 : i32
    return %arg0, %c0_i32 : i32, i32
  }
}

module attributes {stable_mosaic.version = 11 : i64} {
  func.func @_mm_kernel(%arg0: i32, %arg1: memref<32x256xbf16, #tpu.memory_space<vmem>>, %arg2: memref<256x128xbf16, #tpu.memory_space<vmem>>, %arg3: memref<1x128xf32, #tpu.memory_space<vmem>>, %arg4: memref<32x128xbf16, #tpu.memory_space<vmem>>) attributes {dimension_semantics = [#tpu.dimension_semantics<parallel>], iteration_bounds = array<i64: 1>, scalar_prefetch = 0 : i64, scratch_operands = 0 : i64, tpu.core_type = #tpu.core_type<tc>, window_params = [{transform_indices = @transform_0, window_bounds = array<i64: 32, 256>}, {pipeline_mode = #tpu.pipeline_mode<synchronous>, transform_indices = @transform_1, window_bounds = array<i64: 256, 128>}, {pipeline_mode = #tpu.pipeline_mode<synchronous>, transform_indices = @transform_2, window_bounds = array<i64: 1, 128>}, {transform_indices = @transform_3, window_bounds = array<i64: 32, 128>}]} {
    %c0 = arith.constant 0 : index
    %c0_0 = arith.constant 0 : index
    %0 = vector.load %arg1[%c0, %c0_0] : memref<32x256xbf16, #tpu.memory_space<vmem>>, vector<32x256xbf16>
    %c0_1 = arith.constant 0 : index
    %c0_2 = arith.constant 0 : index
    %1 = vector.load %arg2[%c0_1, %c0_2] : memref<256x128xbf16, #tpu.memory_space<vmem>>, vector<256x128xbf16>
    %cst = arith.constant dense<0.000000e+00> : vector<32x128xf32>
    %2 = tpu.matmul %0, %1, %cst {dimension_numbers = #tpu.dot_dimension_numbers<[1], [0], [0], [1], [0, 0, 1, 1], [], []>} : vector<32x256xbf16>, vector<256x128xbf16>, vector<32x128xf32> -> vector<32x128xf32>
    %c0_3 = arith.constant 0 : index
    %c0_4 = arith.constant 0 : index
    %3 = vector.load %arg3[%c0_3, %c0_4] : memref<1x128xf32, #tpu.memory_space<vmem>>, vector<1x128xf32>
    %4 = vector.broadcast %3 : vector<1x128xf32> to vector<32x128xf32>
    %5 = arith.addf %2, %4 : vector<32x128xf32>
    %cst_5 = arith.constant 0.000000e+00 : f32
    %6 = vector.broadcast %cst_5 : f32 to vector<32x128xf32>
    %7 = arith.maximumf %5, %6 : vector<32x128xf32>
    %8 = arith.truncf %7 : vector<32x128xf32> to vector<32x128xbf16>
    %c0_6 = arith.constant 0 : index
    %c0_7 = arith.constant 0 : index
    %9 = vector.load %arg4[%c0_6, %c0_7] : memref<32x128xbf16, #tpu.memory_space<vmem>>, vector<32x128xbf16>
    tpu.vector_store %arg4[%c0_6, %c0_7], %8 {strides = array<i32>} : memref<32x128xbf16, #tpu.memory_space<vmem>>, vector<32x128xbf16>,
    return
  }
  func.func @transform_0(%arg0: i32) -> (i32, i32) {
    %c0_i32 = arith.constant 0 : i32
    %c0_i32_0 = arith.constant 0 : i32
    return %arg0, %c0_i32 : i32, i32
  }
  func.func @transform_1(%arg0: i32) -> (i32, i32) {
    %c0_i32 = arith.constant 0 : i32
    %c0_i32_0 = arith.constant 0 : i32
    %c0_i32_1 = arith.constant 0 : i32
    return %c0_i32, %c0_i32_0 : i32, i32
  }
  func.func @transform_2(%arg0: i32) -> (i32, i32) {
    %c0_i32 = arith.constant 0 : i32
    %c0_i32_0 = arith.constant 0 : i32
    %c0_i32_1 = arith.constant 0 : i32
    return %c0_i32, %c0_i32_0 : i32, i32
  }
  func.func @transform_3(%arg0: i32) -> (i32, i32) {
    %c0_i32 = arith.constant 0 : i32
    %c0_i32_0 = arith.constant 0 : i32
    return %arg0, %c0_i32 : i32, i32
  }
}

module attributes {stable_mosaic.version = 11 : i64} {
  func.func @_mm_kernel(%arg0: i32, %arg1: memref<32x288xbf16, #tpu.memory_space<vmem>>, %arg2: memref<288x128xbf16, #tpu.memory_space<vmem>>, %arg3: memref<1x128xf32, #tpu.memory_space<vmem>>, %arg4: memref<32x128xbf16, #tpu.memory_space<vmem>>) attributes {dimension_semantics = [#tpu.dimension_semantics<parallel>], iteration_bounds = array<i64: 1>, scalar_prefetch = 0 : i64, scratch_operands = 0 : i64, tpu.core_type = #tpu.core_type<tc>, window_params = [{transform_indices = @transform_0, window_bounds = array<i64: 32, 288>}, {pipeline_mode = #tpu.pipeline_mode<synchronous>, transform_indices = @transform_1, window_bounds = array<i64: 288, 128>}, {pipeline_mode = #tpu.pipeline_mode<synchronous>, transform_indices = @transform_2, window_bounds = array<i64: 1, 128>}, {transform_indices = @transform_3, window_bounds = array<i64: 32, 128>}]} {
    %c0 = arith.constant 0 : index
    %c0_0 = arith.constant 0 : index
    %0 = vector.load %arg1[%c0, %c0_0] : memref<32x288xbf16, #tpu.memory_space<vmem>>, vector<32x288xbf16>
    %c0_1 = arith.constant 0 : index
    %c0_2 = arith.constant 0 : index
    %1 = vector.load %arg2[%c0_1, %c0_2] : memref<288x128xbf16, #tpu.memory_space<vmem>>, vector<288x128xbf16>
    %cst = arith.constant dense<0.000000e+00> : vector<32x128xf32>
    %2 = tpu.matmul %0, %1, %cst {dimension_numbers = #tpu.dot_dimension_numbers<[1], [0], [0], [1], [0, 0, 1, 1], [], []>} : vector<32x288xbf16>, vector<288x128xbf16>, vector<32x128xf32> -> vector<32x128xf32>
    %c0_3 = arith.constant 0 : index
    %c0_4 = arith.constant 0 : index
    %3 = vector.load %arg3[%c0_3, %c0_4] : memref<1x128xf32, #tpu.memory_space<vmem>>, vector<1x128xf32>
    %4 = vector.broadcast %3 : vector<1x128xf32> to vector<32x128xf32>
    %5 = arith.addf %2, %4 : vector<32x128xf32>
    %6 = arith.truncf %5 : vector<32x128xf32> to vector<32x128xbf16>
    %c0_5 = arith.constant 0 : index
    %c0_6 = arith.constant 0 : index
    %7 = vector.load %arg4[%c0_5, %c0_6] : memref<32x128xbf16, #tpu.memory_space<vmem>>, vector<32x128xbf16>
    tpu.vector_store %arg4[%c0_5, %c0_6], %6 {strides = array<i32>} : memref<32x128xbf16, #tpu.memory_space<vmem>>, vector<32x128xbf16>,
    return
  }
  func.func @transform_0(%arg0: i32) -> (i32, i32) {
    %c0_i32 = arith.constant 0 : i32
    %c0_i32_0 = arith.constant 0 : i32
    return %arg0, %c0_i32 : i32, i32
  }
  func.func @transform_1(%arg0: i32) -> (i32, i32) {
    %c0_i32 = arith.constant 0 : i32
    %c0_i32_0 = arith.constant 0 : i32
    %c0_i32_1 = arith.constant 0 : i32
    return %c0_i32, %c0_i32_0 : i32, i32
  }
  func.func @transform_2(%arg0: i32) -> (i32, i32) {
    %c0_i32 = arith.constant 0 : i32
    %c0_i32_0 = arith.constant 0 : i32
    %c0_i32_1 = arith.constant 0 : i32
    return %c0_i32, %c0_i32_0 : i32, i32
  }
  func.func @transform_3(%arg0: i32) -> (i32, i32) {
    %c0_i32 = arith.constant 0 : i32
    %c0_i32_0 = arith.constant 0 : i32
    return %arg0, %c0_i32 : i32, i32
  }
}

module attributes {stable_mosaic.version = 11 : i64} {
  func.func @_residual_kernel(%arg0: i32, %arg1: memref<32x288xbf16, #tpu.memory_space<vmem>>, %arg2: memref<32x128xbf16, #tpu.memory_space<vmem>>, %arg3: memref<288x128xbf16, #tpu.memory_space<vmem>>, %arg4: memref<128x128xbf16, #tpu.memory_space<vmem>>, %arg5: memref<32x128xbf16, #tpu.memory_space<vmem>>) attributes {dimension_semantics = [#tpu.dimension_semantics<parallel>], iteration_bounds = array<i64: 1>, scalar_prefetch = 0 : i64, scratch_operands = 0 : i64, tpu.core_type = #tpu.core_type<tc>, window_params = [{transform_indices = @transform_0, window_bounds = array<i64: 32, 288>}, {transform_indices = @transform_1, window_bounds = array<i64: 32, 128>}, {pipeline_mode = #tpu.pipeline_mode<synchronous>, transform_indices = @transform_2, window_bounds = array<i64: 288, 128>}, {pipeline_mode = #tpu.pipeline_mode<synchronous>, transform_indices = @transform_3, window_bounds = array<i64: 128, 128>}, {transform_indices = @transform_4, window_bounds = array<i64: 32, 128>}]} {
    %c0 = arith.constant 0 : index
    %c0_0 = arith.constant 0 : index
    %0 = vector.load %arg1[%c0, %c0_0] : memref<32x288xbf16, #tpu.memory_space<vmem>>, vector<32x288xbf16>
    %c0_1 = arith.constant 0 : index
    %c0_2 = arith.constant 0 : index
    %1 = vector.load %arg3[%c0_1, %c0_2] : memref<288x128xbf16, #tpu.memory_space<vmem>>, vector<288x128xbf16>
    %cst = arith.constant dense<0.000000e+00> : vector<32x128xf32>
    %2 = tpu.matmul %0, %1, %cst {dimension_numbers = #tpu.dot_dimension_numbers<[1], [0], [0], [1], [0, 0, 1, 1], [], []>} : vector<32x288xbf16>, vector<288x128xbf16>, vector<32x128xf32> -> vector<32x128xf32>
    %cst_3 = arith.constant 0.000000e+00 : f32
    %3 = vector.broadcast %cst_3 : f32 to vector<32x128xf32>
    %4 = arith.maximumf %2, %3 : vector<32x128xf32>
    %5 = arith.truncf %4 : vector<32x128xf32> to vector<32x128xbf16>
    %c0_4 = arith.constant 0 : index
    %c0_5 = arith.constant 0 : index
    %6 = vector.load %arg4[%c0_4, %c0_5] : memref<128x128xbf16, #tpu.memory_space<vmem>>, vector<128x128xbf16>
    %cst_6 = arith.constant dense<0.000000e+00> : vector<32x128xf32>
    %7 = tpu.matmul %5, %6, %cst_6 {dimension_numbers = #tpu.dot_dimension_numbers<[1], [0], [0], [1], [0, 0, 1, 1], [], []>} : vector<32x128xbf16>, vector<128x128xbf16>, vector<32x128xf32> -> vector<32x128xf32>
    %c0_7 = arith.constant 0 : index
    %c0_8 = arith.constant 0 : index
    %8 = vector.load %arg2[%c0_7, %c0_8] : memref<32x128xbf16, #tpu.memory_space<vmem>>, vector<32x128xbf16>
    %9 = arith.extf %8 : vector<32x128xbf16> to vector<32x128xf32>
    %10 = arith.addf %7, %9 : vector<32x128xf32>
    %11 = arith.truncf %10 : vector<32x128xf32> to vector<32x128xbf16>
    %c0_9 = arith.constant 0 : index
    %c0_10 = arith.constant 0 : index
    %12 = vector.load %arg5[%c0_9, %c0_10] : memref<32x128xbf16, #tpu.memory_space<vmem>>, vector<32x128xbf16>
    tpu.vector_store %arg5[%c0_9, %c0_10], %11 {strides = array<i32>} : memref<32x128xbf16, #tpu.memory_space<vmem>>, vector<32x128xbf16>,
    return
  }
  func.func @transform_0(%arg0: i32) -> (i32, i32) {
    %c0_i32 = arith.constant 0 : i32
    %c0_i32_0 = arith.constant 0 : i32
    return %arg0, %c0_i32 : i32, i32
  }
  func.func @transform_1(%arg0: i32) -> (i32, i32) {
    %c0_i32 = arith.constant 0 : i32
    %c0_i32_0 = arith.constant 0 : i32
    return %arg0, %c0_i32 : i32, i32
  }
  func.func @transform_2(%arg0: i32) -> (i32, i32) {
    %c0_i32 = arith.constant 0 : i32
    %c0_i32_0 = arith.constant 0 : i32
    %c0_i32_1 = arith.constant 0 : i32
    return %c0_i32, %c0_i32_0 : i32, i32
  }
  func.func @transform_3(%arg0: i32) -> (i32, i32) {
    %c0_i32 = arith.constant 0 : i32
    %c0_i32_0 = arith.constant 0 : i32
    %c0_i32_1 = arith.constant 0 : i32
    return %c0_i32, %c0_i32_0 : i32, i32
  }
  func.func @transform_4(%arg0: i32) -> (i32, i32) {
    %c0_i32 = arith.constant 0 : i32
    %c0_i32_0 = arith.constant 0 : i32
    return %arg0, %c0_i32 : i32, i32
  }
}

module attributes {stable_mosaic.version = 11 : i64} {
  func.func @_mm_kernel(%arg0: i32, %arg1: memref<32x32xbf16, #tpu.memory_space<vmem>>, %arg2: memref<32x128xbf16, #tpu.memory_space<vmem>>, %arg3: memref<1x128xf32, #tpu.memory_space<vmem>>, %arg4: memref<32x128xf32, #tpu.memory_space<vmem>>) attributes {dimension_semantics = [#tpu.dimension_semantics<parallel>], iteration_bounds = array<i64: 1>, scalar_prefetch = 0 : i64, scratch_operands = 0 : i64, tpu.core_type = #tpu.core_type<tc>, window_params = [{transform_indices = @transform_0, window_bounds = array<i64: 32, 32>}, {pipeline_mode = #tpu.pipeline_mode<synchronous>, transform_indices = @transform_1, window_bounds = array<i64: 32, 128>}, {pipeline_mode = #tpu.pipeline_mode<synchronous>, transform_indices = @transform_2, window_bounds = array<i64: 1, 128>}, {transform_indices = @transform_3, window_bounds = array<i64: 32, 128>}]} {
    %c0 = arith.constant 0 : index
    %c0_0 = arith.constant 0 : index
    %0 = vector.load %arg1[%c0, %c0_0] : memref<32x32xbf16, #tpu.memory_space<vmem>>, vector<32x32xbf16>
    %c0_1 = arith.constant 0 : index
    %c0_2 = arith.constant 0 : index
    %1 = vector.load %arg2[%c0_1, %c0_2] : memref<32x128xbf16, #tpu.memory_space<vmem>>, vector<32x128xbf16>
    %cst = arith.constant dense<0.000000e+00> : vector<32x128xf32>
    %2 = tpu.matmul %0, %1, %cst {dimension_numbers = #tpu.dot_dimension_numbers<[1], [0], [0], [1], [0, 0, 1, 1], [], []>} : vector<32x32xbf16>, vector<32x128xbf16>, vector<32x128xf32> -> vector<32x128xf32>
    %c0_3 = arith.constant 0 : index
    %c0_4 = arith.constant 0 : index
    %3 = vector.load %arg3[%c0_3, %c0_4] : memref<1x128xf32, #tpu.memory_space<vmem>>, vector<1x128xf32>
    %4 = vector.broadcast %3 : vector<1x128xf32> to vector<32x128xf32>
    %5 = arith.addf %2, %4 : vector<32x128xf32>
    %c0_5 = arith.constant 0 : index
    %c0_6 = arith.constant 0 : index
    %6 = vector.load %arg4[%c0_5, %c0_6] : memref<32x128xf32, #tpu.memory_space<vmem>>, vector<32x128xf32>
    tpu.vector_store %arg4[%c0_5, %c0_6], %5 {strides = array<i32>} : memref<32x128xf32, #tpu.memory_space<vmem>>, vector<32x128xf32>,
    return
  }
  func.func @transform_0(%arg0: i32) -> (i32, i32) {
    %c0_i32 = arith.constant 0 : i32
    %c0_i32_0 = arith.constant 0 : i32
    return %arg0, %c0_i32 : i32, i32
  }
  func.func @transform_1(%arg0: i32) -> (i32, i32) {
    %c0_i32 = arith.constant 0 : i32
    %c0_i32_0 = arith.constant 0 : i32
    %c0_i32_1 = arith.constant 0 : i32
    return %c0_i32, %c0_i32_0 : i32, i32
  }
  func.func @transform_2(%arg0: i32) -> (i32, i32) {
    %c0_i32 = arith.constant 0 : i32
    %c0_i32_0 = arith.constant 0 : i32
    %c0_i32_1 = arith.constant 0 : i32
    return %c0_i32, %c0_i32_0 : i32, i32
  }
  func.func @transform_3(%arg0: i32) -> (i32, i32) {
    %c0_i32 = arith.constant 0 : i32
    %c0_i32_0 = arith.constant 0 : i32
    return %arg0, %c0_i32 : i32, i32
  }
}

module attributes {stable_mosaic.version = 11 : i64} {
  func.func @_vq_kernel(%arg0: i32, %arg1: memref<32x128xf32, #tpu.memory_space<vmem>>, %arg2: memref<128x128xf32, #tpu.memory_space<vmem>>, %arg3: memref<1x128xf32, #tpu.memory_space<vmem>>, %arg4: memref<32x128xf32, #tpu.memory_space<vmem>>, %arg5: memref<32x128xf32, #tpu.memory_space<vmem>>) attributes {dimension_semantics = [#tpu.dimension_semantics<parallel>], iteration_bounds = array<i64: 1>, scalar_prefetch = 0 : i64, scratch_operands = 0 : i64, tpu.core_type = #tpu.core_type<tc>, window_params = [{transform_indices = @transform_0, window_bounds = array<i64: 32, 128>}, {pipeline_mode = #tpu.pipeline_mode<synchronous>, transform_indices = @transform_1, window_bounds = array<i64: 128, 128>}, {pipeline_mode = #tpu.pipeline_mode<synchronous>, transform_indices = @transform_2, window_bounds = array<i64: 1, 128>}, {transform_indices = @transform_3, window_bounds = array<i64: 32, 128>}, {transform_indices = @transform_4, window_bounds = array<i64: 32, 128>}]} {
    %c0 = arith.constant 0 : index
    %c0_0 = arith.constant 0 : index
    %0 = vector.load %arg1[%c0, %c0_0] : memref<32x128xf32, #tpu.memory_space<vmem>>, vector<32x128xf32>
    %c0_1 = arith.constant 0 : index
    %c0_2 = arith.constant 0 : index
    %1 = vector.load %arg2[%c0_1, %c0_2] : memref<128x128xf32, #tpu.memory_space<vmem>>, vector<128x128xf32>
    %2 = arith.mulf %0, %0 : vector<32x128xf32>
    %cst = arith.constant dense<0.000000e+00> : vector<32xf32>
    %3 = vector.multi_reduction <add>, %2, %cst [1] : vector<32x128xf32> to vector<32xf32>
    %4 = vector.shape_cast %3 : vector<32xf32> to vector<32x1xf32>
    %cst_3 = arith.constant dense<0.000000e+00> : vector<32x128xf32>
    %5 = tpu.matmul %0, %1, %cst_3 {dimension_numbers = #tpu.dot_dimension_numbers<[1], [1], [0], [0], [0, 0, 1, 0], [], []>} : vector<32x128xf32>, vector<128x128xf32>, vector<32x128xf32> -> vector<32x128xf32>
    %c0_4 = arith.constant 0 : index
    %c0_5 = arith.constant 0 : index
    %6 = vector.load %arg3[%c0_4, %c0_5] : memref<1x128xf32, #tpu.memory_space<vmem>>, vector<1x128xf32>
    %7 = vector.broadcast %4 : vector<32x1xf32> to vector<32x128xf32>
    %8 = vector.broadcast %6 : vector<1x128xf32> to vector<32x128xf32>
    %9 = arith.addf %7, %8 : vector<32x128xf32>
    %cst_6 = arith.constant 2.000000e+00 : f32
    %10 = vector.broadcast %cst_6 : f32 to vector<32x128xf32>
    %11 = arith.mulf %10, %5 : vector<32x128xf32>
    %12 = arith.subf %9, %11 : vector<32x128xf32>
    %13 = tpu.reduce_index %12 {axis = 1 : i32, kind = #tpu.reduction_kind<arg_min>} : vector<32x128xf32> -> vector<32xi32>
    %14 = vector.shape_cast %13 : vector<32xi32> to vector<32x1xi32>
    %15 = tpu.iota {dimensions = array<i32: 1>} : vector<32x128xi32>
    %16 = vector.broadcast %14 : vector<32x1xi32> to vector<32x128xi32>
    %17 = arith.cmpi eq, %15, %16 : vector<32x128xi32>
    %18 = arith.extui %17 : vector<32x128xi1> to vector<32x128xi32>
    %19 = arith.sitofp %18 : vector<32x128xi32> to vector<32x128xf32>
    %c0_7 = arith.constant 0 : index
    %c0_8 = arith.constant 0 : index
    %20 = vector.load %arg4[%c0_7, %c0_8] : memref<32x128xf32, #tpu.memory_space<vmem>>, vector<32x128xf32>
    tpu.vector_store %arg4[%c0_7, %c0_8], %19 {strides = array<i32>} : memref<32x128xf32, #tpu.memory_space<vmem>>, vector<32x128xf32>,
    %cst_9 = arith.constant dense<0.000000e+00> : vector<32x128xf32>
    %21 = tpu.matmul %19, %1, %cst_9 {dimension_numbers = #tpu.dot_dimension_numbers<[1], [0], [0], [1], [0, 0, 1, 1], [], []>} : vector<32x128xf32>, vector<128x128xf32>, vector<32x128xf32> -> vector<32x128xf32>
    %c0_10 = arith.constant 0 : index
    %c0_11 = arith.constant 0 : index
    %22 = vector.load %arg5[%c0_10, %c0_11] : memref<32x128xf32, #tpu.memory_space<vmem>>, vector<32x128xf32>
    tpu.vector_store %arg5[%c0_10, %c0_11], %21 {strides = array<i32>} : memref<32x128xf32, #tpu.memory_space<vmem>>, vector<32x128xf32>,
    return
  }
  func.func @transform_0(%arg0: i32) -> (i32, i32) {
    %c0_i32 = arith.constant 0 : i32
    %c0_i32_0 = arith.constant 0 : i32
    return %arg0, %c0_i32 : i32, i32
  }
  func.func @transform_1(%arg0: i32) -> (i32, i32) {
    %c0_i32 = arith.constant 0 : i32
    %c0_i32_0 = arith.constant 0 : i32
    %c0_i32_1 = arith.constant 0 : i32
    return %c0_i32, %c0_i32_0 : i32, i32
  }
  func.func @transform_2(%arg0: i32) -> (i32, i32) {
    %c0_i32 = arith.constant 0 : i32
    %c0_i32_0 = arith.constant 0 : i32
    %c0_i32_1 = arith.constant 0 : i32
    return %c0_i32, %c0_i32_0 : i32, i32
  }
  func.func @transform_3(%arg0: i32) -> (i32, i32) {
    %c0_i32 = arith.constant 0 : i32
    %c0_i32_0 = arith.constant 0 : i32
    return %arg0, %c0_i32 : i32, i32
  }
  func.func @transform_4(%arg0: i32) -> (i32, i32) {
    %c0_i32 = arith.constant 0 : i32
    %c0_i32_0 = arith.constant 0 : i32
    return %arg0, %c0_i32 : i32, i32
  }
}

module attributes {stable_mosaic.version = 11 : i64} {
  func.func @_mm_kernel(%arg0: i32, %arg1: memref<32x72xbf16, #tpu.memory_space<vmem>>, %arg2: memref<72x128xbf16, #tpu.memory_space<vmem>>, %arg3: memref<1x128xf32, #tpu.memory_space<vmem>>, %arg4: memref<32x128xbf16, #tpu.memory_space<vmem>>) attributes {dimension_semantics = [#tpu.dimension_semantics<parallel>], iteration_bounds = array<i64: 1>, scalar_prefetch = 0 : i64, scratch_operands = 0 : i64, tpu.core_type = #tpu.core_type<tc>, window_params = [{transform_indices = @transform_0, window_bounds = array<i64: 32, 72>}, {pipeline_mode = #tpu.pipeline_mode<synchronous>, transform_indices = @transform_1, window_bounds = array<i64: 72, 128>}, {pipeline_mode = #tpu.pipeline_mode<synchronous>, transform_indices = @transform_2, window_bounds = array<i64: 1, 128>}, {transform_indices = @transform_3, window_bounds = array<i64: 32, 128>}]} {
    %c0 = arith.constant 0 : index
    %c0_0 = arith.constant 0 : index
    %0 = vector.load %arg1[%c0, %c0_0] : memref<32x72xbf16, #tpu.memory_space<vmem>>, vector<32x72xbf16>
    %c0_1 = arith.constant 0 : index
    %c0_2 = arith.constant 0 : index
    %1 = vector.load %arg2[%c0_1, %c0_2] : memref<72x128xbf16, #tpu.memory_space<vmem>>, vector<72x128xbf16>
    %cst = arith.constant dense<0.000000e+00> : vector<32x128xf32>
    %2 = tpu.matmul %0, %1, %cst {dimension_numbers = #tpu.dot_dimension_numbers<[1], [0], [0], [1], [0, 0, 1, 1], [], []>} : vector<32x72xbf16>, vector<72x128xbf16>, vector<32x128xf32> -> vector<32x128xf32>
    %c0_3 = arith.constant 0 : index
    %c0_4 = arith.constant 0 : index
    %3 = vector.load %arg3[%c0_3, %c0_4] : memref<1x128xf32, #tpu.memory_space<vmem>>, vector<1x128xf32>
    %4 = vector.broadcast %3 : vector<1x128xf32> to vector<32x128xf32>
    %5 = arith.addf %2, %4 : vector<32x128xf32>
    %6 = arith.truncf %5 : vector<32x128xf32> to vector<32x128xbf16>
    %c0_5 = arith.constant 0 : index
    %c0_6 = arith.constant 0 : index
    %7 = vector.load %arg4[%c0_5, %c0_6] : memref<32x128xbf16, #tpu.memory_space<vmem>>, vector<32x128xbf16>
    tpu.vector_store %arg4[%c0_5, %c0_6], %6 {strides = array<i32>} : memref<32x128xbf16, #tpu.memory_space<vmem>>, vector<32x128xbf16>,
    return
  }
  func.func @transform_0(%arg0: i32) -> (i32, i32) {
    %c0_i32 = arith.constant 0 : i32
    %c0_i32_0 = arith.constant 0 : i32
    return %arg0, %c0_i32 : i32, i32
  }
  func.func @transform_1(%arg0: i32) -> (i32, i32) {
    %c0_i32 = arith.constant 0 : i32
    %c0_i32_0 = arith.constant 0 : i32
    %c0_i32_1 = arith.constant 0 : i32
    return %c0_i32, %c0_i32_0 : i32, i32
  }
  func.func @transform_2(%arg0: i32) -> (i32, i32) {
    %c0_i32 = arith.constant 0 : i32
    %c0_i32_0 = arith.constant 0 : i32
    %c0_i32_1 = arith.constant 0 : i32
    return %c0_i32, %c0_i32_0 : i32, i32
  }
  func.func @transform_3(%arg0: i32) -> (i32, i32) {
    %c0_i32 = arith.constant 0 : i32
    %c0_i32_0 = arith.constant 0 : i32
    return %arg0, %c0_i32 : i32, i32
  }
}

module attributes {stable_mosaic.version = 11 : i64} {
  func.func @_mm_kernel(%arg0: i32, %arg1: memref<32x288xbf16, #tpu.memory_space<vmem>>, %arg2: memref<288x128xbf16, #tpu.memory_space<vmem>>, %arg3: memref<1x128xf32, #tpu.memory_space<vmem>>, %arg4: memref<32x128xbf16, #tpu.memory_space<vmem>>) attributes {dimension_semantics = [#tpu.dimension_semantics<parallel>], iteration_bounds = array<i64: 1>, scalar_prefetch = 0 : i64, scratch_operands = 0 : i64, tpu.core_type = #tpu.core_type<tc>, window_params = [{transform_indices = @transform_0, window_bounds = array<i64: 32, 288>}, {pipeline_mode = #tpu.pipeline_mode<synchronous>, transform_indices = @transform_1, window_bounds = array<i64: 288, 128>}, {pipeline_mode = #tpu.pipeline_mode<synchronous>, transform_indices = @transform_2, window_bounds = array<i64: 1, 128>}, {transform_indices = @transform_3, window_bounds = array<i64: 32, 128>}]} {
    %c0 = arith.constant 0 : index
    %c0_0 = arith.constant 0 : index
    %0 = vector.load %arg1[%c0, %c0_0] : memref<32x288xbf16, #tpu.memory_space<vmem>>, vector<32x288xbf16>
    %c0_1 = arith.constant 0 : index
    %c0_2 = arith.constant 0 : index
    %1 = vector.load %arg2[%c0_1, %c0_2] : memref<288x128xbf16, #tpu.memory_space<vmem>>, vector<288x128xbf16>
    %cst = arith.constant dense<0.000000e+00> : vector<32x128xf32>
    %2 = tpu.matmul %0, %1, %cst {dimension_numbers = #tpu.dot_dimension_numbers<[1], [0], [0], [1], [0, 0, 1, 1], [], []>} : vector<32x288xbf16>, vector<288x128xbf16>, vector<32x128xf32> -> vector<32x128xf32>
    %c0_3 = arith.constant 0 : index
    %c0_4 = arith.constant 0 : index
    %3 = vector.load %arg3[%c0_3, %c0_4] : memref<1x128xf32, #tpu.memory_space<vmem>>, vector<1x128xf32>
    %4 = vector.broadcast %3 : vector<1x128xf32> to vector<32x128xf32>
    %5 = arith.addf %2, %4 : vector<32x128xf32>
    %cst_5 = arith.constant 0.000000e+00 : f32
    %6 = vector.broadcast %cst_5 : f32 to vector<32x128xf32>
    %7 = arith.maximumf %5, %6 : vector<32x128xf32>
    %8 = arith.truncf %7 : vector<32x128xf32> to vector<32x128xbf16>
    %c0_6 = arith.constant 0 : index
    %c0_7 = arith.constant 0 : index
    %9 = vector.load %arg4[%c0_6, %c0_7] : memref<32x128xbf16, #tpu.memory_space<vmem>>, vector<32x128xbf16>
    tpu.vector_store %arg4[%c0_6, %c0_7], %8 {strides = array<i32>} : memref<32x128xbf16, #tpu.memory_space<vmem>>, vector<32x128xbf16>,
    return
  }
  func.func @transform_0(%arg0: i32) -> (i32, i32) {
    %c0_i32 = arith.constant 0 : i32
    %c0_i32_0 = arith.constant 0 : i32
    return %arg0, %c0_i32 : i32, i32
  }
  func.func @transform_1(%arg0: i32) -> (i32, i32) {
    %c0_i32 = arith.constant 0 : i32
    %c0_i32_0 = arith.constant 0 : i32
    %c0_i32_1 = arith.constant 0 : i32
    return %c0_i32, %c0_i32_0 : i32, i32
  }
  func.func @transform_2(%arg0: i32) -> (i32, i32) {
    %c0_i32 = arith.constant 0 : i32
    %c0_i32_0 = arith.constant 0 : i32
    %c0_i32_1 = arith.constant 0 : i32
    return %c0_i32, %c0_i32_0 : i32, i32
  }
  func.func @transform_3(%arg0: i32) -> (i32, i32) {
    %c0_i32 = arith.constant 0 : i32
    %c0_i32_0 = arith.constant 0 : i32
    return %arg0, %c0_i32 : i32, i32
  }
}

module attributes {stable_mosaic.version = 11 : i64} {
  func.func @_mm_kernel(%arg0: i32, %arg1: memref<128x144xbf16, #tpu.memory_space<vmem>>, %arg2: memref<144x128xbf16, #tpu.memory_space<vmem>>, %arg3: memref<1x128xf32, #tpu.memory_space<vmem>>, %arg4: memref<128x128xf32, #tpu.memory_space<vmem>>) attributes {dimension_semantics = [#tpu.dimension_semantics<parallel>], iteration_bounds = array<i64: 1>, scalar_prefetch = 0 : i64, scratch_operands = 0 : i64, tpu.core_type = #tpu.core_type<tc>, window_params = [{transform_indices = @transform_0, window_bounds = array<i64: 128, 144>}, {pipeline_mode = #tpu.pipeline_mode<synchronous>, transform_indices = @transform_1, window_bounds = array<i64: 144, 128>}, {pipeline_mode = #tpu.pipeline_mode<synchronous>, transform_indices = @transform_2, window_bounds = array<i64: 1, 128>}, {transform_indices = @transform_3, window_bounds = array<i64: 128, 128>}]} {
    %c0 = arith.constant 0 : index
    %c0_0 = arith.constant 0 : index
    %0 = vector.load %arg1[%c0, %c0_0] : memref<128x144xbf16, #tpu.memory_space<vmem>>, vector<128x144xbf16>
    %c0_1 = arith.constant 0 : index
    %c0_2 = arith.constant 0 : index
    %1 = vector.load %arg2[%c0_1, %c0_2] : memref<144x128xbf16, #tpu.memory_space<vmem>>, vector<144x128xbf16>
    %cst = arith.constant dense<0.000000e+00> : vector<128x128xf32>
    %2 = tpu.matmul %0, %1, %cst {dimension_numbers = #tpu.dot_dimension_numbers<[1], [0], [0], [1], [0, 0, 1, 1], [], []>} : vector<128x144xbf16>, vector<144x128xbf16>, vector<128x128xf32> -> vector<128x128xf32>
    %c0_3 = arith.constant 0 : index
    %c0_4 = arith.constant 0 : index
    %3 = vector.load %arg3[%c0_3, %c0_4] : memref<1x128xf32, #tpu.memory_space<vmem>>, vector<1x128xf32>
    %4 = vector.broadcast %3 : vector<1x128xf32> to vector<128x128xf32>
    %5 = arith.addf %2, %4 : vector<128x128xf32>
    %c0_5 = arith.constant 0 : index
    %c0_6 = arith.constant 0 : index
    %6 = vector.load %arg4[%c0_5, %c0_6] : memref<128x128xf32, #tpu.memory_space<vmem>>, vector<128x128xf32>
    tpu.vector_store %arg4[%c0_5, %c0_6], %5 {strides = array<i32>} : memref<128x128xf32, #tpu.memory_space<vmem>>, vector<128x128xf32>,
    return
  }
  func.func @transform_0(%arg0: i32) -> (i32, i32) {
    %c0_i32 = arith.constant 0 : i32
    %c0_i32_0 = arith.constant 0 : i32
    return %arg0, %c0_i32 : i32, i32
  }
  func.func @transform_1(%arg0: i32) -> (i32, i32) {
    %c0_i32 = arith.constant 0 : i32
    %c0_i32_0 = arith.constant 0 : i32
    %c0_i32_1 = arith.constant 0 : i32
    return %c0_i32, %c0_i32_0 : i32, i32
  }
  func.func @transform_2(%arg0: i32) -> (i32, i32) {
    %c0_i32 = arith.constant 0 : i32
    %c0_i32_0 = arith.constant 0 : i32
    %c0_i32_1 = arith.constant 0 : i32
    return %c0_i32, %c0_i32_0 : i32, i32
  }
  func.func @transform_3(%arg0: i32) -> (i32, i32) {
    %c0_i32 = arith.constant 0 : i32
    %c0_i32_0 = arith.constant 0 : i32
    return %arg0, %c0_i32 : i32, i32
  }
}

</mosaic_0001>

<llo_original>
// kernel: model_forward.12
$region0: #{model_forward.12}
  #allocation0 [shape = 'u32[]', space=smem, size = 0x4, offset = 0x4, fixed_abs, tag = 'smem constant byte address 0x4 - core index']
  #allocation1 [shape = 'u32[144,128]{1,0:T(1,128)}', space=vmem, size = 0x12000, scoped, tag = 'internal scratch']
  %s0 = inlined_call_operand.vmem [shape: bf16[128,16], index: 0, kind: input, shape index: {}]
  %s1 = inlined_call_operand.vmem [shape: bf16[16,128], index: 1, kind: input, shape index: {}]
  %s2 = inlined_call_operand.vmem [shape: f32[1,128], index: 2, kind: input, shape index: {}]
  %s3 = inlined_call_operand.vmem [shape: bf16[128,128], index: 3, kind: output, shape index: {}]
  %s4 = sld [smem:[#allocation0]]
  $region22: #{model_forward.12} parent=0
    _
  %s6 = ssub.s32 1, %s4
  %s7 = scalar_select 0, %s6, %s4
  // Predicated region
  $region2: #{model_forward.12} parent=0 // pred_check
    _
  $region3: #{model_forward.12} parent=0 // pred_check_branch
    %9 = sbr.rel (0) target = $region5
  $region4: #{model_forward.12} parent=0 // pred_region
    _
  $region5: #{model_forward.12} parent=0 // pred_fallthru
    _
  // Predicated region
  $region6: #{model_forward.12} parent=0 // pred_check
    _
  $region7: #{model_forward.12} parent=0 // pred_check_branch
    %11 = sbr.rel (0) target = $region9
  $region8: #{model_forward.12} parent=0 // pred_region
    _
  $region9: #{model_forward.12} parent=0 // pred_fallthru
    _
  // Predicated region
  $region10: #{model_forward.12} parent=0 // pred_check
    _
  $region11: #{model_forward.12} parent=0 // pred_check_branch
    %13 = sbr.rel (0) target = $region13
  $region12: #{model_forward.12} parent=0 // pred_region
    _
  $region13: #{model_forward.12} parent=0 // pred_fallthru
    _
  %v15 = vld [vmem:[%s0] sm:$0xf]
  %v16 = vld [vmem:[%s0 + $0x4] sm:$0xf]
  %v17 = vld [vmem:[%s0 + $0x8] sm:$0xf]
  %v18 = vld [vmem:[%s0 + $0xc] sm:$0xf]
  %v19 = vld [vmem:[%s0 + $0x10] sm:$0xf]
  %v20 = vld [vmem:[%s0 + $0x14] sm:$0xf]
  %v21 = vld [vmem:[%s0 + $0x18] sm:$0xf]
  %v22 = vld [vmem:[%s0 + $0x1c] sm:$0xf]
  %v23 = vld [vmem:[%s0 + $0x20] sm:$0xf]
  %v24 = vld [vmem:[%s0 + $0x24] sm:$0xf]
  %v25 = vld [vmem:[%s0 + $0x28] sm:$0xf]
  %v26 = vld [vmem:[%s0 + $0x2c] sm:$0xf]
  %v27 = vld [vmem:[%s0 + $0x30] sm:$0xf]
  %v28 = vld [vmem:[%s0 + $0x34] sm:$0xf]
  %v29 = vld [vmem:[%s0 + $0x38] sm:$0xf]
  %v30 = vld [vmem:[%s0 + $0x3c] sm:$0xf]
  %v31 = vld [vmem:[%s1] sm:$0xf]
  %v32 = vld [vmem:[%s1 + $0x4] sm:$0xf]
  %v33 = vld [vmem:[%s2] sm:$0x1]
  %v35 = vlaneseq
  %v36 = vshrl.u32 %v35, 7
  %v37 = vsub.s32 0, %v36
  %v38 = vrot.slane %v33, %v37
  %v56 = vunpack.c.l.b16 %v15
  %v57 = vunpack.c.l.b16 %v16
  %v58 = vunpack.c.l.b16 %v17
  %v59 = vunpack.c.l.b16 %v18
  %v60 = vunpack.c.l.b16 %v19
  %v61 = vunpack.c.l.b16 %v20
  %v62 = vunpack.c.l.b16 %v21
  %v63 = vunpack.c.l.b16 %v22
  %v64 = vunpack.c.l.b16 %v23
  %v65 = vunpack.c.l.b16 %v24
  %v66 = vunpack.c.l.b16 %v25
  %v67 = vunpack.c.l.b16 %v26
  %v68 = vunpack.c.l.b16 %v27
  %v69 = vunpack.c.l.b16 %v28
  %v70 = vunpack.c.l.b16 %v29
  %v71 = vunpack.c.l.b16 %v30
  %v72 = vpack.c.b16 %v57, %v56
  %v73 = vpack.c.b16 %v59, %v58
  %v74 = vpack.c.b16 %v61, %v60
  %v75 = vpack.c.b16 %v63, %v62
  %v76 = vpack.c.b16 %v65, %v64
  %v77 = vpack.c.b16 %v67, %v66
  %v78 = vpack.c.b16 %v69, %v68
  %v79 = vpack.c.b16 %v71, %v70
  %v82 = vunpack.c.l.b16 %v31
  %v83 = vunpack.c.l.b16 %v32
  %v84 = vpack.c.b16 %v83, %v82
  %vm86 = vcmask 130048
  %v88 = vsel %vm86, %v72, 0
  %v91 = vsel %vm86, %v73, 0
  %v94 = vsel %vm86, %v74, 0
  %v97 = vsel %vm86, %v75, 0
  %v100 = vsel %vm86, %v76, 0
  %v103 = vsel %vm86, %v77, 0
  %v106 = vsel %vm86, %v78, 0
  %v109 = vsel %vm86, %v79, 0
  %111 = vmatprep.subr.bf16.mxu0 0
  %112 = vmatpush1.bf16.msra.mxu0 0
  %113 = vmatprep.subr.bf16.mxu0 0
  %114 = vmatpush1.bf16.msra.mxu0 0
  %115 = vmatprep.subr.bf16.mxu0 0
  %116 = vmatpush1.bf16.msra.mxu0 0
  %117 = vmatprep.subr.bf16.mxu0 0
  %118 = vmatpush1.bf16.msra.mxu0 0
  %119 = vmatprep.subr.bf16.mxu0 0
  %120 = vmatpush1.bf16.msra.mxu0 0
  %121 = vmatprep.subr.bf16.mxu0 0
  %122 = vmatpush1.bf16.msra.mxu0 0
  %123 = vmatprep.subr.bf16.mxu0 0
  %124 = vmatpush1.bf16.msra.mxu0 0
  %125 = vmatprep.subr.bf16.mxu0 0
  %126 = vmatpush1.bf16.msra.mxu0 %v84
  %127 = vmatprep.subr.bf16.mxu0 0
  %128 = vmatpush2.bf16.msra.mxu0 0
  %129 = vmatprep.subr.bf16.mxu0 0
  %130 = vmatpush2.bf16.msra.mxu0 0
  %131 = vmatprep.subr.bf16.mxu0 0
  %132 = vmatpush2.bf16.msra.mxu0 0
  %133 = vmatprep.subr.bf16.mxu0 0
  %134 = vmatpush2.bf16.msra.mxu0 0
  %135 = vmatprep.subr.bf16.mxu0 0
  %136 = vmatpush2.bf16.msra.mxu0 0
  %137 = vmatprep.subr.bf16.mxu0 0
  %138 = vmatpush2.bf16.msra.mxu0 0
  %139 = vmatprep.subr.bf16.mxu0 0
  %140 = vmatpush2.bf16.msra.mxu0 0
  %141 = vmatprep.subr.bf16.mxu0 0
  %142 = vmatpush2.bf16.msra.mxu0 0
  %143 = vmatprep.mubr.bf16.mxu0 0
  %144 = vmatmul.mubr.bf16.gmra.mxu0 %v88
  %v145 = vpop.f32.mrf.mxu0
  %v146 = vadd.f32 %v38, %v145
  %v147 = vpop.f32.mrf.mxu0
  %v148 = vpop.f32.mrf.mxu0
  %v149 = vadd.f32 %v38, %v148
  %v150 = vpop.f32.mrf.mxu0
  %151 = vmatprep.mubr.bf16.mxu0 0
  %152 = vmatmul.mubr.bf16.gmra.mxu0 %v91
  %v153 = vpop.f32.mrf.mxu0
  %v154 = vadd.f32 %v38, %v153
  %v155 = vpop.f32.mrf.mxu0
  %v156 = vpop.f32.mrf.mxu0
  %v157 = vadd.f32 %v38, %v156
  %v158 = vpop.f32.mrf.mxu0
  %159 = vmatprep.mubr.bf16.mxu0 0
  %160 = vmatmul.mubr.bf16.gmra.mxu0 %v94
  %v161 = vpop.f32.mrf.mxu0
  %v162 = vadd.f32 %v38, %v161
  %v163 = vpop.f32.mrf.mxu0
  %v164 = vpop.f32.mrf.mxu0
  %v165 = vadd.f32 %v38, %v164
  %v166 = vpop.f32.mrf.mxu0
  %167 = vmatprep.mubr.bf16.mxu0 0
  %168 = vmatmul.mubr.bf16.gmra.mxu0 %v97
  %v169 = vpop.f32.mrf.mxu0
  %v170 = vadd.f32 %v38, %v169
  %v171 = vpop.f32.mrf.mxu0
  %v172 = vpop.f32.mrf.mxu0
  %v173 = vadd.f32 %v38, %v172
  %v174 = vpop.f32.mrf.mxu0
  %175 = vmatprep.mubr.bf16.mxu0 0
  %176 = vmatmul.mubr.bf16.gmra.mxu0 %v100
  %v177 = vpop.f32.mrf.mxu0
  %v178 = vadd.f32 %v38, %v177
  %v179 = vpop.f32.mrf.mxu0
  %v180 = vpop.f32.mrf.mxu0
  %v181 = vadd.f32 %v38, %v180
  %v182 = vpop.f32.mrf.mxu0
  %183 = vmatprep.mubr.bf16.mxu0 0
  %184 = vmatmul.mubr.bf16.gmra.mxu0 %v103
  %v185 = vpop.f32.mrf.mxu0
  %v186 = vadd.f32 %v38, %v185
  %v187 = vpop.f32.mrf.mxu0
  %v188 = vpop.f32.mrf.mxu0
  %v189 = vadd.f32 %v38, %v188
  %v190 = vpop.f32.mrf.mxu0
  %191 = vmatprep.mubr.bf16.mxu0 0
  %192 = vmatmul.mubr.bf16.gmra.mxu0 %v106
  %v193 = vpop.f32.mrf.mxu0
  %v194 = vadd.f32 %v38, %v193
  %v195 = vpop.f32.mrf.mxu0
  %v196 = vpop.f32.mrf.mxu0
  %v197 = vadd.f32 %v38, %v196
  %v198 = vpop.f32.mrf.mxu0
  %199 = vmatprep.mubr.bf16.mxu0 0
  %200 = vmatmul.mubr.bf16.gmra.mxu0 %v109
  %v201 = vpop.f32.mrf.mxu0
  %v202 = vadd.f32 %v38, %v201
  %v203 = vpop.f32.mrf.mxu0
  %v204 = vpop.f32.mrf.mxu0
  %v205 = vadd.f32 %v38, %v204
  %v206 = vpop.f32.mrf.mxu0
  %207 = vdwg.mxu0
  %v208 = vmax.f32 %v146, 0.0
  %v209 = vmax.f32 %v149, 0.0
  %v210 = vmax.f32 %v154, 0.0
  %v211 = vmax.f32 %v157, 0.0
  %v212 = vmax.f32 %v162, 0.0
  %v213 = vmax.f32 %v165, 0.0
  %v214 = vmax.f32 %v170, 0.0
  %v215 = vmax.f32 %v173, 0.0
  %v216 = vmax.f32 %v178, 0.0
  %v217 = vmax.f32 %v181, 0.0
  %v218 = vmax.f32 %v186, 0.0
  %v219 = vmax.f32 %v189, 0.0
  %v220 = vmax.f32 %v194, 0.0
  %v221 = vmax.f32 %v197, 0.0
  %v222 = vmax.f32 %v202, 0.0
  %v223 = vmax.f32 %v205, 0.0
  %v224 = vpack.c.bf16 %v209, %v208
  %v225 = vpack.c.bf16 %v211, %v210
  %v226 = vpack.c.bf16 %v213, %v212
  %v227 = vpack.c.bf16 %v215, %v214
  %v228 = vpack.c.bf16 %v217, %v216
  %v229 = vpack.c.bf16 %v219, %v218
  %v230 = vpack.c.bf16 %v221, %v220
  %v231 = vpack.c.bf16 %v223, %v222
  %v240 = vunpack.c.l.b16 %v224
  %v241 = vunpack.c.h.b16 %v224
  %v242 = vunpack.c.l.b16 %v225
  %v243 = vunpack.c.h.b16 %v225
  %v244 = vunpack.c.l.b16 %v226
  %v245 = vunpack.c.h.b16 %v226
  %v246 = vunpack.c.l.b16 %v227
  %v247 = vunpack.c.h.b16 %v227
  %v248 = vunpack.c.l.b16 %v228
  %v249 = vunpack.c.h.b16 %v228
  %v250 = vunpack.c.l.b16 %v229
  %v251 = vunpack.c.h.b16 %v229
  %v252 = vunpack.c.l.b16 %v230
  %v253 = vunpack.c.h.b16 %v230
  %v254 = vunpack.c.l.b16 %v231
  %v255 = vunpack.c.h.b16 %v231
  %v256 = vpack.c.b16 %v240, %v240
  %v257 = vpack.c.b16 %v241, %v241
  %v258 = vpack.c.b16 %v242, %v242
  %v259 = vpack.c.b16 %v243, %v243
  %v260 = vpack.c.b16 %v244, %v244
  %v261 = vpack.c.b16 %v245, %v245
  %v262 = vpack.c.b16 %v246, %v246
  %v263 = vpack.c.b16 %v247, %v247
  %v264 = vpack.c.b16 %v248, %v248
  %v265 = vpack.c.b16 %v249, %v249
  %v266 = vpack.c.b16 %v250, %v250
  %v267 = vpack.c.b16 %v251, %v251
  %v268 = vpack.c.b16 %v252, %v252
  %v269 = vpack.c.b16 %v253, %v253
  %v270 = vpack.c.b16 %v254, %v254
  %v271 = vpack.c.b16 %v255, %v255
  %288 = vst [vmem:[%s3] sm:$0xf] %v256
  %289 = vst [vmem:[%s3 + $0x4] sm:$0xf] %v257
  %290 = vst [vmem:[%s3 + $0x8] sm:$0xf] %v258
  %291 = vst [vmem:[%s3 + $0xc] sm:$0xf] %v259
  %292 = vst [vmem:[%s3 + $0x10] sm:$0xf] %v260
  %293 = vst [vmem:[%s3 + $0x14] sm:$0xf] %v261
  %294 = vst [vmem:[%s3 + $0x18] sm:$0xf] %v262
  %295 = vst [vmem:[%s3 + $0x1c] sm:$0xf] %v263
  %296 = vst [vmem:[%s3 + $0x20] sm:$0xf] %v264
  %297 = vst [vmem:[%s3 + $0x24] sm:$0xf] %v265
  %298 = vst [vmem:[%s3 + $0x28] sm:$0xf] %v266
  %299 = vst [vmem:[%s3 + $0x2c] sm:$0xf] %v267
  %300 = vst [vmem:[%s3 + $0x30] sm:$0xf] %v268
  %301 = vst [vmem:[%s3 + $0x34] sm:$0xf] %v269
  %302 = vst [vmem:[%s3 + $0x38] sm:$0xf] %v270
  %303 = vst [vmem:[%s3 + $0x3c] sm:$0xf] %v271
  // Predicated region
  $region14: #{model_forward.12} parent=0 // pred_check
    _
  $region15: #{model_forward.12} parent=0 // pred_check_branch
    %305 = sbr.rel (0) target = $region17
  $region16: #{model_forward.12} parent=0 // pred_region
    _
  $region17: #{model_forward.12} parent=0 // pred_fallthru
    _
  // Predicated region
  $region18: #{model_forward.12} parent=0 // pred_check
    _
  $region19: #{model_forward.12} parent=0 // pred_check_branch
    %307 = sbr.rel (0) target = $region21
  $region20: #{model_forward.12} parent=0 // pred_region
    _
  $region21: #{model_forward.12} parent=0 // pred_fallthru
    _

// kernel: model_forward.13
$region0: #{model_forward.13}
  #allocation0 [shape = 'u32[]', space=smem, size = 0x4, offset = 0x4, fixed_abs, tag = 'smem constant byte address 0x4 - core index']
  #allocation1 [shape = 'u32[144,128]{1,0:T(1,128)}', space=vmem, size = 0x12000, scoped, tag = 'internal scratch']
  %s0 = inlined_call_operand.vmem [shape: bf16[32,256], index: 0, kind: input, shape index: {}]
  %s1 = inlined_call_operand.vmem [shape: bf16[256,128], index: 1, kind: input, shape index: {}]
  %s2 = inlined_call_operand.vmem [shape: f32[1,128], index: 2, kind: input, shape index: {}]
  %s3 = inlined_call_operand.vmem [shape: bf16[32,128], index: 3, kind: output, shape index: {}]
  %s4 = sld [smem:[#allocation0]]
  $region22: #{model_forward.13} parent=0
    _
  %s6 = ssub.s32 1, %s4
  %s7 = scalar_select 0, %s6, %s4
  // Predicated region
  $region2: #{model_forward.13} parent=0 // pred_check
    _
  $region3: #{model_forward.13} parent=0 // pred_check_branch
    %9 = sbr.rel (0) target = $region5
  $region4: #{model_forward.13} parent=0 // pred_region
    _
  $region5: #{model_forward.13} parent=0 // pred_fallthru
    _
  // Predicated region
  $region6: #{model_forward.13} parent=0 // pred_check
    _
  $region7: #{model_forward.13} parent=0 // pred_check_branch
    %11 = sbr.rel (0) target = $region9
  $region8: #{model_forward.13} parent=0 // pred_region
    _
  $region9: #{model_forward.13} parent=0 // pred_fallthru
    _
  // Predicated region
  $region10: #{model_forward.13} parent=0 // pred_check
    _
  $region11: #{model_forward.13} parent=0 // pred_check_branch
    %13 = sbr.rel (0) target = $region13
  $region12: #{model_forward.13} parent=0 // pred_region
    _
  $region13: #{model_forward.13} parent=0 // pred_fallthru
    _
  %v15 = vld [vmem:[%s0] sm:$0xff]
  %v16 = vld [vmem:[%s0 + $0x8] sm:$0xff]
  %v17 = vld [vmem:[%s0 + $0x10] sm:$0xff]
  %v18 = vld [vmem:[%s0 + $0x18] sm:$0xff]
  %v19 = vld [vmem:[%s1] sm:$0xf]
  %v20 = vld [vmem:[%s1 + $0x4] sm:$0xf]
  %v21 = vld [vmem:[%s1 + $0x8] sm:$0xf]
  %v22 = vld [vmem:[%s1 + $0xc] sm:$0xf]
  %v23 = vld [vmem:[%s1 + $0x10] sm:$0xf]
  %v24 = vld [vmem:[%s1 + $0x14] sm:$0xf]
  %v25 = vld [vmem:[%s1 + $0x18] sm:$0xf]
  %v26 = vld [vmem:[%s1 + $0x1c] sm:$0xf]
  %v27 = vld [vmem:[%s1 + $0x20] sm:$0xf]
  %v28 = vld [vmem:[%s1 + $0x24] sm:$0xf]
  %v29 = vld [vmem:[%s1 + $0x28] sm:$0xf]
  %v30 = vld [vmem:[%s1 + $0x2c] sm:$0xf]
  %v31 = vld [vmem:[%s1 + $0x30] sm:$0xf]
  %v32 = vld [vmem:[%s1 + $0x34] sm:$0xf]
  %v33 = vld [vmem:[%s1 + $0x38] sm:$0xf]
  %v34 = vld [vmem:[%s1 + $0x3c] sm:$0xf]
  %v35 = vld [vmem:[%s1 + $0x40] sm:$0xf]
  %v36 = vld [vmem:[%s1 + $0x44] sm:$0xf]
  %v37 = vld [vmem:[%s1 + $0x48] sm:$0xf]
  %v38 = vld [vmem:[%s1 + $0x4c] sm:$0xf]
  %v39 = vld [vmem:[%s1 + $0x50] sm:$0xf]
  %v40 = vld [vmem:[%s1 + $0x54] sm:$0xf]
  %v41 = vld [vmem:[%s1 + $0x58] sm:$0xf]
  %v42 = vld [vmem:[%s1 + $0x5c] sm:$0xf]
  %v43 = vld [vmem:[%s1 + $0x60] sm:$0xf]
  %v44 = vld [vmem:[%s1 + $0x64] sm:$0xf]
  %v45 = vld [vmem:[%s1 + $0x68] sm:$0xf]
  %v46 = vld [vmem:[%s1 + $0x6c] sm:$0xf]
  %v47 = vld [vmem:[%s1 + $0x70] sm:$0xf]
  %v48 = vld [vmem:[%s1 + $0x74] sm:$0xf]
  %v49 = vld [vmem:[%s1 + $0x78] sm:$0xf]
  %v50 = vld [vmem:[%s1 + $0x7c] sm:$0xf]
  %v51 = vld [vmem:[%s2] sm:$0x1]
  %v53 = vlaneseq
  %v54 = vshrl.u32 %v53, 7
  %v55 = vsub.s32 0, %v54
  %v56 = vrot.slane %v51, %v55
  %v62 = vunpack.c.l.b16 %v15
  %v63 = vunpack.c.h.b16 %v15
  %v64 = vunpack.c.l.b16 %v16
  %v65 = vunpack.c.h.b16 %v16
  %v66 = vunpack.c.l.b16 %v17
  %v67 = vunpack.c.h.b16 %v17
  %v68 = vunpack.c.l.b16 %v18
  %v69 = vunpack.c.h.b16 %v18
  %v70 = vpack.c.b16 %v64, %v62
  %v71 = vpack.c.b16 %v65, %v63
  %v72 = vpack.c.b16 %v68, %v66
  %v73 = vpack.c.b16 %v69, %v67
  %v110 = vunpack.c.l.b16 %v19
  %v111 = vunpack.c.l.b16 %v20
  %v112 = vunpack.c.l.b16 %v21
  %v113 = vunpack.c.l.b16 %v22
  %v114 = vunpack.c.l.b16 %v23
  %v115 = vunpack.c.l.b16 %v24
  %v116 = vunpack.c.l.b16 %v25
  %v117 = vunpack.c.l.b16 %v26
  %v118 = vunpack.c.l.b16 %v27
  %v119 = vunpack.c.l.b16 %v28
  %v120 = vunpack.c.l.b16 %v29
  %v121 = vunpack.c.l.b16 %v30
  %v122 = vunpack.c.l.b16 %v31
  %v123 = vunpack.c.l.b16 %v32
  %v124 = vunpack.c.l.b16 %v33
  %v125 = vunpack.c.l.b16 %v34
  %v126 = vunpack.c.l.b16 %v35
  %v127 = vunpack.c.l.b16 %v36
  %v128 = vunpack.c.l.b16 %v37
  %v129 = vunpack.c.l.b16 %v38
  %v130 = vunpack.c.l.b16 %v39
  %v131 = vunpack.c.l.b16 %v40
  %v132 = vunpack.c.l.b16 %v41
  %v133 = vunpack.c.l.b16 %v42
  %v134 = vunpack.c.l.b16 %v43
  %v135 = vunpack.c.l.b16 %v44
  %v136 = vunpack.c.l.b16 %v45
  %v137 = vunpack.c.l.b16 %v46
  %v138 = vunpack.c.l.b16 %v47
  %v139 = vunpack.c.l.b16 %v48
  %v140 = vunpack.c.l.b16 %v49
  %v141 = vunpack.c.l.b16 %v50
  %v142 = vpack.c.b16 %v111, %v110
  %v143 = vpack.c.b16 %v113, %v112
  %v144 = vpack.c.b16 %v115, %v114
  %v145 = vpack.c.b16 %v117, %v116
  %v146 = vpack.c.b16 %v119, %v118
  %v147 = vpack.c.b16 %v121, %v120
  %v148 = vpack.c.b16 %v123, %v122
  %v149 = vpack.c.b16 %v125, %v124
  %v150 = vpack.c.b16 %v127, %v126
  %v151 = vpack.c.b16 %v129, %v128
  %v152 = vpack.c.b16 %v131, %v130
  %v153 = vpack.c.b16 %v133, %v132
  %v154 = vpack.c.b16 %v135, %v134
  %v155 = vpack.c.b16 %v137, %v136
  %v156 = vpack.c.b16 %v139, %v138
  %v157 = vpack.c.b16 %v141, %v140
  %174 = vmatprep.subr.bf16.mxu0 0
  %175 = vmatpush1.bf16.msra.mxu0 %v149
  %176 = vmatprep.subr.bf16.mxu0 0
  %177 = vmatpush1.bf16.msra.mxu0 %v148
  %178 = vmatprep.subr.bf16.mxu0 0
  %179 = vmatpush1.bf16.msra.mxu0 %v147
  %180 = vmatprep.subr.bf16.mxu0 0
  %181 = vmatpush1.bf16.msra.mxu0 %v146
  %182 = vmatprep.subr.bf16.mxu0 0
  %183 = vmatpush1.bf16.msra.mxu0 %v145
  %184 = vmatprep.subr.bf16.mxu0 0
  %185 = vmatpush1.bf16.msra.mxu0 %v144
  %186 = vmatprep.subr.bf16.mxu0 0
  %187 = vmatpush1.bf16.msra.mxu0 %v143
  %188 = vmatprep.subr.bf16.mxu0 0
  %189 = vmatpush1.bf16.msra.mxu0 %v142
  %190 = vmatprep.subr.bf16.mxu0 0
  %191 = vmatpush2.bf16.msra.mxu0 %v157
  %192 = vmatprep.subr.bf16.mxu0 0
  %193 = vmatpush2.bf16.msra.mxu0 %v156
  %194 = vmatprep.subr.bf16.mxu0 0
  %195 = vmatpush2.bf16.msra.mxu0 %v155
  %196 = vmatprep.subr.bf16.mxu0 0
  %197 = vmatpush2.bf16.msra.mxu0 %v154
  %198 = vmatprep.subr.bf16.mxu0 0
  %199 = vmatpush2.bf16.msra.mxu0 %v153
  %200 = vmatprep.subr.bf16.mxu0 0
  %201 = vmatpush2.bf16.msra.mxu0 %v152
  %202 = vmatprep.subr.bf16.mxu0 0
  %203 = vmatpush2.bf16.msra.mxu0 %v151
  %204 = vmatprep.subr.bf16.mxu0 0
  %205 = vmatpush2.bf16.msra.mxu0 %v150
  %206 = vmatprep.mubr.bf16.mxu0 %v71
  %207 = vmatmul.mubr.bf16.gmra.mxu0 %v70
  %v208 = vpop.f32.mrf.mxu0
  %v209 = vadd.f32 %v56, %v208
  %v210 = vpop.f32.mrf.mxu0
  %v211 = vpop.f32.mrf.mxu0
  %v212 = vadd.f32 %v56, %v211
  %v213 = vpop.f32.mrf.mxu0
  %214 = vmatprep.mubr.bf16.mxu0 %v73
  %215 = vmatmul.mubr.bf16.gmra.mxu0 %v72
  %v216 = vpop.f32.mrf.mxu0
  %v217 = vadd.f32 %v56, %v216
  %v218 = vpop.f32.mrf.mxu0
  %v219 = vpop.f32.mrf.mxu0
  %v220 = vadd.f32 %v56, %v219
  %v221 = vpop.f32.mrf.mxu0
  %222 = vdwg.mxu0
  %v223 = vmax.f32 %v209, 0.0
  %v224 = vmax.f32 %v212, 0.0
  %v225 = vmax.f32 %v217, 0.0
  %v226 = vmax.f32 %v220, 0.0
  %v227 = vpack.c.bf16 %v224, %v223
  %v228 = vpack.c.bf16 %v226, %v225
  %v231 = vunpack.c.l.b16 %v227
  %v232 = vunpack.c.h.b16 %v227
  %v233 = vunpack.c.l.b16 %v228
  %v234 = vunpack.c.h.b16 %v228
  %v235 = vpack.c.b16 %v231, %v231
  %v236 = vpack.c.b16 %v232, %v232
  %v237 = vpack.c.b16 %v233, %v233
  %v238 = vpack.c.b16 %v234, %v234
  %243 = vst [vmem:[%s3] sm:$0xf] %v235
  %244 = vst [vmem:[%s3 + $0x4] sm:$0xf] %v236
  %245 = vst [vmem:[%s3 + $0x8] sm:$0xf] %v237
  %246 = vst [vmem:[%s3 + $0xc] sm:$0xf] %v238
  // Predicated region
  $region14: #{model_forward.13} parent=0 // pred_check
    _
  $region15: #{model_forward.13} parent=0 // pred_check_branch
    %248 = sbr.rel (0) target = $region17
  $region16: #{model_forward.13} parent=0 // pred_region
    _
  $region17: #{model_forward.13} parent=0 // pred_fallthru
    _
  // Predicated region
  $region18: #{model_forward.13} parent=0 // pred_check
    _
  $region19: #{model_forward.13} parent=0 // pred_check_branch
    %250 = sbr.rel (0) target = $region21
  $region20: #{model_forward.13} parent=0 // pred_region
    _
  $region21: #{model_forward.13} parent=0 // pred_fallthru
    _

// kernel: model_forward.14
$region0: #{model_forward.14}
  #allocation0 [shape = 'u32[]', space=smem, size = 0x4, offset = 0x4, fixed_abs, tag = 'smem constant byte address 0x4 - core index']
  #allocation1 [shape = 'u32[144,128]{1,0:T(1,128)}', space=vmem, size = 0x12000, scoped, tag = 'internal scratch']
  %s0 = inlined_call_operand.vmem [shape: bf16[32,288], index: 0, kind: input, shape index: {}]
  %s1 = inlined_call_operand.vmem [shape: bf16[288,128], index: 1, kind: input, shape index: {}]
  %s2 = inlined_call_operand.vmem [shape: f32[1,128], index: 2, kind: input, shape index: {}]
  %s3 = inlined_call_operand.vmem [shape: bf16[32,128], index: 3, kind: output, shape index: {}]
  %s4 = sld [smem:[#allocation0]]
  $region22: #{model_forward.14} parent=0
    _
  %s6 = ssub.s32 1, %s4
  %s7 = scalar_select 0, %s6, %s4
  // Predicated region
  $region2: #{model_forward.14} parent=0 // pred_check
    _
  $region3: #{model_forward.14} parent=0 // pred_check_branch
    %9 = sbr.rel (0) target = $region5
  $region4: #{model_forward.14} parent=0 // pred_region
    _
  $region5: #{model_forward.14} parent=0 // pred_fallthru
    _
  // Predicated region
  $region6: #{model_forward.14} parent=0 // pred_check
    _
  $region7: #{model_forward.14} parent=0 // pred_check_branch
    %11 = sbr.rel (0) target = $region9
  $region8: #{model_forward.14} parent=0 // pred_region
    _
  $region9: #{model_forward.14} parent=0 // pred_fallthru
    _
  // Predicated region
  $region10: #{model_forward.14} parent=0 // pred_check
    _
  $region11: #{model_forward.14} parent=0 // pred_check_branch
    %13 = sbr.rel (0) target = $region13
  $region12: #{model_forward.14} parent=0 // pred_region
    _
  $region13: #{model_forward.14} parent=0 // pred_fallthru
    _
  %v15 = vld [vmem:[%s0] sm:$0xff]
  %v16 = vld [vmem:[%s0 + $0x8] sm:$0xf]
  %v17 = vld [vmem:[%s0 + $0xc] sm:$0xff]
  %v18 = vld [vmem:[%s0 + $0x14] sm:$0xf]
  %v19 = vld [vmem:[%s0 + $0x18] sm:$0xff]
  %v20 = vld [vmem:[%s0 + $0x20] sm:$0xf]
  %v21 = vld [vmem:[%s0 + $0x24] sm:$0xff]
  %v22 = vld [vmem:[%s0 + $0x2c] sm:$0xf]
  %v23 = vld [vmem:[%s1] sm:$0xf]
  %v24 = vld [vmem:[%s1 + $0x4] sm:$0xf]
  %v25 = vld [vmem:[%s1 + $0x8] sm:$0xf]
  %v26 = vld [vmem:[%s1 + $0xc] sm:$0xf]
  %v27 = vld [vmem:[%s1 + $0x10] sm:$0xf]
  %v28 = vld [vmem:[%s1 + $0x14] sm:$0xf]
  %v29 = vld [vmem:[%s1 + $0x18] sm:$0xf]
  %v30 = vld [vmem:[%s1 + $0x1c] sm:$0xf]
  %v31 = vld [vmem:[%s1 + $0x20] sm:$0xf]
  %v32 = vld [vmem:[%s1 + $0x24] sm:$0xf]
  %v33 = vld [vmem:[%s1 + $0x28] sm:$0xf]
  %v34 = vld [vmem:[%s1 + $0x2c] sm:$0xf]
  %v35 = vld [vmem:[%s1 + $0x30] sm:$0xf]
  %v36 = vld [vmem:[%s1 + $0x34] sm:$0xf]
  %v37 = vld [vmem:[%s1 + $0x38] sm:$0xf]
  %v38 = vld [vmem:[%s1 + $0x3c] sm:$0xf]
  %v39 = vld [vmem:[%s1 + $0x40] sm:$0xf]
  %v40 = vld [vmem:[%s1 + $0x44] sm:$0xf]
  %v41 = vld [vmem:[%s1 + $0x48] sm:$0xf]
  %v42 = vld [vmem:[%s1 + $0x4c] sm:$0xf]
  %v43 = vld [vmem:[%s1 + $0x50] sm:$0xf]
  %v44 = vld [vmem:[%s1 + $0x54] sm:$0xf]
  %v45 = vld [vmem:[%s1 + $0x58] sm:$0xf]
  %v46 = vld [vmem:[%s1 + $0x5c] sm:$0xf]
  %v47 = vld [vmem:[%s1 + $0x60] sm:$0xf]
  %v48 = vld [vmem:[%s1 + $0x64] sm:$0xf]
  %v49 = vld [vmem:[%s1 + $0x68] sm:$0xf]
  %v50 = vld [vmem:[%s1 + $0x6c] sm:$0xf]
  %v51 = vld [vmem:[%s1 + $0x70] sm:$0xf]
  %v52 = vld [vmem:[%s1 + $0x74] sm:$0xf]
  %v53 = vld [vmem:[%s1 + $0x78] sm:$0xf]
  %v54 = vld [vmem:[%s1 + $0x7c] sm:$0xf]
  %v55 = vld [vmem:[%s1 + $0x80] sm:$0xf]
  %v56 = vld [vmem:[%s1 + $0x84] sm:$0xf]
  %v57 = vld [vmem:[%s1 + $0x88] sm:$0xf]
  %v58 = vld [vmem:[%s1 + $0x8c] sm:$0xf]
  %v59 = vld [vmem:[%s2] sm:$0x1]
  %v61 = vlaneseq
  %v62 = vshrl.u32 %v61, 7
  %v63 = vsub.s32 0, %v62
  %v64 = vrot.slane %v59, %v63
  %v74 = vunpack.c.l.b16 %v15
  %v75 = vunpack.c.h.b16 %v15
  %v76 = vunpack.c.l.b16 %v16
  %v77 = vunpack.c.l.b16 %v17
  %v78 = vunpack.c.h.b16 %v17
  %v79 = vunpack.c.l.b16 %v18
  %v80 = vunpack.c.l.b16 %v19
  %v81 = vunpack.c.h.b16 %v19
  %v82 = vunpack.c.l.b16 %v20
  %v83 = vunpack.c.l.b16 %v21
  %v84 = vunpack.c.h.b16 %v21
  %v85 = vunpack.c.l.b16 %v22
  %v86 = vpack.c.b16 %v77, %v74
  %v87 = vpack.c.b16 %v78, %v75
  %v88 = vpack.c.b16 %v79, %v76
  %v89 = vpack.c.b16 %v83, %v80
  %v90 = vpack.c.b16 %v84, %v81
  %v91 = vpack.c.b16 %v85, %v82
  %v132 = vunpack.c.l.b16 %v23
  %v133 = vunpack.c.l.b16 %v24
  %v134 = vunpack.c.l.b16 %v25
  %v135 = vunpack.c.l.b16 %v26
  %v136 = vunpack.c.l.b16 %v27
  %v137 = vunpack.c.l.b16 %v28
  %v138 = vunpack.c.l.b16 %v29
  %v139 = vunpack.c.l.b16 %v30
  %v140 = vunpack.c.l.b16 %v31
  %v141 = vunpack.c.l.b16 %v32
  %v142 = vunpack.c.l.b16 %v33
  %v143 = vunpack.c.l.b16 %v34
  %v144 = vunpack.c.l.b16 %v35
  %v145 = vunpack.c.l.b16 %v36
  %v146 = vunpack.c.l.b16 %v37
  %v147 = vunpack.c.l.b16 %v38
  %v148 = vunpack.c.l.b16 %v39
  %v149 = vunpack.c.l.b16 %v40
  %v150 = vunpack.c.l.b16 %v41
  %v151 = vunpack.c.l.b16 %v42
  %v152 = vunpack.c.l.b16 %v43
  %v153 = vunpack.c.l.b16 %v44
  %v154 = vunpack.c.l.b16 %v45
  %v155 = vunpack.c.l.b16 %v46
  %v156 = vunpack.c.l.b16 %v47
  %v157 = vunpack.c.l.b16 %v48
  %v158 = vunpack.c.l.b16 %v49
  %v159 = vunpack.c.l.b16 %v50
  %v160 = vunpack.c.l.b16 %v51
  %v161 = vunpack.c.l.b16 %v52
  %v162 = vunpack.c.l.b16 %v53
  %v163 = vunpack.c.l.b16 %v54
  %v164 = vunpack.c.l.b16 %v55
  %v165 = vunpack.c.l.b16 %v56
  %v166 = vunpack.c.l.b16 %v57
  %v167 = vunpack.c.l.b16 %v58
  %v168 = vpack.c.b16 %v133, %v132
  %v169 = vpack.c.b16 %v135, %v134
  %v170 = vpack.c.b16 %v137, %v136
  %v171 = vpack.c.b16 %v139, %v138
  %v172 = vpack.c.b16 %v141, %v140
  %v173 = vpack.c.b16 %v143, %v142
  %v174 = vpack.c.b16 %v145, %v144
  %v175 = vpack.c.b16 %v147, %v146
  %v176 = vpack.c.b16 %v149, %v148
  %v177 = vpack.c.b16 %v151, %v150
  %v178 = vpack.c.b16 %v153, %v152
  %v179 = vpack.c.b16 %v155, %v154
  %v180 = vpack.c.b16 %v157, %v156
  %v181 = vpack.c.b16 %v159, %v158
  %v182 = vpack.c.b16 %v161, %v160
  %v183 = vpack.c.b16 %v163, %v162
  %v184 = vpack.c.b16 %v165, %v164
  %v185 = vpack.c.b16 %v167, %v166
  %vm204 = vcmask 261120
  %v206 = vsel %vm204, %v88, 0
  %v209 = vsel %vm204, %v91, 0
  %211 = vmatprep.subr.bf16.mxu0 0
  %212 = vmatpush1.bf16.msra.mxu0 %v175
  %213 = vmatprep.subr.bf16.mxu0 0
  %214 = vmatpush1.bf16.msra.mxu0 %v174
  %215 = vmatprep.subr.bf16.mxu0 0
  %216 = vmatpush1.bf16.msra.mxu0 %v173
  %217 = vmatprep.subr.bf16.mxu0 0
  %218 = vmatpush1.bf16.msra.mxu0 %v172
  %219 = vmatprep.subr.bf16.mxu0 0
  %220 = vmatpush1.bf16.msra.mxu0 %v171
  %221 = vmatprep.subr.bf16.mxu0 0
  %222 = vmatpush1.bf16.msra.mxu0 %v170
  %223 = vmatprep.subr.bf16.mxu0 0
  %224 = vmatpush1.bf16.msra.mxu0 %v169
  %225 = vmatprep.subr.bf16.mxu0 0
  %226 = vmatpush1.bf16.msra.mxu0 %v168
  %227 = vmatprep.subr.bf16.mxu0 0
  %228 = vmatpush2.bf16.msra.mxu0 %v183
  %229 = vmatprep.subr.bf16.mxu0 0
  %230 = vmatpush2.bf16.msra.mxu0 %v182
  %231 = vmatprep.subr.bf16.mxu0 0
  %232 = vmatpush2.bf16.msra.mxu0 %v181
  %233 = vmatprep.subr.bf16.mxu0 0
  %234 = vmatpush2.bf16.msra.mxu0 %v180
  %235 = vmatprep.subr.bf16.mxu0 0
  %236 = vmatpush2.bf16.msra.mxu0 %v179
  %237 = vmatprep.subr.bf16.mxu0 0
  %238 = vmatpush2.bf16.msra.mxu0 %v178
  %239 = vmatprep.subr.bf16.mxu0 0
  %240 = vmatpush2.bf16.msra.mxu0 %v177
  %241 = vmatprep.subr.bf16.mxu0 0
  %242 = vmatpush2.bf16.msra.mxu0 %v176
  %243 = vmatprep.mubr.bf16.mxu0 %v87
  %244 = vmatmul.mubr.bf16.gmra.mxu0 %v86
  %v245 = vpop.f32.mrf.mxu0
  %v246 = vadd.f32 %v64, %v245
  %v247 = vpop.f32.mrf.mxu0
  %v248 = vpop.f32.mrf.mxu0
  %v249 = vadd.f32 %v64, %v248
  %v250 = vpop.f32.mrf.mxu0
  %251 = vmatprep.mubr.bf16.mxu0 %v90
  %252 = vmatmul.mubr.bf16.gmra.mxu0 %v89
  %v253 = vpop.f32.mrf.mxu0
  %v254 = vadd.f32 %v64, %v253
  %v255 = vpop.f32.mrf.mxu0
  %v256 = vpop.f32.mrf.mxu0
  %v257 = vadd.f32 %v64, %v256
  %v258 = vpop.f32.mrf.mxu0
  %259 = vdwg.mxu0
  %260 = vmatprep.subr.bf16.mxu0 0
  %261 = vmatpush1.bf16.msra.mxu0 0
  %262 = vmatprep.subr.bf16.mxu0 0
  %263 = vmatpush1.bf16.msra.mxu0 0
  %264 = vmatprep.subr.bf16.mxu0 0
  %265 = vmatpush1.bf16.msra.mxu0 0
  %266 = vmatprep.subr.bf16.mxu0 0
  %267 = vmatpush1.bf16.msra.mxu0 0
  %268 = vmatprep.subr.bf16.mxu0 0
  %269 = vmatpush1.bf16.msra.mxu0 0
  %270 = vmatprep.subr.bf16.mxu0 0
  %271 = vmatpush1.bf16.msra.mxu0 0
  %272 = vmatprep.subr.bf16.mxu0 0
  %273 = vmatpush1.bf16.msra.mxu0 %v185
  %274 = vmatprep.subr.bf16.mxu0 0
  %275 = vmatpush1.bf16.msra.mxu0 %v184
  %276 = vmatprep.subr.bf16.mxu0 0
  %277 = vmatpush2.bf16.msra.mxu0 0
  %278 = vmatprep.subr.bf16.mxu0 0
  %279 = vmatpush2.bf16.msra.mxu0 0
  %280 = vmatprep.subr.bf16.mxu0 0
  %281 = vmatpush2.bf16.msra.mxu0 0
  %282 = vmatprep.subr.bf16.mxu0 0
  %283 = vmatpush2.bf16.msra.mxu0 0
  %284 = vmatprep.subr.bf16.mxu0 0
  %285 = vmatpush2.bf16.msra.mxu0 0
  %286 = vmatprep.subr.bf16.mxu0 0
  %287 = vmatpush2.bf16.msra.mxu0 0
  %288 = vmatprep.subr.bf16.mxu0 0
  %289 = vmatpush2.bf16.msra.mxu0 0
  %290 = vmatprep.subr.bf16.mxu0 0
  %291 = vmatpush2.bf16.msra.mxu0 0
  %292 = vmatprep.mubr.bf16.mxu0 0
  %293 = vmatmul.mubr.bf16.gmra.mxu0 %v206
  %v294 = vpop.f32.mrf.mxu0
  %v295 = vadd.f32 %v246, %v294
  %v296 = vpop.f32.mrf.mxu0
  %v297 = vpop.f32.mrf.mxu0
  %v298 = vadd.f32 %v249, %v297
  %v299 = vpop.f32.mrf.mxu0
  %300 = vmatprep.mubr.bf16.mxu0 0
  %301 = vmatmul.mubr.bf16.gmra.mxu0 %v209
  %v302 = vpop.f32.mrf.mxu0
  %v303 = vadd.f32 %v254, %v302
  %v304 = vpop.f32.mrf.mxu0
  %v305 = vpop.f32.mrf.mxu0
  %v306 = vadd.f32 %v257, %v305
  %v307 = vpop.f32.mrf.mxu0
  %308 = vdwg.mxu0
  %v309 = vpack.c.bf16 %v298, %v295
  %v310 = vpack.c.bf16 %v306, %v303
  %v313 = vunpack.c.l.b16 %v309
  %v314 = vunpack.c.h.b16 %v309
  %v315 = vunpack.c.l.b16 %v310
  %v316 = vunpack.c.h.b16 %v310
  %v317 = vpack.c.b16 %v313, %v313
  %v318 = vpack.c.b16 %v314, %v314
  %v319 = vpack.c.b16 %v315, %v315
  %v320 = vpack.c.b16 %v316, %v316
  %325 = vst [vmem:[%s3] sm:$0xf] %v317
  %326 = vst [vmem:[%s3 + $0x4] sm:$0xf] %v318
  %327 = vst [vmem:[%s3 + $0x8] sm:$0xf] %v319
  %328 = vst [vmem:[%s3 + $0xc] sm:$0xf] %v320
  // Predicated region
  $region14: #{model_forward.14} parent=0 // pred_check
    _
  $region15: #{model_forward.14} parent=0 // pred_check_branch
    %330 = sbr.rel (0) target = $region17
  $region16: #{model_forward.14} parent=0 // pred_region
    _
  $region17: #{model_forward.14} parent=0 // pred_fallthru
    _
  // Predicated region
  $region18: #{model_forward.14} parent=0 // pred_check
    _
  $region19: #{model_forward.14} parent=0 // pred_check_branch
    %332 = sbr.rel (0) target = $region21
  $region20: #{model_forward.14} parent=0 // pred_region
    _
  $region21: #{model_forward.14} parent=0 // pred_fallthru
    _

// kernel: model_forward.15
$region0: #{model_forward.15}
  #allocation0 [shape = 'u32[]', space=smem, size = 0x4, offset = 0x4, fixed_abs, tag = 'smem constant byte address 0x4 - core index']
  #allocation1 [shape = 'u32[144,128]{1,0:T(1,128)}', space=vmem, size = 0x12000, scoped, tag = 'internal scratch']
  %s0 = inlined_call_operand.vmem [shape: bf16[32,288], index: 0, kind: input, shape index: {}]
  %s1 = inlined_call_operand.vmem [shape: bf16[32,128], index: 1, kind: input, shape index: {}]
  %s2 = inlined_call_operand.vmem [shape: bf16[288,128], index: 2, kind: input, shape index: {}]
  %s3 = inlined_call_operand.vmem [shape: bf16[128,128], index: 3, kind: input, shape index: {}]
  %s4 = inlined_call_operand.vmem [shape: bf16[32,128], index: 4, kind: output, shape index: {}]
  %s5 = sld [smem:[#allocation0]]
  $region26: #{model_forward.15} parent=0
    _
  %s7 = ssub.s32 1, %s5
  %s8 = scalar_select 0, %s7, %s5
  // Predicated region
  $region2: #{model_forward.15} parent=0 // pred_check
    _
  $region3: #{model_forward.15} parent=0 // pred_check_branch
    %10 = sbr.rel (0) target = $region5
  $region4: #{model_forward.15} parent=0 // pred_region
    _
  $region5: #{model_forward.15} parent=0 // pred_fallthru
    _
  // Predicated region
  $region6: #{model_forward.15} parent=0 // pred_check
    _
  $region7: #{model_forward.15} parent=0 // pred_check_branch
    %12 = sbr.rel (0) target = $region9
  $region8: #{model_forward.15} parent=0 // pred_region
    _
  $region9: #{model_forward.15} parent=0 // pred_fallthru
    _
  // Predicated region
  $region10: #{model_forward.15} parent=0 // pred_check
    _
  $region11: #{model_forward.15} parent=0 // pred_check_branch
    %14 = sbr.rel (0) target = $region13
  $region12: #{model_forward.15} parent=0 // pred_region
    _
  $region13: #{model_forward.15} parent=0 // pred_fallthru
    _
  // Predicated region
  $region14: #{model_forward.15} parent=0 // pred_check
    _
  $region15: #{model_forward.15} parent=0 // pred_check_branch
    %16 = sbr.rel (0) target = $region17
  $region16: #{model_forward.15} parent=0 // pred_region
    _
  $region17: #{model_forward.15} parent=0 // pred_fallthru
    _
  %v18 = vld [vmem:[%s0] sm:$0xff]
  %v19 = vld [vmem:[%s0 + $0x8] sm:$0xf]
  %v20 = vld [vmem:[%s0 + $0xc] sm:$0xff]
  %v21 = vld [vmem:[%s0 + $0x14] sm:$0xf]
  %v22 = vld [vmem:[%s0 + $0x18] sm:$0xff]
  %v23 = vld [vmem:[%s0 + $0x20] sm:$0xf]
  %v24 = vld [vmem:[%s0 + $0x24] sm:$0xff]
  %v25 = vld [vmem:[%s0 + $0x2c] sm:$0xf]
  %v26 = vld [vmem:[%s2] sm:$0xf]
  %v27 = vld [vmem:[%s2 + $0x4] sm:$0xf]
  %v28 = vld [vmem:[%s2 + $0x8] sm:$0xf]
  %v29 = vld [vmem:[%s2 + $0xc] sm:$0xf]
  %v30 = vld [vmem:[%s2 + $0x10] sm:$0xf]
  %v31 = vld [vmem:[%s2 + $0x14] sm:$0xf]
  %v32 = vld [vmem:[%s2 + $0x18] sm:$0xf]
  %v33 = vld [vmem:[%s2 + $0x1c] sm:$0xf]
  %v34 = vld [vmem:[%s2 + $0x20] sm:$0xf]
  %v35 = vld [vmem:[%s2 + $0x24] sm:$0xf]
  %v36 = vld [vmem:[%s2 + $0x28] sm:$0xf]
  %v37 = vld [vmem:[%s2 + $0x2c] sm:$0xf]
  %v38 = vld [vmem:[%s2 + $0x30] sm:$0xf]
  %v39 = vld [vmem:[%s2 + $0x34] sm:$0xf]
  %v40 = vld [vmem:[%s2 + $0x38] sm:$0xf]
  %v41 = vld [vmem:[%s2 + $0x3c] sm:$0xf]
  %v42 = vld [vmem:[%s2 + $0x40] sm:$0xf]
  %v43 = vld [vmem:[%s2 + $0x44] sm:$0xf]
  %v44 = vld [vmem:[%s2 + $0x48] sm:$0xf]
  %v45 = vld [vmem:[%s2 + $0x4c] sm:$0xf]
  %v46 = vld [vmem:[%s2 + $0x50] sm:$0xf]
  %v47 = vld [vmem:[%s2 + $0x54] sm:$0xf]
  %v48 = vld [vmem:[%s2 + $0x58] sm:$0xf]
  %v49 = vld [vmem:[%s2 + $0x5c] sm:$0xf]
  %v50 = vld [vmem:[%s2 + $0x60] sm:$0xf]
  %v51 = vld [vmem:[%s2 + $0x64] sm:$0xf]
  %v52 = vld [vmem:[%s2 + $0x68] sm:$0xf]
  %v53 = vld [vmem:[%s2 + $0x6c] sm:$0xf]
  %v54 = vld [vmem:[%s2 + $0x70] sm:$0xf]
  %v55 = vld [vmem:[%s2 + $0x74] sm:$0xf]
  %v56 = vld [vmem:[%s2 + $0x78] sm:$0xf]
  %v57 = vld [vmem:[%s2 + $0x7c] sm:$0xf]
  %v58 = vld [vmem:[%s2 + $0x80] sm:$0xf]
  %v59 = vld [vmem:[%s2 + $0x84] sm:$0xf]
  %v60 = vld [vmem:[%s2 + $0x88] sm:$0xf]
  %v61 = vld [vmem:[%s2 + $0x8c] sm:$0xf]
  %v70 = vunpack.c.l.b16 %v18
  %v71 = vunpack.c.h.b16 %v18
  %v72 = vunpack.c.l.b16 %v19
  %v73 = vunpack.c.l.b16 %v20
  %v74 = vunpack.c.h.b16 %v20
  %v75 = vunpack.c.l.b16 %v21
  %v76 = vunpack.c.l.b16 %v22
  %v77 = vunpack.c.h.b16 %v22
  %v78 = vunpack.c.l.b16 %v23
  %v79 = vunpack.c.l.b16 %v24
  %v80 = vunpack.c.h.b16 %v24
  %v81 = vunpack.c.l.b16 %v25
  %v82 = vpack.c.b16 %v73, %v70
  %v83 = vpack.c.b16 %v74, %v71
  %v84 = vpack.c.b16 %v75, %v72
  %v85 = vpack.c.b16 %v79, %v76
  %v86 = vpack.c.b16 %v80, %v77
  %v87 = vpack.c.b16 %v81, %v78
  %v128 = vunpack.c.l.b16 %v26
  %v129 = vunpack.c.l.b16 %v27
  %v130 = vunpack.c.l.b16 %v28
  %v131 = vunpack.c.l.b16 %v29
  %v132 = vunpack.c.l.b16 %v30
  %v133 = vunpack.c.l.b16 %v31
  %v134 = vunpack.c.l.b16 %v32
  %v135 = vunpack.c.l.b16 %v33
  %v136 = vunpack.c.l.b16 %v34
  %v137 = vunpack.c.l.b16 %v35
  %v138 = vunpack.c.l.b16 %v36
  %v139 = vunpack.c.l.b16 %v37
  %v140 = vunpack.c.l.b16 %v38
  %v141 = vunpack.c.l.b16 %v39
  %v142 = vunpack.c.l.b16 %v40
  %v143 = vunpack.c.l.b16 %v41
  %v144 = vunpack.c.l.b16 %v42
  %v145 = vunpack.c.l.b16 %v43
  %v146 = vunpack.c.l.b16 %v44
  %v147 = vunpack.c.l.b16 %v45
  %v148 = vunpack.c.l.b16 %v46
  %v149 = vunpack.c.l.b16 %v47
  %v150 = vunpack.c.l.b16 %v48
  %v151 = vunpack.c.l.b16 %v49
  %v152 = vunpack.c.l.b16 %v50
  %v153 = vunpack.c.l.b16 %v51
  %v154 = vunpack.c.l.b16 %v52
  %v155 = vunpack.c.l.b16 %v53
  %v156 = vunpack.c.l.b16 %v54
  %v157 = vunpack.c.l.b16 %v55
  %v158 = vunpack.c.l.b16 %v56
  %v159 = vunpack.c.l.b16 %v57
  %v160 = vunpack.c.l.b16 %v58
  %v161 = vunpack.c.l.b16 %v59
  %v162 = vunpack.c.l.b16 %v60
  %v163 = vunpack.c.l.b16 %v61
  %v164 = vpack.c.b16 %v129, %v128
  %v165 = vpack.c.b16 %v131, %v130
  %v166 = vpack.c.b16 %v133, %v132
  %v167 = vpack.c.b16 %v135, %v134
  %v168 = vpack.c.b16 %v137, %v136
  %v169 = vpack.c.b16 %v139, %v138
  %v170 = vpack.c.b16 %v141, %v140
  %v171 = vpack.c.b16 %v143, %v142
  %v172 = vpack.c.b16 %v145, %v144
  %v173 = vpack.c.b16 %v147, %v146
  %v174 = vpack.c.b16 %v149, %v148
  %v175 = vpack.c.b16 %v151, %v150
  %v176 = vpack.c.b16 %v153, %v152
  %v177 = vpack.c.b16 %v155, %v154
  %v178 = vpack.c.b16 %v157, %v156
  %v179 = vpack.c.b16 %v159, %v158
  %v180 = vpack.c.b16 %v161, %v160
  %v181 = vpack.c.b16 %v163, %v162
  %vm200 = vcmask 261120
  %v202 = vsel %vm200, %v84, 0
  %v205 = vsel %vm200, %v87, 0
  %207 = vmatprep.subr.bf16.mxu0 0
  %208 = vmatpush1.bf16.msra.mxu0 %v171
  %209 = vmatprep.subr.bf16.mxu0 0
  %210 = vmatpush1.bf16.msra.mxu0 %v170
  %211 = vmatprep.subr.bf16.mxu0 0
  %212 = vmatpush1.bf16.msra.mxu0 %v169
  %213 = vmatprep.subr.bf16.mxu0 0
  %214 = vmatpush1.bf16.msra.mxu0 %v168
  %215 = vmatprep.subr.bf16.mxu0 0
  %216 = vmatpush1.bf16.msra.mxu0 %v167
  %217 = vmatprep.subr.bf16.mxu0 0
  %218 = vmatpush1.bf16.msra.mxu0 %v166
  %219 = vmatprep.subr.bf16.mxu0 0
  %220 = vmatpush1.bf16.msra.mxu0 %v165
  %221 = vmatprep.subr.bf16.mxu0 0
  %222 = vmatpush1.bf16.msra.mxu0 %v164
  %223 = vmatprep.subr.bf16.mxu0 0
  %224 = vmatpush2.bf16.msra.mxu0 %v179
  %225 = vmatprep.subr.bf16.mxu0 0
  %226 = vmatpush2.bf16.msra.mxu0 %v178
  %227 = vmatprep.subr.bf16.mxu0 0
  %228 = vmatpush2.bf16.msra.mxu0 %v177
  %229 = vmatprep.subr.bf16.mxu0 0
  %230 = vmatpush2.bf16.msra.mxu0 %v176
  %231 = vmatprep.subr.bf16.mxu0 0
  %232 = vmatpush2.bf16.msra.mxu0 %v175
  %233 = vmatprep.subr.bf16.mxu0 0
  %234 = vmatpush2.bf16.msra.mxu0 %v174
  %235 = vmatprep.subr.bf16.mxu0 0
  %236 = vmatpush2.bf16.msra.mxu0 %v173
  %237 = vmatprep.subr.bf16.mxu0 0
  %238 = vmatpush2.bf16.msra.mxu0 %v172
  %239 = vmatprep.mubr.bf16.mxu0 %v83
  %240 = vmatmul.mubr.bf16.gmra.mxu0 %v82
  %v241 = vpop.f32.mrf.mxu0
  %v242 = vadd.f32 0.0, %v241
  %v243 = vpop.f32.mrf.mxu0
  %v244 = vpop.f32.mrf.mxu0
  %v245 = vadd.f32 0.0, %v244
  %v246 = vpop.f32.mrf.mxu0
  %247 = vmatprep.mubr.bf16.mxu0 %v86
  %248 = vmatmul.mubr.bf16.gmra.mxu0 %v85
  %v249 = vpop.f32.mrf.mxu0
  %v250 = vadd.f32 0.0, %v249
  %v251 = vpop.f32.mrf.mxu0
  %v252 = vpop.f32.mrf.mxu0
  %v253 = vadd.f32 0.0, %v252
  %v254 = vpop.f32.mrf.mxu0
  %255 = vdwg.mxu0
  %256 = vmatprep.subr.bf16.mxu0 0
  %257 = vmatpush1.bf16.msra.mxu0 0
  %258 = vmatprep.subr.bf16.mxu0 0
  %259 = vmatpush1.bf16.msra.mxu0 0
  %260 = vmatprep.subr.bf16.mxu0 0
  %261 = vmatpush1.bf16.msra.mxu0 0
  %262 = vmatprep.subr.bf16.mxu0 0
  %263 = vmatpush1.bf16.msra.mxu0 0
  %264 = vmatprep.subr.bf16.mxu0 0
  %265 = vmatpush1.bf16.msra.mxu0 0
  %266 = vmatprep.subr.bf16.mxu0 0
  %267 = vmatpush1.bf16.msra.mxu0 0
  %268 = vmatprep.subr.bf16.mxu0 0
  %269 = vmatpush1.bf16.msra.mxu0 %v181
  %270 = vmatprep.subr.bf16.mxu0 0
  %271 = vmatpush1.bf16.msra.mxu0 %v180
  %272 = vmatprep.subr.bf16.mxu0 0
  %273 = vmatpush2.bf16.msra.mxu0 0
  %274 = vmatprep.subr.bf16.mxu0 0
  %275 = vmatpush2.bf16.msra.mxu0 0
  %276 = vmatprep.subr.bf16.mxu0 0
  %277 = vmatpush2.bf16.msra.mxu0 0
  %278 = vmatprep.subr.bf16.mxu0 0
  %279 = vmatpush2.bf16.msra.mxu0 0
  %280 = vmatprep.subr.bf16.mxu0 0
  %281 = vmatpush2.bf16.msra.mxu0 0
  %282 = vmatprep.subr.bf16.mxu0 0
  %283 = vmatpush2.bf16.msra.mxu0 0
  %284 = vmatprep.subr.bf16.mxu0 0
  %285 = vmatpush2.bf16.msra.mxu0 0
  %286 = vmatprep.subr.bf16.mxu0 0
  %287 = vmatpush2.bf16.msra.mxu0 0
  %288 = vmatprep.mubr.bf16.mxu0 0
  %289 = vmatmul.mubr.bf16.gmra.mxu0 %v202
  %v290 = vpop.f32.mrf.mxu0
  %v291 = vadd.f32 %v242, %v290
  %v292 = vpop.f32.mrf.mxu0
  %v293 = vpop.f32.mrf.mxu0
  %v294 = vadd.f32 %v245, %v293
  %v295 = vpop.f32.mrf.mxu0
  %296 = vmatprep.mubr.bf16.mxu0 0
  %297 = vmatmul.mubr.bf16.gmra.mxu0 %v205
  %v298 = vpop.f32.mrf.mxu0
  %v299 = vadd.f32 %v250, %v298
  %v300 = vpop.f32.mrf.mxu0
  %v301 = vpop.f32.mrf.mxu0
  %v302 = vadd.f32 %v253, %v301
  %v303 = vpop.f32.mrf.mxu0
  %304 = vdwg.mxu0
  %v305 = vmax.f32 %v291, 0.0
  %v306 = vmax.f32 %v294, 0.0
  %v307 = vmax.f32 %v299, 0.0
  %v308 = vmax.f32 %v302, 0.0
  %v309 = vpack.c.bf16 %v306, %v305
  %v310 = vpack.c.bf16 %v308, %v307
  %v311 = vld [vmem:[%s3] sm:$0xf]
  %v312 = vld [vmem:[%s3 + $0x4] sm:$0xf]
  %v313 = vld [vmem:[%s3 + $0x8] sm:$0xf]
  %v314 = vld [vmem:[%s3 + $0xc] sm:$0xf]
  %v315 = vld [vmem:[%s3 + $0x10] sm:$0xf]
  %v316 = vld [vmem:[%s3 + $0x14] sm:$0xf]
  %v317 = vld [vmem:[%s3 + $0x18] sm:$0xf]
  %v318 = vld [vmem:[%s3 + $0x1c] sm:$0xf]
  %v319 = vld [vmem:[%s3 + $0x20] sm:$0xf]
  %v320 = vld [vmem:[%s3 + $0x24] sm:$0xf]
  %v321 = vld [vmem:[%s3 + $0x28] sm:$0xf]
  %v322 = vld [vmem:[%s3 + $0x2c] sm:$0xf]
  %v323 = vld [vmem:[%s3 + $0x30] sm:$0xf]
  %v324 = vld [vmem:[%s3 + $0x34] sm:$0xf]
  %v325 = vld [vmem:[%s3 + $0x38] sm:$0xf]
  %v326 = vld [vmem:[%s3 + $0x3c] sm:$0xf]
  %v327 = vld [vmem:[%s1] sm:$0xf]
  %v328 = vld [vmem:[%s1 + $0x4] sm:$0xf]
  %v329 = vld [vmem:[%s1 + $0x8] sm:$0xf]
  %v330 = vld [vmem:[%s1 + $0xc] sm:$0xf]
  %v331 = vunpack.c.l.bf16 %v327
  %v332 = vunpack.c.l.bf16 %v328
  %v333 = vunpack.c.l.bf16 %v329
  %v334 = vunpack.c.l.bf16 %v330
  %v351 = vunpack.c.l.b16 %v311
  %v352 = vunpack.c.l.b16 %v312
  %v353 = vunpack.c.l.b16 %v313
  %v354 = vunpack.c.l.b16 %v314
  %v355 = vunpack.c.l.b16 %v315
  %v356 = vunpack.c.l.b16 %v316
  %v357 = vunpack.c.l.b16 %v317
  %v358 = vunpack.c.l.b16 %v318
  %v359 = vunpack.c.l.b16 %v319
  %v360 = vunpack.c.l.b16 %v320
  %v361 = vunpack.c.l.b16 %v321
  %v362 = vunpack.c.l.b16 %v322
  %v363 = vunpack.c.l.b16 %v323
  %v364 = vunpack.c.l.b16 %v324
  %v365 = vunpack.c.l.b16 %v325
  %v366 = vunpack.c.l.b16 %v326
  %v367 = vpack.c.b16 %v352, %v351
  %v368 = vpack.c.b16 %v354, %v353
  %v369 = vpack.c.b16 %v356, %v355
  %v370 = vpack.c.b16 %v358, %v357
  %v371 = vpack.c.b16 %v360, %v359
  %v372 = vpack.c.b16 %v362, %v361
  %v373 = vpack.c.b16 %v364, %v363
  %v374 = vpack.c.b16 %v366, %v365
  %383 = vmatprep.subr.bf16.mxu0 0
  %384 = vmatpush1.bf16.msra.mxu0 %v374
  %385 = vmatprep.subr.bf16.mxu0 0
  %386 = vmatpush1.bf16.msra.mxu0 %v373
  %387 = vmatprep.subr.bf16.mxu0 0
  %388 = vmatpush1.bf16.msra.mxu0 %v372
  %389 = vmatprep.subr.bf16.mxu0 0
  %390 = vmatpush1.bf16.msra.mxu0 %v371
  %391 = vmatprep.subr.bf16.mxu0 0
  %392 = vmatpush1.bf16.msra.mxu0 %v370
  %393 = vmatprep.subr.bf16.mxu0 0
  %394 = vmatpush1.bf16.msra.mxu0 %v369
  %395 = vmatprep.subr.bf16.mxu0 0
  %396 = vmatpush1.bf16.msra.mxu0 %v368
  %397 = vmatprep.subr.bf16.mxu0 0
  %398 = vmatpush1.bf16.msra.mxu0 %v367
  %399 = vmatprep.subr.bf16.mxu0 0
  %400 = vmatpush2.bf16.msra.mxu0 0
  %401 = vmatprep.subr.bf16.mxu0 0
  %402 = vmatpush2.bf16.msra.mxu0 0
  %403 = vmatprep.subr.bf16.mxu0 0
  %404 = vmatpush2.bf16.msra.mxu0 0
  %405 = vmatprep.subr.bf16.mxu0 0
  %406 = vmatpush2.bf16.msra.mxu0 0
  %407 = vmatprep.subr.bf16.mxu0 0
  %408 = vmatpush2.bf16.msra.mxu0 0
  %409 = vmatprep.subr.bf16.mxu0 0
  %410 = vmatpush2.bf16.msra.mxu0 0
  %411 = vmatprep.subr.bf16.mxu0 0
  %412 = vmatpush2.bf16.msra.mxu0 0
  %413 = vmatprep.subr.bf16.mxu0 0
  %414 = vmatpush2.bf16.msra.mxu0 0
  %415 = vmatprep.mubr.bf16.mxu0 0
  %416 = vmatmul.mubr.bf16.gmra.mxu0 %v309
  %v417 = vpop.f32.mrf.mxu0
  %v418 = vadd.f32 %v331, %v417
  %v419 = vpop.f32.mrf.mxu0
  %v420 = vpop.f32.mrf.mxu0
  %v421 = vadd.f32 %v332, %v420
  %v422 = vpop.f32.mrf.mxu0
  %423 = vmatprep.mubr.bf16.mxu0 0
  %424 = vmatmul.mubr.bf16.gmra.mxu0 %v310
  %v425 = vpop.f32.mrf.mxu0
  %v426 = vadd.f32 %v333, %v425
  %v427 = vpop.f32.mrf.mxu0
  %v428 = vpop.f32.mrf.mxu0
  %v429 = vadd.f32 %v334, %v428
  %v430 = vpop.f32.mrf.mxu0
  %431 = vdwg.mxu0
  %v432 = vpack.c.bf16 %v421, %v418
  %v433 = vpack.c.bf16 %v429, %v426
  %v436 = vunpack.c.l.b16 %v432
  %v437 = vunpack.c.h.b16 %v432
  %v438 = vunpack.c.l.b16 %v433
  %v439 = vunpack.c.h.b16 %v433
  %v440 = vpack.c.b16 %v436, %v436
  %v441 = vpack.c.b16 %v437, %v437
  %v442 = vpack.c.b16 %v438, %v438
  %v443 = vpack.c.b16 %v439, %v439
  %448 = vst [vmem:[%s4] sm:$0xf] %v440
  %449 = vst [vmem:[%s4 + $0x4] sm:$0xf] %v441
  %450 = vst [vmem:[%s4 + $0x8] sm:$0xf] %v442
  %451 = vst [vmem:[%s4 + $0xc] sm:$0xf] %v443
  // Predicated region
  $region18: #{model_forward.15} parent=0 // pred_check
    _
  $region19: #{model_forward.15} parent=0 // pred_check_branch
    %453 = sbr.rel (0) target = $region21
  $region20: #{model_forward.15} parent=0 // pred_region
    _
  $region21: #{model_forward.15} parent=0 // pred_fallthru
    _
  // Predicated region
  $region22: #{model_forward.15} parent=0 // pred_check
    _
  $region23: #{model_forward.15} parent=0 // pred_check_branch
    %455 = sbr.rel (0) target = $region25
  $region24: #{model_forward.15} parent=0 // pred_region
    _
  $region25: #{model_forward.15} parent=0 // pred_fallthru
    _

// kernel: model_forward.17
$region0: #{model_forward.17}
  #allocation0 [shape = 'u32[]', space=smem, size = 0x4, offset = 0x4, fixed_abs, tag = 'smem constant byte address 0x4 - core index']
  #allocation1 [shape = 'u32[144,128]{1,0:T(1,128)}', space=vmem, size = 0x12000, scoped, tag = 'internal scratch']
  %s0 = inlined_call_operand.vmem [shape: bf16[32,32], index: 0, kind: input, shape index: {}]
  %s1 = inlined_call_operand.vmem [shape: bf16[32,128], index: 1, kind: input, shape index: {}]
  %s2 = inlined_call_operand.vmem [shape: f32[1,128], index: 2, kind: input, shape index: {}]
  %s3 = inlined_call_operand.vmem [shape: f32[32,128], index: 3, kind: output, shape index: {}]
  %s4 = sld [smem:[#allocation0]]
  $region22: #{model_forward.17} parent=0
    _
  %s6 = ssub.s32 1, %s4
  %s7 = scalar_select 0, %s6, %s4
  // Predicated region
  $region2: #{model_forward.17} parent=0 // pred_check
    _
  $region3: #{model_forward.17} parent=0 // pred_check_branch
    %9 = sbr.rel (0) target = $region5
  $region4: #{model_forward.17} parent=0 // pred_region
    _
  $region5: #{model_forward.17} parent=0 // pred_fallthru
    _
  // Predicated region
  $region6: #{model_forward.17} parent=0 // pred_check
    _
  $region7: #{model_forward.17} parent=0 // pred_check_branch
    %11 = sbr.rel (0) target = $region9
  $region8: #{model_forward.17} parent=0 // pred_region
    _
  $region9: #{model_forward.17} parent=0 // pred_fallthru
    _
  // Predicated region
  $region10: #{model_forward.17} parent=0 // pred_check
    _
  $region11: #{model_forward.17} parent=0 // pred_check_branch
    %13 = sbr.rel (0) target = $region13
  $region12: #{model_forward.17} parent=0 // pred_region
    _
  $region13: #{model_forward.17} parent=0 // pred_fallthru
    _
  %v15 = vld [vmem:[%s0] sm:$0xf]
  %v16 = vld [vmem:[%s0 + $0x4] sm:$0xf]
  %v17 = vld [vmem:[%s0 + $0x8] sm:$0xf]
  %v18 = vld [vmem:[%s0 + $0xc] sm:$0xf]
  %v19 = vld [vmem:[%s1] sm:$0xf]
  %v20 = vld [vmem:[%s1 + $0x4] sm:$0xf]
  %v21 = vld [vmem:[%s1 + $0x8] sm:$0xf]
  %v22 = vld [vmem:[%s1 + $0xc] sm:$0xf]
  %v23 = vld [vmem:[%s2] sm:$0x1]
  %v25 = vlaneseq
  %v26 = vshrl.u32 %v25, 7
  %v27 = vsub.s32 0, %v26
  %v28 = vrot.slane %v23, %v27
  %v34 = vunpack.c.l.b16 %v15
  %v35 = vunpack.c.l.b16 %v16
  %v36 = vunpack.c.l.b16 %v17
  %v37 = vunpack.c.l.b16 %v18
  %v38 = vpack.c.b16 %v35, %v34
  %v39 = vpack.c.b16 %v37, %v36
  %v44 = vunpack.c.l.b16 %v19
  %v45 = vunpack.c.l.b16 %v20
  %v46 = vunpack.c.l.b16 %v21
  %v47 = vunpack.c.l.b16 %v22
  %v48 = vpack.c.b16 %v45, %v44
  %v49 = vpack.c.b16 %v47, %v46
  %vm52 = vcmask 261120
  %v54 = vsel %vm52, %v38, 0
  %v57 = vsel %vm52, %v39, 0
  %59 = vmatprep.subr.bf16.mxu0 0
  %60 = vmatpush1.bf16.msra.mxu0 0
  %61 = vmatprep.subr.bf16.mxu0 0
  %62 = vmatpush1.bf16.msra.mxu0 0
  %63 = vmatprep.subr.bf16.mxu0 0
  %64 = vmatpush1.bf16.msra.mxu0 0
  %65 = vmatprep.subr.bf16.mxu0 0
  %66 = vmatpush1.bf16.msra.mxu0 0
  %67 = vmatprep.subr.bf16.mxu0 0
  %68 = vmatpush1.bf16.msra.mxu0 0
  %69 = vmatprep.subr.bf16.mxu0 0
  %70 = vmatpush1.bf16.msra.mxu0 0
  %71 = vmatprep.subr.bf16.mxu0 0
  %72 = vmatpush1.bf16.msra.mxu0 %v49
  %73 = vmatprep.subr.bf16.mxu0 0
  %74 = vmatpush1.bf16.msra.mxu0 %v48
  %75 = vmatprep.subr.bf16.mxu0 0
  %76 = vmatpush2.bf16.msra.mxu0 0
  %77 = vmatprep.subr.bf16.mxu0 0
  %78 = vmatpush2.bf16.msra.mxu0 0
  %79 = vmatprep.subr.bf16.mxu0 0
  %80 = vmatpush2.bf16.msra.mxu0 0
  %81 = vmatprep.subr.bf16.mxu0 0
  %82 = vmatpush2.bf16.msra.mxu0 0
  %83 = vmatprep.subr.bf16.mxu0 0
  %84 = vmatpush2.bf16.msra.mxu0 0
  %85 = vmatprep.subr.bf16.mxu0 0
  %86 = vmatpush2.bf16.msra.mxu0 0
  %87 = vmatprep.subr.bf16.mxu0 0
  %88 = vmatpush2.bf16.msra.mxu0 0
  %89 = vmatprep.subr.bf16.mxu0 0
  %90 = vmatpush2.bf16.msra.mxu0 0
  %91 = vmatprep.mubr.bf16.mxu0 0
  %92 = vmatmul.mubr.bf16.gmra.mxu0 %v54
  %v93 = vpop.f32.mrf.mxu0
  %v94 = vadd.f32 %v28, %v93
  %v95 = vpop.f32.mrf.mxu0
  %v96 = vpop.f32.mrf.mxu0
  %v97 = vadd.f32 %v28, %v96
  %v98 = vpop.f32.mrf.mxu0
  %99 = vmatprep.mubr.bf16.mxu0 0
  %100 = vmatmul.mubr.bf16.gmra.mxu0 %v57
  %v101 = vpop.f32.mrf.mxu0
  %v102 = vadd.f32 %v28, %v101
  %v103 = vpop.f32.mrf.mxu0
  %v104 = vpop.f32.mrf.mxu0
  %v105 = vadd.f32 %v28, %v104
  %v106 = vpop.f32.mrf.mxu0
  %107 = vdwg.mxu0
  %108 = vst [vmem:[%s3] sm:$0xff] %v94
  %109 = vst [vmem:[%s3 + $0x8] sm:$0xff] %v97
  %110 = vst [vmem:[%s3 + $0x10] sm:$0xff] %v102
  %111 = vst [vmem:[%s3 + $0x18] sm:$0xff] %v105
  // Predicated region
  $region14: #{model_forward.17} parent=0 // pred_check
    _
  $region15: #{model_forward.17} parent=0 // pred_check_branch
    %113 = sbr.rel (0) target = $region17
  $region16: #{model_forward.17} parent=0 // pred_region
    _
  $region17: #{model_forward.17} parent=0 // pred_fallthru
    _
  // Predicated region
  $region18: #{model_forward.17} parent=0 // pred_check
    _
  $region19: #{model_forward.17} parent=0 // pred_check_branch
    %115 = sbr.rel (0) target = $region21
  $region20: #{model_forward.17} parent=0 // pred_region
    _
  $region21: #{model_forward.17} parent=0 // pred_fallthru
    _

// kernel: model_forward.18
$region0: #{model_forward.18}
  #allocation0 [shape = 'u32[]', space=smem, size = 0x4, offset = 0x4, fixed_abs, tag = 'smem constant byte address 0x4 - core index']
  #allocation1 [shape = 'u32[144,128]{1,0:T(1,128)}', space=vmem, size = 0x12000, scoped, tag = 'internal scratch']
  %s0 = inlined_call_operand.vmem [shape: f32[32,128], index: 0, kind: input, shape index: {}]
  %s1 = inlined_call_operand.vmem [shape: f32[128,128], index: 1, kind: input, shape index: {}]
  %s2 = inlined_call_operand.vmem [shape: f32[1,128], index: 2, kind: input, shape index: {}]
  %s3 = inlined_call_operand.vmem [shape: f32[32,128], index: 3, kind: output, shape index: {0}]
  %s4 = inlined_call_operand.vmem [shape: f32[32,128], index: 4, kind: output, shape index: {1}]
  %5 = xla_tuple %s3, %s4
  %s6 = sld [smem:[#allocation0]]
  $region30: #{model_forward.18} parent=0
    _
  %s8 = ssub.s32 1, %s6
  %s9 = scalar_select 0, %s8, %s6
  // Predicated region
  $region2: #{model_forward.18} parent=0 // pred_check
    _
  $region3: #{model_forward.18} parent=0 // pred_check_branch
    %11 = sbr.rel (0) target = $region5
  $region4: #{model_forward.18} parent=0 // pred_region
    _
  $region5: #{model_forward.18} parent=0 // pred_fallthru
    _
  // Predicated region
  $region6: #{model_forward.18} parent=0 // pred_check
    _
  $region7: #{model_forward.18} parent=0 // pred_check_branch
    %13 = sbr.rel (0) target = $region9
  $region8: #{model_forward.18} parent=0 // pred_region
    _
  $region9: #{model_forward.18} parent=0 // pred_fallthru
    _
  // Predicated region
  $region10: #{model_forward.18} parent=0 // pred_check
    _
  $region11: #{model_forward.18} parent=0 // pred_check_branch
    %15 = sbr.rel (0) target = $region13
  $region12: #{model_forward.18} parent=0 // pred_region
    _
  $region13: #{model_forward.18} parent=0 // pred_fallthru
    _
  %v16 = vld [vmem:[%s0] sm:$0xff]
  %v17 = vld [vmem:[%s0 + $0x8] sm:$0xff]
  %v18 = vld [vmem:[%s0 + $0x10] sm:$0xff]
  %v19 = vld [vmem:[%s0 + $0x18] sm:$0xff]
  %v20 = vld [vmem:[%s1] sm:$0xff]
  %v21 = vld [vmem:[%s1 + $0x8] sm:$0xff]
  %v22 = vld [vmem:[%s1 + $0x10] sm:$0xff]
  %v23 = vld [vmem:[%s1 + $0x18] sm:$0xff]
  %v24 = vld [vmem:[%s1 + $0x20] sm:$0xff]
  %v25 = vld [vmem:[%s1 + $0x28] sm:$0xff]
  %v26 = vld [vmem:[%s1 + $0x30] sm:$0xff]
  %v27 = vld [vmem:[%s1 + $0x38] sm:$0xff]
  %v28 = vld [vmem:[%s1 + $0x40] sm:$0xff]
  %v29 = vld [vmem:[%s1 + $0x48] sm:$0xff]
  %v30 = vld [vmem:[%s1 + $0x50] sm:$0xff]
  %v31 = vld [vmem:[%s1 + $0x58] sm:$0xff]
  %v32 = vld [vmem:[%s1 + $0x60] sm:$0xff]
  %v33 = vld [vmem:[%s1 + $0x68] sm:$0xff]
  %v34 = vld [vmem:[%s1 + $0x70] sm:$0xff]
  %v35 = vld [vmem:[%s1 + $0x78] sm:$0xff]
  %v36 = vmul.f32 %v16, %v16
  %v37 = vmul.f32 %v17, %v17
  %v38 = vmul.f32 %v18, %v18
  %v39 = vmul.f32 %v19, %v19
  %40 = vadd.xlane.f32.xlu0 %v36
  %v41 = vpop.xlane.xlu0 %40
  %42 = vadd.xlane.f32.xlu0 %v37
  %v43 = vpop.xlane.xlu0 %42
  %44 = vadd.xlane.f32.xlu0 %v38
  %v45 = vpop.xlane.xlu0 %44
  %46 = vadd.xlane.f32.xlu0 %v39
  %v47 = vpop.xlane.xlu0 %46
  %48 = vmatprep.subr.mxu0 0.0
  %49 = vmatpush1.xpose.msra.mxu0 %v35
  %50 = vmatprep.subr.mxu0 0.0
  %51 = vmatpush1.xpose.msra.mxu0 %v34
  %52 = vmatprep.subr.mxu0 0.0
  %53 = vmatpush1.xpose.msra.mxu0 %v33
  %54 = vmatprep.subr.mxu0 0.0
  %55 = vmatpush1.xpose.msra.mxu0 %v32
  %56 = vmatprep.subr.mxu0 0.0
  %57 = vmatpush1.xpose.msra.mxu0 %v31
  %58 = vmatprep.subr.mxu0 0.0
  %59 = vmatpush1.xpose.msra.mxu0 %v30
  %60 = vmatprep.subr.mxu0 0.0
  %61 = vmatpush1.xpose.msra.mxu0 %v29
  %62 = vmatprep.subr.mxu0 0.0
  %63 = vmatpush1.xpose.msra.mxu0 %v28
  %64 = vmatprep.subr.mxu0 0.0
  %65 = vmatpush1.xpose.msra.mxu0 %v27
  %66 = vmatprep.subr.mxu0 0.0
  %67 = vmatpush1.xpose.msra.mxu0 %v26
  %68 = vmatprep.subr.mxu0 0.0
  %69 = vmatpush1.xpose.msra.mxu0 %v25
  %70 = vmatprep.subr.mxu0 0.0
  %71 = vmatpush1.xpose.msra.mxu0 %v24
  %72 = vmatprep.subr.mxu0 0.0
  %73 = vmatpush1.xpose.msra.mxu0 %v23
  %74 = vmatprep.subr.mxu0 0.0
  %75 = vmatpush1.xpose.msra.mxu0 %v22
  %76 = vmatprep.subr.mxu0 0.0
  %77 = vmatpush1.xpose.msra.mxu0 %v21
  %78 = vmatprep.subr.mxu0 0.0
  %79 = vmatpush1.xpose.msra.mxu0 %v20
  %80 = vmatprep.subr.mxu0 0.0
  %81 = vmatpush2.xpose.msra.mxu0 0.0
  %82 = vmatprep.subr.mxu0 0.0
  %83 = vmatpush2.xpose.msra.mxu0 0.0
  %84 = vmatprep.subr.mxu0 0.0
  %85 = vmatpush2.xpose.msra.mxu0 0.0
  %86 = vmatprep.subr.mxu0 0.0
  %87 = vmatpush2.xpose.msra.mxu0 0.0
  %88 = vmatprep.subr.mxu0 0.0
  %89 = vmatpush2.xpose.msra.mxu0 0.0
  %90 = vmatprep.subr.mxu0 0.0
  %91 = vmatpush2.xpose.msra.mxu0 0.0
  %92 = vmatprep.subr.mxu0 0.0
  %93 = vmatpush2.xpose.msra.mxu0 0.0
  %94 = vmatprep.subr.mxu0 0.0
  %95 = vmatpush2.xpose.msra.mxu0 0.0
  %96 = vmatprep.subr.mxu0 0.0
  %97 = vmatpush2.xpose.msra.mxu0 0.0
  %98 = vmatprep.subr.mxu0 0.0
  %99 = vmatpush2.xpose.msra.mxu0 0.0
  %100 = vmatprep.subr.mxu0 0.0
  %101 = vmatpush2.xpose.msra.mxu0 0.0
  %102 = vmatprep.subr.mxu0 0.0
  %103 = vmatpush2.xpose.msra.mxu0 0.0
  %104 = vmatprep.subr.mxu0 0.0
  %105 = vmatpush2.xpose.msra.mxu0 0.0
  %106 = vmatprep.subr.mxu0 0.0
  %107 = vmatpush2.xpose.msra.mxu0 0.0
  %108 = vmatprep.subr.mxu0 0.0
  %109 = vmatpush2.xpose.msra.mxu0 0.0
  %110 = vmatprep.subr.mxu0 0.0
  %111 = vmatpush2.xpose.msra.mxu0 0.0
  %112 = vmatprep.mubr.f32.mxu0 0.0
  %113 = vmatmul.mubr.f32.gmra.mxu0 %v16
  %v114 = vpop.f32.mrf.mxu0
  %v115 = vadd.f32 0.0, %v114
  %v116 = vpop.f32.mrf.mxu0
  %117 = vmatprep.mubr.f32.mxu0 0.0
  %118 = vmatmul.mubr.f32.gmra.mxu0 %v17
  %v119 = vpop.f32.mrf.mxu0
  %v120 = vadd.f32 0.0, %v119
  %v121 = vpop.f32.mrf.mxu0
  %122 = vmatprep.mubr.f32.mxu0 0.0
  %123 = vmatmul.mubr.f32.gmra.mxu0 %v18
  %v124 = vpop.f32.mrf.mxu0
  %v125 = vadd.f32 0.0, %v124
  %v126 = vpop.f32.mrf.mxu0
  %127 = vmatprep.mubr.f32.mxu0 0.0
  %128 = vmatmul.mubr.f32.gmra.mxu0 %v19
  %v129 = vpop.f32.mrf.mxu0
  %v130 = vadd.f32 0.0, %v129
  %v131 = vpop.f32.mrf.mxu0
  %132 = vdwg.mxu0
  %v133 = vld [vmem:[%s2] sm:$0x1]
  %v135 = vlaneseq
  %v136 = vshrl.u32 %v135, 7
  %v137 = vsub.s32 0, %v136
  %v138 = vrot.slane %v133, %v137
  %v140 = vadd.f32 %v41, %v138
  %v141 = vadd.f32 %v43, %v138
  %v142 = vadd.f32 %v45, %v138
  %v143 = vadd.f32 %v47, %v138
  %v144 = vmul.f32 %v115, 2.0
  %v145 = vmul.f32 %v120, 2.0
  %v146 = vmul.f32 %v125, 2.0
  %v147 = vmul.f32 %v130, 2.0
  %v148 = vsub.f32 %v140, %v144
  %v149 = vsub.f32 %v141, %v145
  %v150 = vsub.f32 %v142, %v146
  %v151 = vsub.f32 %v143, %v147
  %152 = vmin.index.xlane.f32.xlu0 %v148
  %v153 = vpop.xlane.xlu0 %152
  %154 = vmin.index.xlane.f32.xlu0 %v149
  %v155 = vpop.xlane.xlu0 %154
  %156 = vmin.index.xlane.f32.xlu0 %v150
  %v157 = vpop.xlane.xlu0 %156
  %158 = vmin.index.xlane.f32.xlu0 %v151
  %v159 = vpop.xlane.xlu0 %158
  %v160 = vlaneseq
  %v161 = vand.u32 %v160, 127
  %vm162 = vcmp.eq.s32.totalorder %v161, %v153
  %vm163 = vcmp.eq.s32.totalorder %v161, %v155
  %vm164 = vcmp.eq.s32.totalorder %v161, %v157
  %vm165 = vcmp.eq.s32.totalorder %v161, %v159
  %v166 = vsel %vm162, 1, 0
  %v167 = vsel %vm163, 1, 0
  %v168 = vsel %vm164, 1, 0
  %v169 = vsel %vm165, 1, 0
  %v170 = vcvt.s32.f32 %v166
  %v171 = vcvt.s32.f32 %v167
  %v172 = vcvt.s32.f32 %v168
  %v173 = vcvt.s32.f32 %v169
  %174 = vst [vmem:[%s3] sm:$0xff] %v170
  %175 = vst [vmem:[%s3 + $0x8] sm:$0xff] %v171
  %176 = vst [vmem:[%s3 + $0x10] sm:$0xff] %v172
  %177 = vst [vmem:[%s3 + $0x18] sm:$0xff] %v173
  %178 = vmatprep.subr.mxu0 0.0
  %179 = vmatpush1.msra.mxu0 %v35
  %180 = vmatprep.subr.mxu0 0.0
  %181 = vmatpush1.msra.mxu0 %v34
  %182 = vmatprep.subr.mxu0 0.0
  %183 = vmatpush1.msra.mxu0 %v33
  %184 = vmatprep.subr.mxu0 0.0
  %185 = vmatpush1.msra.mxu0 %v32
  %186 = vmatprep.subr.mxu0 0.0
  %187 = vmatpush1.msra.mxu0 %v31
  %188 = vmatprep.subr.mxu0 0.0
  %189 = vmatpush1.msra.mxu0 %v30
  %190 = vmatprep.subr.mxu0 0.0
  %191 = vmatpush1.msra.mxu0 %v29
  %192 = vmatprep.subr.mxu0 0.0
  %193 = vmatpush1.msra.mxu0 %v28
  %194 = vmatprep.subr.mxu0 0.0
  %195 = vmatpush1.msra.mxu0 %v27
  %196 = vmatprep.subr.mxu0 0.0
  %197 = vmatpush1.msra.mxu0 %v26
  %198 = vmatprep.subr.mxu0 0.0
  %199 = vmatpush1.msra.mxu0 %v25
  %200 = vmatprep.subr.mxu0 0.0
  %201 = vmatpush1.msra.mxu0 %v24
  %202 = vmatprep.subr.mxu0 0.0
  %203 = vmatpush1.msra.mxu0 %v23
  %204 = vmatprep.subr.mxu0 0.0
  %205 = vmatpush1.msra.mxu0 %v22
  %206 = vmatprep.subr.mxu0 0.0
  %207 = vmatpush1.msra.mxu0 %v21
  %208 = vmatprep.subr.mxu0 0.0
  %209 = vmatpush1.msra.mxu0 %v20
  %210 = vmatprep.subr.mxu0 0.0
  %211 = vmatpush2.msra.mxu0 0.0
  %212 = vmatprep.subr.mxu0 0.0
  %213 = vmatpush2.msra.mxu0 0.0
  %214 = vmatprep.subr.mxu0 0.0
  %215 = vmatpush2.msra.mxu0 0.0
  %216 = vmatprep.subr.mxu0 0.0
  %217 = vmatpush2.msra.mxu0 0.0
  %218 = vmatprep.subr.mxu0 0.0
  %219 = vmatpush2.msra.mxu0 0.0
  %220 = vmatprep.subr.mxu0 0.0
  %221 = vmatpush2.msra.mxu0 0.0
  %222 = vmatprep.subr.mxu0 0.0
  %223 = vmatpush2.msra.mxu0 0.0
  %224 = vmatprep.subr.mxu0 0.0
  %225 = vmatpush2.msra.mxu0 0.0
  %226 = vmatprep.subr.mxu0 0.0
  %227 = vmatpush2.msra.mxu0 0.0
  %228 = vmatprep.subr.mxu0 0.0
  %229 = vmatpush2.msra.mxu0 0.0
  %230 = vmatprep.subr.mxu0 0.0
  %231 = vmatpush2.msra.mxu0 0.0
  %232 = vmatprep.subr.mxu0 0.0
  %233 = vmatpush2.msra.mxu0 0.0
  %234 = vmatprep.subr.mxu0 0.0
  %235 = vmatpush2.msra.mxu0 0.0
  %236 = vmatprep.subr.mxu0 0.0
  %237 = vmatpush2.msra.mxu0 0.0
  %238 = vmatprep.subr.mxu0 0.0
  %239 = vmatpush2.msra.mxu0 0.0
  %240 = vmatprep.subr.mxu0 0.0
  %241 = vmatpush2.msra.mxu0 0.0
  %242 = vmatprep.mubr.f32.mxu0 0.0
  %243 = vmatmul.mubr.f32.gmra.mxu0 %v170
  %v244 = vpop.f32.mrf.mxu0
  %v245 = vadd.f32 0.0, %v244
  %v246 = vpop.f32.mrf.mxu0
  %247 = vmatprep.mubr.f32.mxu0 0.0
  %248 = vmatmul.mubr.f32.gmra.mxu0 %v171
  %v249 = vpop.f32.mrf.mxu0
  %v250 = vadd.f32 0.0, %v249
  %v251 = vpop.f32.mrf.mxu0
  %252 = vmatprep.mubr.f32.mxu0 0.0
  %253 = vmatmul.mubr.f32.gmra.mxu0 %v172
  %v254 = vpop.f32.mrf.mxu0
  %v255 = vadd.f32 0.0, %v254
  %v256 = vpop.f32.mrf.mxu0
  %257 = vmatprep.mubr.f32.mxu0 0.0
  %258 = vmatmul.mubr.f32.gmra.mxu0 %v173
  %v259 = vpop.f32.mrf.mxu0
  %v260 = vadd.f32 0.0, %v259
  %v261 = vpop.f32.mrf.mxu0
  %262 = vdwg.mxu0
  %263 = vst [vmem:[%s4] sm:$0xff] %v245
  %264 = vst [vmem:[%s4 + $0x8] sm:$0xff] %v250
  %265 = vst [vmem:[%s4 + $0x10] sm:$0xff] %v255
  %266 = vst [vmem:[%s4 + $0x18] sm:$0xff] %v260
  // Predicated region
  $region14: #{model_forward.18} parent=0 // pred_check
    _
  $region15: #{model_forward.18} parent=0 // pred_check_branch
    %268 = sbr.rel (0) target = $region17
  $region16: #{model_forward.18} parent=0 // pred_region
    _
  $region17: #{model_forward.18} parent=0 // pred_fallthru
    _
  // Predicated region
  $region18: #{model_forward.18} parent=0 // pred_check
    _
  $region19: #{model_forward.18} parent=0 // pred_check_branch
    %270 = sbr.rel (0) target = $region21
  $region20: #{model_forward.18} parent=0 // pred_region
    _
  $region21: #{model_forward.18} parent=0 // pred_fallthru
    _
  // Predicated region
  $region22: #{model_forward.18} parent=0 // pred_check
    _
  $region23: #{model_forward.18} parent=0 // pred_check_branch
    %272 = sbr.rel (0) target = $region25
  $region24: #{model_forward.18} parent=0 // pred_region
    _
  $region25: #{model_forward.18} parent=0 // pred_fallthru
    _
  // Predicated region
  $region26: #{model_forward.18} parent=0 // pred_check
    _
  $region27: #{model_forward.18} parent=0 // pred_check_branch
    %274 = sbr.rel (0) target = $region29
  $region28: #{model_forward.18} parent=0 // pred_region
    _
  $region29: #{model_forward.18} parent=0 // pred_fallthru
    _

// kernel: model_forward.19
$region0: #{model_forward.19}
  #allocation0 [shape = 'u32[]', space=smem, size = 0x4, offset = 0x4, fixed_abs, tag = 'smem constant byte address 0x4 - core index']
  #allocation1 [shape = 'u32[144,128]{1,0:T(1,128)}', space=vmem, size = 0x12000, scoped, tag = 'internal scratch']
  %s0 = inlined_call_operand.vmem [shape: bf16[32,72], index: 0, kind: input, shape index: {}]
  %s1 = inlined_call_operand.vmem [shape: bf16[72,128], index: 1, kind: input, shape index: {}]
  %s2 = inlined_call_operand.vmem [shape: f32[1,128], index: 2, kind: input, shape index: {}]
  %s3 = inlined_call_operand.vmem [shape: bf16[32,128], index: 3, kind: output, shape index: {}]
  %s4 = sld [smem:[#allocation0]]
  $region22: #{model_forward.19} parent=0
    _
  %s6 = ssub.s32 1, %s4
  %s7 = scalar_select 0, %s6, %s4
  // Predicated region
  $region2: #{model_forward.19} parent=0 // pred_check
    _
  $region3: #{model_forward.19} parent=0 // pred_check_branch
    %9 = sbr.rel (0) target = $region5
  $region4: #{model_forward.19} parent=0 // pred_region
    _
  $region5: #{model_forward.19} parent=0 // pred_fallthru
    _
  // Predicated region
  $region6: #{model_forward.19} parent=0 // pred_check
    _
  $region7: #{model_forward.19} parent=0 // pred_check_branch
    %11 = sbr.rel (0) target = $region9
  $region8: #{model_forward.19} parent=0 // pred_region
    _
  $region9: #{model_forward.19} parent=0 // pred_fallthru
    _
  // Predicated region
  $region10: #{model_forward.19} parent=0 // pred_check
    _
  $region11: #{model_forward.19} parent=0 // pred_check_branch
    %13 = sbr.rel (0) target = $region13
  $region12: #{model_forward.19} parent=0 // pred_region
    _
  $region13: #{model_forward.19} parent=0 // pred_fallthru
    _
  %v15 = vld [vmem:[%s0] sm:$0xf]
  %v16 = vld [vmem:[%s0 + $0x4] sm:$0xf]
  %v17 = vld [vmem:[%s0 + $0x8] sm:$0xf]
  %v18 = vld [vmem:[%s0 + $0xc] sm:$0xf]
  %v19 = vld [vmem:[%s1] sm:$0xf]
  %v20 = vld [vmem:[%s1 + $0x4] sm:$0xf]
  %v21 = vld [vmem:[%s1 + $0x8] sm:$0xf]
  %v22 = vld [vmem:[%s1 + $0xc] sm:$0xf]
  %v23 = vld [vmem:[%s1 + $0x10] sm:$0xf]
  %v24 = vld [vmem:[%s1 + $0x14] sm:$0xf]
  %v25 = vld [vmem:[%s1 + $0x18] sm:$0xf]
  %v26 = vld [vmem:[%s1 + $0x1c] sm:$0xf]
  %v27 = vld [vmem:[%s1 + $0x20] sm:$0xf]
  %v28 = vld [vmem:[%s2] sm:$0x1]
  %v30 = vlaneseq
  %v31 = vshrl.u32 %v30, 7
  %v32 = vsub.s32 0, %v31
  %v33 = vrot.slane %v28, %v32
  %v39 = vunpack.c.l.b16 %v15
  %v40 = vunpack.c.l.b16 %v16
  %v41 = vunpack.c.l.b16 %v17
  %v42 = vunpack.c.l.b16 %v18
  %v43 = vpack.c.b16 %v40, %v39
  %v44 = vpack.c.b16 %v42, %v41
  %v54 = vunpack.c.l.b16 %v19
  %v55 = vunpack.c.l.b16 %v20
  %v56 = vunpack.c.l.b16 %v21
  %v57 = vunpack.c.l.b16 %v22
  %v58 = vunpack.c.l.b16 %v23
  %v59 = vunpack.c.l.b16 %v24
  %v60 = vunpack.c.l.b16 %v25
  %v61 = vunpack.c.l.b16 %v26
  %v62 = vunpack.c.l.b16 %v27
  %v63 = vpack.c.b16 %v55, %v54
  %v64 = vpack.c.b16 %v57, %v56
  %v65 = vpack.c.b16 %v59, %v58
  %v66 = vpack.c.b16 %v61, %v60
  %v67 = vpack.c.b16 %v62, %v62
  %vm72 = vcmask 588800
  %v74 = vsel %vm72, %v43, 0
  %v77 = vsel %vm72, %v44, 0
  %vm79 = vcmask 1043456
  %v81 = vsel %vm79, %v67, 0
  %83 = vmatprep.subr.bf16.mxu0 0
  %84 = vmatpush1.bf16.msra.mxu0 0
  %85 = vmatprep.subr.bf16.mxu0 0
  %86 = vmatpush1.bf16.msra.mxu0 0
  %87 = vmatprep.subr.bf16.mxu0 0
  %88 = vmatpush1.bf16.msra.mxu0 0
  %89 = vmatprep.subr.bf16.mxu0 0
  %90 = vmatpush1.bf16.msra.mxu0 %v81
  %91 = vmatprep.subr.bf16.mxu0 0
  %92 = vmatpush1.bf16.msra.mxu0 %v66
  %93 = vmatprep.subr.bf16.mxu0 0
  %94 = vmatpush1.bf16.msra.mxu0 %v65
  %95 = vmatprep.subr.bf16.mxu0 0
  %96 = vmatpush1.bf16.msra.mxu0 %v64
  %97 = vmatprep.subr.bf16.mxu0 0
  %98 = vmatpush1.bf16.msra.mxu0 %v63
  %99 = vmatprep.subr.bf16.mxu0 0
  %100 = vmatpush2.bf16.msra.mxu0 0
  %101 = vmatprep.subr.bf16.mxu0 0
  %102 = vmatpush2.bf16.msra.mxu0 0
  %103 = vmatprep.subr.bf16.mxu0 0
  %104 = vmatpush2.bf16.msra.mxu0 0
  %105 = vmatprep.subr.bf16.mxu0 0
  %106 = vmatpush2.bf16.msra.mxu0 0
  %107 = vmatprep.subr.bf16.mxu0 0
  %108 = vmatpush2.bf16.msra.mxu0 0
  %109 = vmatprep.subr.bf16.mxu0 0
  %110 = vmatpush2.bf16.msra.mxu0 0
  %111 = vmatprep.subr.bf16.mxu0 0
  %112 = vmatpush2.bf16.msra.mxu0 0
  %113 = vmatprep.subr.bf16.mxu0 0
  %114 = vmatpush2.bf16.msra.mxu0 0
  %115 = vmatprep.mubr.bf16.mxu0 0
  %116 = vmatmul.mubr.bf16.gmra.mxu0 %v74
  %v117 = vpop.f32.mrf.mxu0
  %v118 = vadd.f32 %v33, %v117
  %v119 = vpop.f32.mrf.mxu0
  %v120 = vpop.f32.mrf.mxu0
  %v121 = vadd.f32 %v33, %v120
  %v122 = vpop.f32.mrf.mxu0
  %123 = vmatprep.mubr.bf16.mxu0 0
  %124 = vmatmul.mubr.bf16.gmra.mxu0 %v77
  %v125 = vpop.f32.mrf.mxu0
  %v126 = vadd.f32 %v33, %v125
  %v127 = vpop.f32.mrf.mxu0
  %v128 = vpop.f32.mrf.mxu0
  %v129 = vadd.f32 %v33, %v128
  %v130 = vpop.f32.mrf.mxu0
  %131 = vdwg.mxu0
  %v132 = vpack.c.bf16 %v121, %v118
  %v133 = vpack.c.bf16 %v129, %v126
  %v136 = vunpack.c.l.b16 %v132
  %v137 = vunpack.c.h.b16 %v132
  %v138 = vunpack.c.l.b16 %v133
  %v139 = vunpack.c.h.b16 %v133
  %v140 = vpack.c.b16 %v136, %v136
  %v141 = vpack.c.b16 %v137, %v137
  %v142 = vpack.c.b16 %v138, %v138
  %v143 = vpack.c.b16 %v139, %v139
  %148 = vst [vmem:[%s3] sm:$0xf] %v140
  %149 = vst [vmem:[%s3 + $0x4] sm:$0xf] %v141
  %150 = vst [vmem:[%s3 + $0x8] sm:$0xf] %v142
  %151 = vst [vmem:[%s3 + $0xc] sm:$0xf] %v143
  // Predicated region
  $region14: #{model_forward.19} parent=0 // pred_check
    _
  $region15: #{model_forward.19} parent=0 // pred_check_branch
    %153 = sbr.rel (0) target = $region17
  $region16: #{model_forward.19} parent=0 // pred_region
    _
  $region17: #{model_forward.19} parent=0 // pred_fallthru
    _
  // Predicated region
  $region18: #{model_forward.19} parent=0 // pred_check
    _
  $region19: #{model_forward.19} parent=0 // pred_check_branch
    %155 = sbr.rel (0) target = $region21
  $region20: #{model_forward.19} parent=0 // pred_region
    _
  $region21: #{model_forward.19} parent=0 // pred_fallthru
    _

// kernel: tile.13
$region0: #{tile.13}
  #allocation0 [shape = 's32[1]{0}', space=sflag, size = 0x4, scoped, tag = 'scoped memory for tile.13']
  %s0 = inlined_call_operand.vmem [shape: f32[16], index: 0, kind: input, shape index: {}]
  %s1 = inlined_call_operand.vmem [shape: f32[4,16], index: 1, kind: output, shape index: {}]
  // Predicated region
  $region2: #{tile.13} parent=0 // pred_check
    _
  $region3: #{tile.13} parent=0 // pred_check_branch
    %3 = sbr.rel (0) target = $region5
  $region4: #{tile.13} parent=0 // pred_region
    _
  $region5: #{tile.13} parent=0 // pred_fallthru
    _
  %v4 = vld [vmem:[%s0] ss:$0 sm:$0xff]
  %5 = vst [vmem:[%s1] sm:$0xf] %v4

// kernel: tile.14
$region0: #{tile.14}
  %s0 = inlined_call_operand.vmem [shape: f32[4,16], index: 0, kind: input, shape index: {}]
  %s1 = inlined_call_operand.vmem [shape: f32[64], index: 1, kind: output, shape index: {}]
  $region1: #{tile.14} parent=0
    #allocation0 [shape = 'u8[4096]{0}', space=vmem, size = 0x1000, scoped, tag = 'scoped mem for output reshape']
    #allocation1 [shape = 'u8[4096]{0}', space=vmem, size = 0x1000, scoped, tag = 'scoped mem for input reshape']
    %s3 = sshll.u32 1, 4
    %s4 = ssub.s32 %s3, 1
    %v5 = vld [vmem:[%s0] sm:%s4]
    %6 = vst [vmem:[#allocation1] sm:%s4] %v5
    %v7 = vld [vmem:[#allocation1] sm:$0x1]
    %vm8 = vcmask 130048
    %9 = vst.msk [vmem:[#allocation0] sm:$0x1] %vm8, %v7
    %s10 = scalar_lea.vmem [#allocation1], 3
    %v11 = vld [vmem:[%s10] sm:$0x1]
    %12 = vrot.lane.b32.xlu0 %v11, 48
    %v13 = vpop.permute.xlu0 %12
    %vm14 = vcmask 523648
    %15 = vst.msk [vmem:[#allocation0] sm:$0x1] %vm14, %v13
    %s16 = scalar_lea.vmem [#allocation1], 2
    %v17 = vld [vmem:[%s16] sm:$0x1]
    %18 = vrot.lane.b32.xlu0 %v17, 32
    %v19 = vpop.permute.xlu0 %18
    %vm20 = vcmask 392448
    %21 = vst.msk [vmem:[#allocation0] sm:$0x1] %vm20, %v19
    %s22 = scalar_lea.vmem [#allocation1], 1
    %v23 = vld [vmem:[%s22] sm:$0x1]
    %24 = vrot.lane.b32.xlu0 %v23, 16
    %v25 = vpop.permute.xlu0 %24
    %vm26 = vcmask 261248
    %27 = vst.msk [vmem:[#allocation0] sm:$0x1] %vm26, %v25
    %s29 = sshll.u32 1, 1
    %s30 = ssub.s32 %s29, 1
    %v32 = vld [vmem:[#allocation0] sm:%s30]
    %s33 = sshll.u32 1, 1
    %s34 = ssub.s32 %s33, 1
    %35 = vst [vmem:[%s1] sm:%s34] %v32

// kernel: model_forward.22
$region0: #{model_forward.22}
  #allocation0 [shape = 'u32[]', space=smem, size = 0x4, offset = 0x4, fixed_abs, tag = 'smem constant byte address 0x4 - core index']
  #allocation1 [shape = 'u32[144,128]{1,0:T(1,128)}', space=vmem, size = 0x12000, scoped, tag = 'internal scratch']
  %s0 = inlined_call_operand.vmem [shape: bf16[32,288], index: 0, kind: input, shape index: {}]
  %s1 = inlined_call_operand.vmem [shape: bf16[288,128], index: 1, kind: input, shape index: {}]
  %s2 = inlined_call_operand.vmem [shape: f32[1,128], index: 2, kind: input, shape index: {}]
  %s3 = inlined_call_operand.vmem [shape: bf16[32,128], index: 3, kind: output, shape index: {}]
  %s4 = sld [smem:[#allocation0]]
  $region22: #{model_forward.22} parent=0
    _
  %s6 = ssub.s32 1, %s4
  %s7 = scalar_select 0, %s6, %s4
  // Predicated region
  $region2: #{model_forward.22} parent=0 // pred_check
    _
  $region3: #{model_forward.22} parent=0 // pred_check_branch
    %9 = sbr.rel (0) target = $region5
  $region4: #{model_forward.22} parent=0 // pred_region
    _
  $region5: #{model_forward.22} parent=0 // pred_fallthru
    _
  // Predicated region
  $region6: #{model_forward.22} parent=0 // pred_check
    _
  $region7: #{model_forward.22} parent=0 // pred_check_branch
    %11 = sbr.rel (0) target = $region9
  $region8: #{model_forward.22} parent=0 // pred_region
    _
  $region9: #{model_forward.22} parent=0 // pred_fallthru
    _
  // Predicated region
  $region10: #{model_forward.22} parent=0 // pred_check
    _
  $region11: #{model_forward.22} parent=0 // pred_check_branch
    %13 = sbr.rel (0) target = $region13
  $region12: #{model_forward.22} parent=0 // pred_region
    _
  $region13: #{model_forward.22} parent=0 // pred_fallthru
    _
  %v15 = vld [vmem:[%s0] sm:$0xff]
  %v16 = vld [vmem:[%s0 + $0x8] sm:$0xf]
  %v17 = vld [vmem:[%s0 + $0xc] sm:$0xff]
  %v18 = vld [vmem:[%s0 + $0x14] sm:$0xf]
  %v19 = vld [vmem:[%s0 + $0x18] sm:$0xff]
  %v20 = vld [vmem:[%s0 + $0x20] sm:$0xf]
  %v21 = vld [vmem:[%s0 + $0x24] sm:$0xff]
  %v22 = vld [vmem:[%s0 + $0x2c] sm:$0xf]
  %v23 = vld [vmem:[%s1] sm:$0xf]
  %v24 = vld [vmem:[%s1 + $0x4] sm:$0xf]
  %v25 = vld [vmem:[%s1 + $0x8] sm:$0xf]
  %v26 = vld [vmem:[%s1 + $0xc] sm:$0xf]
  %v27 = vld [vmem:[%s1 + $0x10] sm:$0xf]
  %v28 = vld [vmem:[%s1 + $0x14] sm:$0xf]
  %v29 = vld [vmem:[%s1 + $0x18] sm:$0xf]
  %v30 = vld [vmem:[%s1 + $0x1c] sm:$0xf]
  %v31 = vld [vmem:[%s1 + $0x20] sm:$0xf]
  %v32 = vld [vmem:[%s1 + $0x24] sm:$0xf]
  %v33 = vld [vmem:[%s1 + $0x28] sm:$0xf]
  %v34 = vld [vmem:[%s1 + $0x2c] sm:$0xf]
  %v35 = vld [vmem:[%s1 + $0x30] sm:$0xf]
  %v36 = vld [vmem:[%s1 + $0x34] sm:$0xf]
  %v37 = vld [vmem:[%s1 + $0x38] sm:$0xf]
  %v38 = vld [vmem:[%s1 + $0x3c] sm:$0xf]
  %v39 = vld [vmem:[%s1 + $0x40] sm:$0xf]
  %v40 = vld [vmem:[%s1 + $0x44] sm:$0xf]
  %v41 = vld [vmem:[%s1 + $0x48] sm:$0xf]
  %v42 = vld [vmem:[%s1 + $0x4c] sm:$0xf]
  %v43 = vld [vmem:[%s1 + $0x50] sm:$0xf]
  %v44 = vld [vmem:[%s1 + $0x54] sm:$0xf]
  %v45 = vld [vmem:[%s1 + $0x58] sm:$0xf]
  %v46 = vld [vmem:[%s1 + $0x5c] sm:$0xf]
  %v47 = vld [vmem:[%s1 + $0x60] sm:$0xf]
  %v48 = vld [vmem:[%s1 + $0x64] sm:$0xf]
  %v49 = vld [vmem:[%s1 + $0x68] sm:$0xf]
  %v50 = vld [vmem:[%s1 + $0x6c] sm:$0xf]
  %v51 = vld [vmem:[%s1 + $0x70] sm:$0xf]
  %v52 = vld [vmem:[%s1 + $0x74] sm:$0xf]
  %v53 = vld [vmem:[%s1 + $0x78] sm:$0xf]
  %v54 = vld [vmem:[%s1 + $0x7c] sm:$0xf]
  %v55 = vld [vmem:[%s1 + $0x80] sm:$0xf]
  %v56 = vld [vmem:[%s1 + $0x84] sm:$0xf]
  %v57 = vld [vmem:[%s1 + $0x88] sm:$0xf]
  %v58 = vld [vmem:[%s1 + $0x8c] sm:$0xf]
  %v59 = vld [vmem:[%s2] sm:$0x1]
  %v61 = vlaneseq
  %v62 = vshrl.u32 %v61, 7
  %v63 = vsub.s32 0, %v62
  %v64 = vrot.slane %v59, %v63
  %v74 = vunpack.c.l.b16 %v15
  %v75 = vunpack.c.h.b16 %v15
  %v76 = vunpack.c.l.b16 %v16
  %v77 = vunpack.c.l.b16 %v17
  %v78 = vunpack.c.h.b16 %v17
  %v79 = vunpack.c.l.b16 %v18
  %v80 = vunpack.c.l.b16 %v19
  %v81 = vunpack.c.h.b16 %v19
  %v82 = vunpack.c.l.b16 %v20
  %v83 = vunpack.c.l.b16 %v21
  %v84 = vunpack.c.h.b16 %v21
  %v85 = vunpack.c.l.b16 %v22
  %v86 = vpack.c.b16 %v77, %v74
  %v87 = vpack.c.b16 %v78, %v75
  %v88 = vpack.c.b16 %v79, %v76
  %v89 = vpack.c.b16 %v83, %v80
  %v90 = vpack.c.b16 %v84, %v81
  %v91 = vpack.c.b16 %v85, %v82
  %v132 = vunpack.c.l.b16 %v23
  %v133 = vunpack.c.l.b16 %v24
  %v134 = vunpack.c.l.b16 %v25
  %v135 = vunpack.c.l.b16 %v26
  %v136 = vunpack.c.l.b16 %v27
  %v137 = vunpack.c.l.b16 %v28
  %v138 = vunpack.c.l.b16 %v29
  %v139 = vunpack.c.l.b16 %v30
  %v140 = vunpack.c.l.b16 %v31
  %v141 = vunpack.c.l.b16 %v32
  %v142 = vunpack.c.l.b16 %v33
  %v143 = vunpack.c.l.b16 %v34
  %v144 = vunpack.c.l.b16 %v35
  %v145 = vunpack.c.l.b16 %v36
  %v146 = vunpack.c.l.b16 %v37
  %v147 = vunpack.c.l.b16 %v38
  %v148 = vunpack.c.l.b16 %v39
  %v149 = vunpack.c.l.b16 %v40
  %v150 = vunpack.c.l.b16 %v41
  %v151 = vunpack.c.l.b16 %v42
  %v152 = vunpack.c.l.b16 %v43
  %v153 = vunpack.c.l.b16 %v44
  %v154 = vunpack.c.l.b16 %v45
  %v155 = vunpack.c.l.b16 %v46
  %v156 = vunpack.c.l.b16 %v47
  %v157 = vunpack.c.l.b16 %v48
  %v158 = vunpack.c.l.b16 %v49
  %v159 = vunpack.c.l.b16 %v50
  %v160 = vunpack.c.l.b16 %v51
  %v161 = vunpack.c.l.b16 %v52
  %v162 = vunpack.c.l.b16 %v53
  %v163 = vunpack.c.l.b16 %v54
  %v164 = vunpack.c.l.b16 %v55
  %v165 = vunpack.c.l.b16 %v56
  %v166 = vunpack.c.l.b16 %v57
  %v167 = vunpack.c.l.b16 %v58
  %v168 = vpack.c.b16 %v133, %v132
  %v169 = vpack.c.b16 %v135, %v134
  %v170 = vpack.c.b16 %v137, %v136
  %v171 = vpack.c.b16 %v139, %v138
  %v172 = vpack.c.b16 %v141, %v140
  %v173 = vpack.c.b16 %v143, %v142
  %v174 = vpack.c.b16 %v145, %v144
  %v175 = vpack.c.b16 %v147, %v146
  %v176 = vpack.c.b16 %v149, %v148
  %v177 = vpack.c.b16 %v151, %v150
  %v178 = vpack.c.b16 %v153, %v152
  %v179 = vpack.c.b16 %v155, %v154
  %v180 = vpack.c.b16 %v157, %v156
  %v181 = vpack.c.b16 %v159, %v158
  %v182 = vpack.c.b16 %v161, %v160
  %v183 = vpack.c.b16 %v163, %v162
  %v184 = vpack.c.b16 %v165, %v164
  %v185 = vpack.c.b16 %v167, %v166
  %vm204 = vcmask 261120
  %v206 = vsel %vm204, %v88, 0
  %v209 = vsel %vm204, %v91, 0
  %211 = vmatprep.subr.bf16.mxu0 0
  %212 = vmatpush1.bf16.msra.mxu0 %v175
  %213 = vmatprep.subr.bf16.mxu0 0
  %214 = vmatpush1.bf16.msra.mxu0 %v174
  %215 = vmatprep.subr.bf16.mxu0 0
  %216 = vmatpush1.bf16.msra.mxu0 %v173
  %217 = vmatprep.subr.bf16.mxu0 0
  %218 = vmatpush1.bf16.msra.mxu0 %v172
  %219 = vmatprep.subr.bf16.mxu0 0
  %220 = vmatpush1.bf16.msra.mxu0 %v171
  %221 = vmatprep.subr.bf16.mxu0 0
  %222 = vmatpush1.bf16.msra.mxu0 %v170
  %223 = vmatprep.subr.bf16.mxu0 0
  %224 = vmatpush1.bf16.msra.mxu0 %v169
  %225 = vmatprep.subr.bf16.mxu0 0
  %226 = vmatpush1.bf16.msra.mxu0 %v168
  %227 = vmatprep.subr.bf16.mxu0 0
  %228 = vmatpush2.bf16.msra.mxu0 %v183
  %229 = vmatprep.subr.bf16.mxu0 0
  %230 = vmatpush2.bf16.msra.mxu0 %v182
  %231 = vmatprep.subr.bf16.mxu0 0
  %232 = vmatpush2.bf16.msra.mxu0 %v181
  %233 = vmatprep.subr.bf16.mxu0 0
  %234 = vmatpush2.bf16.msra.mxu0 %v180
  %235 = vmatprep.subr.bf16.mxu0 0
  %236 = vmatpush2.bf16.msra.mxu0 %v179
  %237 = vmatprep.subr.bf16.mxu0 0
  %238 = vmatpush2.bf16.msra.mxu0 %v178
  %239 = vmatprep.subr.bf16.mxu0 0
  %240 = vmatpush2.bf16.msra.mxu0 %v177
  %241 = vmatprep.subr.bf16.mxu0 0
  %242 = vmatpush2.bf16.msra.mxu0 %v176
  %243 = vmatprep.mubr.bf16.mxu0 %v87
  %244 = vmatmul.mubr.bf16.gmra.mxu0 %v86
  %v245 = vpop.f32.mrf.mxu0
  %v246 = vadd.f32 %v64, %v245
  %v247 = vpop.f32.mrf.mxu0
  %v248 = vpop.f32.mrf.mxu0
  %v249 = vadd.f32 %v64, %v248
  %v250 = vpop.f32.mrf.mxu0
  %251 = vmatprep.mubr.bf16.mxu0 %v90
  %252 = vmatmul.mubr.bf16.gmra.mxu0 %v89
  %v253 = vpop.f32.mrf.mxu0
  %v254 = vadd.f32 %v64, %v253
  %v255 = vpop.f32.mrf.mxu0
  %v256 = vpop.f32.mrf.mxu0
  %v257 = vadd.f32 %v64, %v256
  %v258 = vpop.f32.mrf.mxu0
  %259 = vdwg.mxu0
  %260 = vmatprep.subr.bf16.mxu0 0
  %261 = vmatpush1.bf16.msra.mxu0 0
  %262 = vmatprep.subr.bf16.mxu0 0
  %263 = vmatpush1.bf16.msra.mxu0 0
  %264 = vmatprep.subr.bf16.mxu0 0
  %265 = vmatpush1.bf16.msra.mxu0 0
  %266 = vmatprep.subr.bf16.mxu0 0
  %267 = vmatpush1.bf16.msra.mxu0 0
  %268 = vmatprep.subr.bf16.mxu0 0
  %269 = vmatpush1.bf16.msra.mxu0 0
  %270 = vmatprep.subr.bf16.mxu0 0
  %271 = vmatpush1.bf16.msra.mxu0 0
  %272 = vmatprep.subr.bf16.mxu0 0
  %273 = vmatpush1.bf16.msra.mxu0 %v185
  %274 = vmatprep.subr.bf16.mxu0 0
  %275 = vmatpush1.bf16.msra.mxu0 %v184
  %276 = vmatprep.subr.bf16.mxu0 0
  %277 = vmatpush2.bf16.msra.mxu0 0
  %278 = vmatprep.subr.bf16.mxu0 0
  %279 = vmatpush2.bf16.msra.mxu0 0
  %280 = vmatprep.subr.bf16.mxu0 0
  %281 = vmatpush2.bf16.msra.mxu0 0
  %282 = vmatprep.subr.bf16.mxu0 0
  %283 = vmatpush2.bf16.msra.mxu0 0
  %284 = vmatprep.subr.bf16.mxu0 0
  %285 = vmatpush2.bf16.msra.mxu0 0
  %286 = vmatprep.subr.bf16.mxu0 0
  %287 = vmatpush2.bf16.msra.mxu0 0
  %288 = vmatprep.subr.bf16.mxu0 0
  %289 = vmatpush2.bf16.msra.mxu0 0
  %290 = vmatprep.subr.bf16.mxu0 0
  %291 = vmatpush2.bf16.msra.mxu0 0
  %292 = vmatprep.mubr.bf16.mxu0 0
  %293 = vmatmul.mubr.bf16.gmra.mxu0 %v206
  %v294 = vpop.f32.mrf.mxu0
  %v295 = vadd.f32 %v246, %v294
  %v296 = vpop.f32.mrf.mxu0
  %v297 = vpop.f32.mrf.mxu0
  %v298 = vadd.f32 %v249, %v297
  %v299 = vpop.f32.mrf.mxu0
  %300 = vmatprep.mubr.bf16.mxu0 0
  %301 = vmatmul.mubr.bf16.gmra.mxu0 %v209
  %v302 = vpop.f32.mrf.mxu0
  %v303 = vadd.f32 %v254, %v302
  %v304 = vpop.f32.mrf.mxu0
  %v305 = vpop.f32.mrf.mxu0
  %v306 = vadd.f32 %v257, %v305
  %v307 = vpop.f32.mrf.mxu0
  %308 = vdwg.mxu0
  %v309 = vmax.f32 %v295, 0.0
  %v310 = vmax.f32 %v298, 0.0
  %v311 = vmax.f32 %v303, 0.0
  %v312 = vmax.f32 %v306, 0.0
  %v313 = vpack.c.bf16 %v310, %v309
  %v314 = vpack.c.bf16 %v312, %v311
  %v317 = vunpack.c.l.b16 %v313
  %v318 = vunpack.c.h.b16 %v313
  %v319 = vunpack.c.l.b16 %v314
  %v320 = vunpack.c.h.b16 %v314
  %v321 = vpack.c.b16 %v317, %v317
  %v322 = vpack.c.b16 %v318, %v318
  %v323 = vpack.c.b16 %v319, %v319
  %v324 = vpack.c.b16 %v320, %v320
  %329 = vst [vmem:[%s3] sm:$0xf] %v321
  %330 = vst [vmem:[%s3 + $0x4] sm:$0xf] %v322
  %331 = vst [vmem:[%s3 + $0x8] sm:$0xf] %v323
  %332 = vst [vmem:[%s3 + $0xc] sm:$0xf] %v324
  // Predicated region
  $region14: #{model_forward.22} parent=0 // pred_check
    _
  $region15: #{model_forward.22} parent=0 // pred_check_branch
    %334 = sbr.rel (0) target = $region17
  $region16: #{model_forward.22} parent=0 // pred_region
    _
  $region17: #{model_forward.22} parent=0 // pred_fallthru
    _
  // Predicated region
  $region18: #{model_forward.22} parent=0 // pred_check
    _
  $region19: #{model_forward.22} parent=0 // pred_check_branch
    %336 = sbr.rel (0) target = $region21
  $region20: #{model_forward.22} parent=0 // pred_region
    _
  $region21: #{model_forward.22} parent=0 // pred_fallthru
    _

// kernel: model_forward.23
$region0: #{model_forward.23}
  #allocation0 [shape = 'u32[]', space=smem, size = 0x4, offset = 0x4, fixed_abs, tag = 'smem constant byte address 0x4 - core index']
  #allocation1 [shape = 'u32[144,128]{1,0:T(1,128)}', space=vmem, size = 0x12000, scoped, tag = 'internal scratch']
  %s0 = inlined_call_operand.vmem [shape: bf16[128,144], index: 0, kind: input, shape index: {}]
  %s1 = inlined_call_operand.vmem [shape: bf16[144,128], index: 1, kind: input, shape index: {}]
  %s2 = inlined_call_operand.vmem [shape: f32[1,128], index: 2, kind: input, shape index: {}]
  %s3 = inlined_call_operand.vmem [shape: f32[128,128], index: 3, kind: output, shape index: {}]
  %s4 = sld [smem:[#allocation0]]
  $region22: #{model_forward.23} parent=0
    _
  %s6 = ssub.s32 1, %s4
  %s7 = scalar_select 0, %s6, %s4
  // Predicated region
  $region2: #{model_forward.23} parent=0 // pred_check
    _
  $region3: #{model_forward.23} parent=0 // pred_check_branch
    %9 = sbr.rel (0) target = $region5
  $region4: #{model_forward.23} parent=0 // pred_region
    _
  $region5: #{model_forward.23} parent=0 // pred_fallthru
    _
  // Predicated region
  $region6: #{model_forward.23} parent=0 // pred_check
    _
  $region7: #{model_forward.23} parent=0 // pred_check_branch
    %11 = sbr.rel (0) target = $region9
  $region8: #{model_forward.23} parent=0 // pred_region
    _
  $region9: #{model_forward.23} parent=0 // pred_fallthru
    _
  // Predicated region
  $region10: #{model_forward.23} parent=0 // pred_check
    _
  $region11: #{model_forward.23} parent=0 // pred_check_branch
    %13 = sbr.rel (0) target = $region13
  $region12: #{model_forward.23} parent=0 // pred_region
    _
  $region13: #{model_forward.23} parent=0 // pred_fallthru
    _
  %v15 = vld [vmem:[%s0] sm:$0xff]
  %v16 = vld [vmem:[%s0 + $0x8] sm:$0xff]
  %v17 = vld [vmem:[%s0 + $0x10] sm:$0xff]
  %v18 = vld [vmem:[%s0 + $0x18] sm:$0xff]
  %v19 = vld [vmem:[%s0 + $0x20] sm:$0xff]
  %v20 = vld [vmem:[%s0 + $0x28] sm:$0xff]
  %v21 = vld [vmem:[%s0 + $0x30] sm:$0xff]
  %v22 = vld [vmem:[%s0 + $0x38] sm:$0xff]
  %v23 = vld [vmem:[%s0 + $0x40] sm:$0xff]
  %v24 = vld [vmem:[%s0 + $0x48] sm:$0xff]
  %v25 = vld [vmem:[%s0 + $0x50] sm:$0xff]
  %v26 = vld [vmem:[%s0 + $0x58] sm:$0xff]
  %v27 = vld [vmem:[%s0 + $0x60] sm:$0xff]
  %v28 = vld [vmem:[%s0 + $0x68] sm:$0xff]
  %v29 = vld [vmem:[%s0 + $0x70] sm:$0xff]
  %v30 = vld [vmem:[%s0 + $0x78] sm:$0xff]
  %v31 = vld [vmem:[%s1] sm:$0xf]
  %v32 = vld [vmem:[%s1 + $0x4] sm:$0xf]
  %v33 = vld [vmem:[%s1 + $0x8] sm:$0xf]
  %v34 = vld [vmem:[%s1 + $0xc] sm:$0xf]
  %v35 = vld [vmem:[%s1 + $0x10] sm:$0xf]
  %v36 = vld [vmem:[%s1 + $0x14] sm:$0xf]
  %v37 = vld [vmem:[%s1 + $0x18] sm:$0xf]
  %v38 = vld [vmem:[%s1 + $0x1c] sm:$0xf]
  %v39 = vld [vmem:[%s1 + $0x20] sm:$0xf]
  %v40 = vld [vmem:[%s1 + $0x24] sm:$0xf]
  %v41 = vld [vmem:[%s1 + $0x28] sm:$0xf]
  %v42 = vld [vmem:[%s1 + $0x2c] sm:$0xf]
  %v43 = vld [vmem:[%s1 + $0x30] sm:$0xf]
  %v44 = vld [vmem:[%s1 + $0x34] sm:$0xf]
  %v45 = vld [vmem:[%s1 + $0x38] sm:$0xf]
  %v46 = vld [vmem:[%s1 + $0x3c] sm:$0xf]
  %v47 = vld [vmem:[%s1 + $0x40] sm:$0xf]
  %v48 = vld [vmem:[%s1 + $0x44] sm:$0xf]
  %v49 = vld [vmem:[%s2] sm:$0x1]
  %v51 = vlaneseq
  %v52 = vshrl.u32 %v51, 7
  %v53 = vsub.s32 0, %v52
  %v54 = vrot.slane %v49, %v53
  %v72 = vunpack.c.l.b16 %v15
  %v73 = vunpack.c.h.b16 %v15
  %v74 = vunpack.c.l.b16 %v16
  %v75 = vunpack.c.h.b16 %v16
  %v76 = vunpack.c.l.b16 %v17
  %v77 = vunpack.c.h.b16 %v17
  %v78 = vunpack.c.l.b16 %v18
  %v79 = vunpack.c.h.b16 %v18
  %v80 = vunpack.c.l.b16 %v19
  %v81 = vunpack.c.h.b16 %v19
  %v82 = vunpack.c.l.b16 %v20
  %v83 = vunpack.c.h.b16 %v20
  %v84 = vunpack.c.l.b16 %v21
  %v85 = vunpack.c.h.b16 %v21
  %v86 = vunpack.c.l.b16 %v22
  %v87 = vunpack.c.h.b16 %v22
  %v88 = vunpack.c.l.b16 %v23
  %v89 = vunpack.c.h.b16 %v23
  %v90 = vunpack.c.l.b16 %v24
  %v91 = vunpack.c.h.b16 %v24
  %v92 = vunpack.c.l.b16 %v25
  %v93 = vunpack.c.h.b16 %v25
  %v94 = vunpack.c.l.b16 %v26
  %v95 = vunpack.c.h.b16 %v26
  %v96 = vunpack.c.l.b16 %v27
  %v97 = vunpack.c.h.b16 %v27
  %v98 = vunpack.c.l.b16 %v28
  %v99 = vunpack.c.h.b16 %v28
  %v100 = vunpack.c.l.b16 %v29
  %v101 = vunpack.c.h.b16 %v29
  %v102 = vunpack.c.l.b16 %v30
  %v103 = vunpack.c.h.b16 %v30
  %v104 = vpack.c.b16 %v74, %v72
  %v105 = vpack.c.b16 %v75, %v73
  %v106 = vpack.c.b16 %v78, %v76
  %v107 = vpack.c.b16 %v79, %v77
  %v108 = vpack.c.b16 %v82, %v80
  %v109 = vpack.c.b16 %v83, %v81
  %v110 = vpack.c.b16 %v86, %v84
  %v111 = vpack.c.b16 %v87, %v85
  %v112 = vpack.c.b16 %v90, %v88
  %v113 = vpack.c.b16 %v91, %v89
  %v114 = vpack.c.b16 %v94, %v92
  %v115 = vpack.c.b16 %v95, %v93
  %v116 = vpack.c.b16 %v98, %v96
  %v117 = vpack.c.b16 %v99, %v97
  %v118 = vpack.c.b16 %v102, %v100
  %v119 = vpack.c.b16 %v103, %v101
  %v146 = vunpack.c.l.b16 %v31
  %v147 = vunpack.c.l.b16 %v32
  %v148 = vunpack.c.l.b16 %v33
  %v149 = vunpack.c.l.b16 %v34
  %v150 = vunpack.c.l.b16 %v35
  %v151 = vunpack.c.l.b16 %v36
  %v152 = vunpack.c.l.b16 %v37
  %v153 = vunpack.c.l.b16 %v38
  %v154 = vunpack.c.l.b16 %v39
  %v155 = vunpack.c.l.b16 %v40
  %v156 = vunpack.c.l.b16 %v41
  %v157 = vunpack.c.l.b16 %v42
  %v158 = vunpack.c.l.b16 %v43
  %v159 = vunpack.c.l.b16 %v44
  %v160 = vunpack.c.l.b16 %v45
  %v161 = vunpack.c.l.b16 %v46
  %v162 = vunpack.c.l.b16 %v47
  %v163 = vunpack.c.l.b16 %v48
  %v164 = vpack.c.b16 %v147, %v146
  %v165 = vpack.c.b16 %v149, %v148
  %v166 = vpack.c.b16 %v151, %v150
  %v167 = vpack.c.b16 %v153, %v152
  %v168 = vpack.c.b16 %v155, %v154
  %v169 = vpack.c.b16 %v157, %v156
  %v170 = vpack.c.b16 %v159, %v158
  %v171 = vpack.c.b16 %v161, %v160
  %v172 = vpack.c.b16 %v163, %v162
  %vm182 = vcmask 130048
  %v184 = vsel %vm182, %v105, 0
  %v187 = vsel %vm182, %v107, 0
  %v190 = vsel %vm182, %v109, 0
  %v193 = vsel %vm182, %v111, 0
  %v196 = vsel %vm182, %v113, 0
  %v199 = vsel %vm182, %v115, 0
  %v202 = vsel %vm182, %v117, 0
  %v205 = vsel %vm182, %v119, 0
  %207 = vmatprep.subr.bf16.mxu0 0
  %208 = vmatpush1.bf16.msra.mxu0 %v171
  %209 = vmatprep.subr.bf16.mxu0 0
  %210 = vmatpush1.bf16.msra.mxu0 %v170
  %211 = vmatprep.subr.bf16.mxu0 0
  %212 = vmatpush1.bf16.msra.mxu0 %v169
  %213 = vmatprep.subr.bf16.mxu0 0
  %214 = vmatpush1.bf16.msra.mxu0 %v168
  %215 = vmatprep.subr.bf16.mxu0 0
  %216 = vmatpush1.bf16.msra.mxu0 %v167
  %217 = vmatprep.subr.bf16.mxu0 0
  %218 = vmatpush1.bf16.msra.mxu0 %v166
  %219 = vmatprep.subr.bf16.mxu0 0
  %220 = vmatpush1.bf16.msra.mxu0 %v165
  %221 = vmatprep.subr.bf16.mxu0 0
  %222 = vmatpush1.bf16.msra.mxu0 %v164
  %223 = vmatprep.subr.bf16.mxu0 0
  %224 = vmatpush2.bf16.msra.mxu0 0
  %225 = vmatprep.subr.bf16.mxu0 0
  %226 = vmatpush2.bf16.msra.mxu0 0
  %227 = vmatprep.subr.bf16.mxu0 0
  %228 = vmatpush2.bf16.msra.mxu0 0
  %229 = vmatprep.subr.bf16.mxu0 0
  %230 = vmatpush2.bf16.msra.mxu0 0
  %231 = vmatprep.subr.bf16.mxu0 0
  %232 = vmatpush2.bf16.msra.mxu0 0
  %233 = vmatprep.subr.bf16.mxu0 0
  %234 = vmatpush2.bf16.msra.mxu0 0
  %235 = vmatprep.subr.bf16.mxu0 0
  %236 = vmatpush2.bf16.msra.mxu0 0
  %237 = vmatprep.subr.bf16.mxu0 0
  %238 = vmatpush2.bf16.msra.mxu0 %v172
  %239 = vmatprep.mubr.bf16.mxu0 %v184
  %240 = vmatmul.mubr.bf16.gmra.mxu0 %v104
  %v241 = vpop.f32.mrf.mxu0
  %v242 = vadd.f32 %v54, %v241
  %v243 = vpop.f32.mrf.mxu0
  %v244 = vpop.f32.mrf.mxu0
  %v245 = vadd.f32 %v54, %v244
  %v246 = vpop.f32.mrf.mxu0
  %247 = vmatprep.mubr.bf16.mxu0 %v187
  %248 = vmatmul.mubr.bf16.gmra.mxu0 %v106
  %v249 = vpop.f32.mrf.mxu0
  %v250 = vadd.f32 %v54, %v249
  %v251 = vpop.f32.mrf.mxu0
  %v252 = vpop.f32.mrf.mxu0
  %v253 = vadd.f32 %v54, %v252
  %v254 = vpop.f32.mrf.mxu0
  %255 = vmatprep.mubr.bf16.mxu0 %v190
  %256 = vmatmul.mubr.bf16.gmra.mxu0 %v108
  %v257 = vpop.f32.mrf.mxu0
  %v258 = vadd.f32 %v54, %v257
  %v259 = vpop.f32.mrf.mxu0
  %v260 = vpop.f32.mrf.mxu0
  %v261 = vadd.f32 %v54, %v260
  %v262 = vpop.f32.mrf.mxu0
  %263 = vmatprep.mubr.bf16.mxu0 %v193
  %264 = vmatmul.mubr.bf16.gmra.mxu0 %v110
  %v265 = vpop.f32.mrf.mxu0
  %v266 = vadd.f32 %v54, %v265
  %v267 = vpop.f32.mrf.mxu0
  %v268 = vpop.f32.mrf.mxu0
  %v269 = vadd.f32 %v54, %v268
  %v270 = vpop.f32.mrf.mxu0
  %271 = vmatprep.mubr.bf16.mxu0 %v196
  %272 = vmatmul.mubr.bf16.gmra.mxu0 %v112
  %v273 = vpop.f32.mrf.mxu0
  %v274 = vadd.f32 %v54, %v273
  %v275 = vpop.f32.mrf.mxu0
  %v276 = vpop.f32.mrf.mxu0
  %v277 = vadd.f32 %v54, %v276
  %v278 = vpop.f32.mrf.mxu0
  %279 = vmatprep.mubr.bf16.mxu0 %v199
  %280 = vmatmul.mubr.bf16.gmra.mxu0 %v114
  %v281 = vpop.f32.mrf.mxu0
  %v282 = vadd.f32 %v54, %v281
  %v283 = vpop.f32.mrf.mxu0
  %v284 = vpop.f32.mrf.mxu0
  %v285 = vadd.f32 %v54, %v284
  %v286 = vpop.f32.mrf.mxu0
  %287 = vmatprep.mubr.bf16.mxu0 %v202
  %288 = vmatmul.mubr.bf16.gmra.mxu0 %v116
  %v289 = vpop.f32.mrf.mxu0
  %v290 = vadd.f32 %v54, %v289
  %v291 = vpop.f32.mrf.mxu0
  %v292 = vpop.f32.mrf.mxu0
  %v293 = vadd.f32 %v54, %v292
  %v294 = vpop.f32.mrf.mxu0
  %295 = vmatprep.mubr.bf16.mxu0 %v205
  %296 = vmatmul.mubr.bf16.gmra.mxu0 %v118
  %v297 = vpop.f32.mrf.mxu0
  %v298 = vadd.f32 %v54, %v297
  %v299 = vpop.f32.mrf.mxu0
  %v300 = vpop.f32.mrf.mxu0
  %v301 = vadd.f32 %v54, %v300
  %v302 = vpop.f32.mrf.mxu0
  %303 = vdwg.mxu0
  %304 = vst [vmem:[%s3] sm:$0xff] %v242
  %305 = vst [vmem:[%s3 + $0x8] sm:$0xff] %v245
  %306 = vst [vmem:[%s3 + $0x10] sm:$0xff] %v250
  %307 = vst [vmem:[%s3 + $0x18] sm:$0xff] %v253
  %308 = vst [vmem:[%s3 + $0x20] sm:$0xff] %v258
  %309 = vst [vmem:[%s3 + $0x28] sm:$0xff] %v261
  %310 = vst [vmem:[%s3 + $0x30] sm:$0xff] %v266
  %311 = vst [vmem:[%s3 + $0x38] sm:$0xff] %v269
  %312 = vst [vmem:[%s3 + $0x40] sm:$0xff] %v274
  %313 = vst [vmem:[%s3 + $0x48] sm:$0xff] %v277
  %314 = vst [vmem:[%s3 + $0x50] sm:$0xff] %v282
  %315 = vst [vmem:[%s3 + $0x58] sm:$0xff] %v285
  %316 = vst [vmem:[%s3 + $0x60] sm:$0xff] %v290
  %317 = vst [vmem:[%s3 + $0x68] sm:$0xff] %v293
  %318 = vst [vmem:[%s3 + $0x70] sm:$0xff] %v298
  %319 = vst [vmem:[%s3 + $0x78] sm:$0xff] %v301
  // Predicated region
  $region14: #{model_forward.23} parent=0 // pred_check
    _
  $region15: #{model_forward.23} parent=0 // pred_check_branch
    %321 = sbr.rel (0) target = $region17
  $region16: #{model_forward.23} parent=0 // pred_region
    _
  $region17: #{model_forward.23} parent=0 // pred_fallthru
    _
  // Predicated region
  $region18: #{model_forward.23} parent=0 // pred_check
    _
  $region19: #{model_forward.23} parent=0 // pred_check_branch
    %323 = sbr.rel (0) target = $region21
  $region20: #{model_forward.23} parent=0 // pred_region
    _
  $region21: #{model_forward.23} parent=0 // pred_fallthru
    _

</llo_original>
